<compile_context>
chip_gen: v5e
topology: v5e:2x2
jax: 0.10.0
libtpu: 0.0.40
codegen_flags: <defaults>
</compile_context>

<pallas_src>
import functools

import jax
import jax.numpy as jnp
from jax.experimental import pallas as pl
from jax.experimental.pallas import tpu as pltpu


def _round_up(x, m):
    return (x + m - 1) // m * m


def _pick_time_chunk(T, max_chunk=16):
    """Time steps per grid iteration.  T is padded up to a multiple of the
    returned chunk, so awkward/prime T never falls back to a chunk of 1
    (which would pay ~0.35us pipeline overhead per time step)."""
    if T % max_chunk == 0:
        return max_chunk
    if T <= 4:            # e.g. single-token decode step: no padding waste
        return T
    return 8


def _pick_batch_tile(Bp):
    """v7x dual-TensorCore sharding: split the batch in two only when each
    tile keeps >= 16 sublanes and the split stays 16-aligned.  Harmless on
    single-TensorCore chips (v5e/v6e)."""
    if Bp >= 32 and Bp % 32 == 0:
        return Bp // 2
    return Bp


# -----------------------------------------------------------------------------
# Pallas kernel: LSTM over one (batch tile, time chunk) grid cell.
# grid = (batch_tiles [parallel], time_chunks [arbitrary / sequential]).
#   prologue: ONE fused MXU matmul computes the x-projection of the whole
#             chunk (bf16 embeddings, f32 accumulation) into VMEM scratch.
#   loop:     per step, only h @ W_hh^T + pointwise gate math (f32).
# All Ref indices are static (Python loop), so no dynamic sublane indexing.
# -----------------------------------------------------------------------------
def lstm_chunk_kernel(emb_ref, h0_ref, c0_ref, wih_ref, whh_ref, bias_ref,
                      out_ref, hn_ref, cn_ref,
                      h_scr, c_scr, gx_scr,
                      *, time_chunk, t_valid, needs_mask):
    t_chunk = pl.program_id(1)
    n_tc = pl.num_programs(1)
    Tc = time_chunk
    Bt, Hp = h_scr.shape

    @pl.when(t_chunk == 0)
    def _():
        h_scr[...] = h0_ref[...]
        c_scr[...] = c0_ref[...]

    # Fused per-chunk input projection: one (Tc*Bt, Hp) @ (Hp, 4*Hp) matmul.
    x2d = emb_ref[0]                                     # (Tc*Bt, Hp) bf16
    gx_scr[...] = (jnp.dot(x2d, wih_ref[...],
                           preferred_element_type=jnp.float32)
                   + bias_ref[...])

    whh = whh_ref[...]            # (Hp, 4*Hp) bf16, resident for the chunk

    def sigmoid(x):
        # tanh-form sigmoid: one EUP push instead of exp + reciprocal.
        return 0.5 * jnp.tanh(0.5 * x) + 0.5

    # Static Python loop (Tc <= 16): fully unrolled, every index below is
    # static.  If vreg spills show up at very large Hp, switch to a
    # lax.fori_loop with a partial unroll factor.
    for j in range(Tc):
        h = h_scr[...]                                   # (Bt, Hp) f32
        c = c_scr[...]
        gates = (gx_scr[j * Bt:(j + 1) * Bt, :]
                 + jnp.dot(h.astype(whh.dtype), whh,
                           preferred_element_type=jnp.float32))
        i_g = sigmoid(gates[:, 0 * Hp:1 * Hp])           # lane-aligned slices
        f_g = sigmoid(gates[:, 1 * Hp:2 * Hp])
        g_g = jnp.tanh(gates[:, 2 * Hp:3 * Hp])
        o_g = sigmoid(gates[:, 3 * Hp:4 * Hp])
        c_new = f_g * c + i_g * g_g
        h_new = o_g * jnp.tanh(c_new)
        if needs_mask:
            # Padded time steps (>= t_valid) must not advance the state.
            valid = (t_chunk * Tc + j) < t_valid
            c_new = jnp.where(valid, c_new, c)
            h_new = jnp.where(valid, h_new, h)
        h_scr[...] = h_new
        c_scr[...] = c_new
        out_ref[:, j, :] = h_new.astype(out_ref.dtype)   # batch-major output

    # Only the final chunk's state matters (constant output block index).
    @pl.when(t_chunk == n_tc - 1)
    def _():
        hn_ref[...] = h_scr[...]
        cn_ref[...] = c_scr[...]


def lstm_pallas(emb_flat, h0, c0, wih_t, whh_t, bias, time_chunk, t_valid):
    """emb_flat: (n_bt, T_pad*Bt, Hp) bf16 embeddings, laid out [tile, t, b].
    h0/c0: (Bp, Hp) f32.  wih_t/whh_t: (Hp, 4*Hp) bf16.  bias: (1, 4*Hp) f32.
    Returns out (Bp, T_pad, Hp) f32 (batch-major, no post-kernel transpose),
    h_n (Bp, Hp) f32, c_n (Bp, Hp) f32."""
    n_bt, TB, Hp = emb_flat.shape
    Bp = h0.shape[0]
    Bt = Bp // n_bt
    T_pad = TB // Bt
    Tc = time_chunk
    assert T_pad % Tc == 0
    n_tc = T_pad // Tc
    needs_mask = T_pad != t_valid

    kernel = functools.partial(lstm_chunk_kernel, time_chunk=Tc,
                               t_valid=t_valid, needs_mask=needs_mask)

    out_shape = (
        jax.ShapeDtypeStruct((Bp, T_pad, Hp), jnp.float32),
        jax.ShapeDtypeStruct((Bp, Hp), jnp.float32),
        jax.ShapeDtypeStruct((Bp, Hp), jnp.float32),
    )
    out_specs = [
        pl.BlockSpec((Bt, Tc, Hp), lambda b, t: (b, t, 0)),   # outputs
        pl.BlockSpec((Bt, Hp), lambda b, t: (b, 0)),          # h_n
        pl.BlockSpec((Bt, Hp), lambda b, t: (b, 0)),          # c_n
    ]
    scratch_shapes = [
        pltpu.VMEM((Bt, Hp), jnp.float32),                    # h state
        pltpu.VMEM((Bt, Hp), jnp.float32),                    # c state
        pltpu.VMEM((Tc * Bt, 4 * Hp), jnp.float32),           # chunk x-gates
    ]

    def build(single_buffer_resident):
        # Constant-index residents (weights/bias/h0/c0): double buffering them
        # is pure VMEM waste, so request a single buffer when supported.
        res_kw = ({"pipeline_mode": pl.Buffered(1)}
                  if single_buffer_resident else {})
        in_specs = [
            pl.BlockSpec((1, Tc * Bt, Hp), lambda b, t: (b, t, 0)),        # emb
            pl.BlockSpec((Bt, Hp), lambda b, t: (b, 0), **res_kw),         # h0
            pl.BlockSpec((Bt, Hp), lambda b, t: (b, 0), **res_kw),         # c0
            pl.BlockSpec((Hp, 4 * Hp), lambda b, t: (0, 0), **res_kw),     # W_ih^T
            pl.BlockSpec((Hp, 4 * Hp), lambda b, t: (0, 0), **res_kw),     # W_hh^T
            pl.BlockSpec((1, 4 * Hp), lambda b, t: (0, 0), **res_kw),      # bias
        ]
        n_res = 1 if single_buffer_resident else 2
        vmem_bytes = (
            2 * Tc * Bt * Hp * 2                 # emb chunk (bf16, 2 bufs)
            + 2 * Bt * Tc * Hp * 4               # out chunk (f32, 2 bufs)
            + n_res * (2 * Hp * 4 * Hp * 2       # W_ih^T + W_hh^T (bf16)
                       + 4 * Hp * 4              # bias
                       + 2 * Bt * Hp * 4)        # h0, c0
            + 2 * 2 * Bt * Hp * 4                # h_n, c_n outputs (2 bufs)
            + 2 * Bt * Hp * 4                    # h/c scratch
            + Tc * Bt * 4 * Hp * 4)              # x-gate scratch
        # 1.5x headroom for compiler-internal scratch; cap below v7x's 64 MiB.
        vmem_limit = int(min(max(vmem_bytes + vmem_bytes // 2 + (1 << 20),
                                 8 << 20), 48 << 20))
        grid_spec = pltpu.PrefetchScalarGridSpec(
            num_scalar_prefetch=0,
            grid=(n_bt, n_tc),
            in_specs=in_specs,
            out_specs=out_specs,
            scratch_shapes=scratch_shapes,
        )
        return pl.pallas_call(
            kernel,
            grid_spec=grid_spec,
            out_shape=out_shape,
            compiler_params=pltpu.CompilerParams(
                dimension_semantics=("parallel", "arbitrary"),
                vmem_limit_bytes=vmem_limit),
        )

    args = (emb_flat, h0, c0, wih_t, whh_t, bias)
    try:
        return build(True)(*args)
    except Exception:
        # Fallback for jax versions without single-buffer pipeline_mode.
        return build(False)(*args)


# -----------------------------------------------------------------------------
# Module glue (embedding lookup, reshape_state, weight / layout plumbing).
# -----------------------------------------------------------------------------
def reshape_state(state):
    h_state, c_state = state
    new_h = jnp.concatenate([h_state[:-1], h_state[1:]], axis=2)
    new_c = jnp.concatenate([c_state[:-1], c_state[1:]], axis=2)
    return (new_h, new_c)


def init_decoder_params(key, hidden_size, tgt_vocab_size, padding_idx):
    H = hidden_size
    k_emb, k1, k2, k3, k4 = jax.random.split(key, 5)
    emb = jax.random.normal(k_emb, (tgt_vocab_size, H), jnp.float32)
    emb = emb.at[padding_idx].set(0.0)             # nn.Embedding padding_idx
    bound = 1.0 / jnp.sqrt(jnp.float32(H))
    uni = lambda k, shp: jax.random.uniform(k, shp, jnp.float32, -bound, bound)
    return {
        "embedding": emb,
        "w_ih": uni(k1, (4 * H, H)),
        "w_hh": uni(k2, (4 * H, H)),
        "b_ih": uni(k3, (4 * H,)),
        "b_hh": uni(k4, (4 * H,)),
    }


def _pad_gate_weight_t(w, H, Hp):
    """(4H, H) PyTorch-layout LSTM weight -> (Hp, 4*Hp): transposed, per-gate
    lane-padded, bf16 (f32 MXU accumulation happens in the kernel)."""
    w_g = w.reshape(4, H, H)                 # (gate, out, in); gate order i,f,g,o
    w_t = jnp.transpose(w_g, (2, 0, 1))      # (in, gate, out)
    w_t = jnp.pad(w_t, ((0, Hp - H), (0, 0), (0, Hp - H)))
    return w_t.reshape(Hp, 4 * Hp).astype(jnp.bfloat16)


def decoder_forward(params, tgt, dec_state, encoder_outputs, src_lengths):
    """Matches Decoder.forward with attn=None, dropout in eval mode.

    tgt: (B, T) int32 token ids.
    dec_state: tuple (h, c), each (num_dirs, B, H_dir).
    Returns (outputs (B, T, H), (h_n, c_n) each (1, B, H)).
    """
    del encoder_outputs, src_lengths  # only used by attn, which is None here
    if dec_state[0].shape[0] == 2:
        dec_state = reshape_state(dec_state)
    h0 = dec_state[0][0]                                  # (B, H)
    c0 = dec_state[1][0]                                  # (B, H)

    B, T = tgt.shape
    H = params["w_hh"].shape[1]
    Hp = _round_up(H, 128)                                # lane-aligned per gate
    Bp = _round_up(max(B, 8), 8)                          # sublane-aligned batch
    Tc = _pick_time_chunk(T)
    T_pad = _round_up(T, Tc)
    Bt = _pick_batch_tile(Bp)
    n_bt = Bp // Bt

    # Fold padding into the (small) weights / tables, not the big activations.
    emb_tab = jnp.pad(params["embedding"],
                      ((0, 0), (0, Hp - H))).astype(jnp.bfloat16)
    tgt_p = jnp.pad(tgt, ((0, Bp - B), (0, T_pad - T)))   # padded rows/steps discarded

    # Token layout (tile, time, batch-within-tile): the kernel's per-chunk
    # x-projection is then one dense (Tc*Bt, Hp) @ (Hp, 4*Hp) MXU matmul with
    # no in-kernel reshape.  bf16 stream = half the HBM bytes of f32.
    tok = jnp.transpose(tgt_p.reshape(n_bt, Bt, T_pad), (0, 2, 1))
    tok = tok.reshape(n_bt, T_pad * Bt)
    emb_flat = jnp.take(emb_tab, tok, axis=0)             # (n_bt, T_pad*Bt, Hp)
    # nn.Dropout -> identity (eval).

    h0p = jnp.pad(h0, ((0, Bp - B), (0, Hp - H)))
    c0p = jnp.pad(c0, ((0, Bp - B), (0, Hp - H)))

    wih_t = _pad_gate_weight_t(params["w_ih"], H, Hp)      # (Hp, 4*Hp) bf16
    whh_t = _pad_gate_weight_t(params["w_hh"], H, Hp)
    bias = (params["b_ih"] + params["b_hh"]).reshape(4, H)
    bias = jnp.pad(bias, ((0, 0), (0, Hp - H))).reshape(1, 4 * Hp)

    out_bth, h_n, c_n = lstm_pallas(emb_flat, h0p, c0p, wih_t, whh_t, bias,
                                    Tc, T)

    outputs = out_bth[:B, :T, :H]                          # already (B, T, H)
    return outputs, (h_n[:B, :H][None], c_n[:B, :H][None])


# Pure-JAX reference with the SAME precision recipe (bf16 MXU operands, f32
# accumulation / pointwise) for a tight correctness check of the kernel.
def _lstm_ref(x_tbh, h0, c0, w_ih, w_hh, b_ih, b_hh):
    H = h0.shape[-1]
    wih_t = w_ih.T.astype(jnp.bfloat16)
    whh_t = w_hh.T.astype(jnp.bfloat16)
    bias = b_ih + b_hh

    def step(carry, x_t):
        h, c = carry
        gates = (jnp.dot(x_t.astype(jnp.bfloat16), wih_t,
                         preferred_element_type=jnp.float32)
                 + bias
                 + jnp.dot(h.astype(jnp.bfloat16), whh_t,
                           preferred_element_type=jnp.float32))
        i = jax.nn.sigmoid(gates[:, 0 * H:1 * H])
        f = jax.nn.sigmoid(gates[:, 1 * H:2 * H])
        g = jnp.tanh(gates[:, 2 * H:3 * H])
        o = jax.nn.sigmoid(gates[:, 3 * H:4 * H])
        c_new = f * c + i * g
        h_new = o * jnp.tanh(c_new)
        return (h_new, c_new), h_new

    (h_n, c_n), out = jax.lax.scan(step, (h0, c0), x_tbh)
    return out, h_n, c_n


if __name__ == "__main__":
    B, T, H, V = 2, 8, 32, 16
    padding_idx = 0

    key = jax.random.PRNGKey(0)
    kp, kt, kh, kc, ke = jax.random.split(key, 5)

    params = init_decoder_params(kp, H, V, padding_idx)

    tgt = jax.random.randint(kt, (B, T), 0, V, dtype=jnp.int32)
    tgt = tgt.at[:, -1].set(padding_idx)              # some padding tokens

    # Bidirectional-encoder style state: (2, B, H//2) -> exercises reshape_state.
    h_state = jax.random.normal(kh, (2, B, H // 2), jnp.float32)
    c_state = jax.random.normal(kc, (2, B, H // 2), jnp.float32)
    dec_state = (h_state, c_state)

    # Unused by attn=None path, provided for signature parity.
    S = 8
    encoder_outputs = jax.random.normal(ke, (B, S, H), jnp.float32)
    src_lengths = jnp.full((B,), S, jnp.int32)

    outputs, (h_n, c_n) = decoder_forward(
        params, tgt, dec_state, encoder_outputs, src_lengths)
    jax.block_until_ready((outputs, h_n, c_n))

    # Sanity check against a matched-precision pure-JAX LSTM reference.
    h0 = jnp.concatenate([h_state[0], h_state[1]], axis=-1)
    c0 = jnp.concatenate([c_state[0], c_state[1]], axis=-1)
    emb_tm = jnp.take(params["embedding"], tgt.T, axis=0)      # (T, B, H)
    out_ref, hn_ref, cn_ref = _lstm_ref(
        emb_tm, h0, c0,
        params["w_ih"], params["w_hh"], params["b_ih"], params["b_hh"])
    out_ref = jnp.transpose(out_ref, (1, 0, 2))

    assert outputs.shape == (B, T, H)
    assert jnp.allclose(outputs, out_ref, atol=2e-3, rtol=2e-3)
    assert jnp.allclose(h_n[0], hn_ref, atol=2e-3, rtol=2e-3)
    assert jnp.allclose(c_n[0], cn_ref, atol=2e-3, rtol=2e-3)

    print("KERNEL_OK")
</pallas_src>

<mosaic_0001>
module attributes {stable_mosaic.version = 11 : i64} {
  func.func @lstm_chunk_kernel(%arg0: i32, %arg1: i32, %arg2: memref<1x64x128xbf16, #tpu.memory_space<vmem>>, %arg3: memref<8x128xf32, #tpu.memory_space<vmem>>, %arg4: memref<8x128xf32, #tpu.memory_space<vmem>>, %arg5: memref<128x512xbf16, #tpu.memory_space<vmem>>, %arg6: memref<128x512xbf16, #tpu.memory_space<vmem>>, %arg7: memref<1x512xf32, #tpu.memory_space<vmem>>, %arg8: memref<8x8x128xf32, #tpu.memory_space<vmem>>, %arg9: memref<8x128xf32, #tpu.memory_space<vmem>>, %arg10: memref<8x128xf32, #tpu.memory_space<vmem>>, %arg11: memref<8x128xf32, #tpu.memory_space<vmem>>, %arg12: memref<8x128xf32, #tpu.memory_space<vmem>>, %arg13: memref<64x512xf32, #tpu.memory_space<vmem>>) attributes {dimension_semantics = [#tpu.dimension_semantics<parallel>, #tpu.dimension_semantics<arbitrary>], iteration_bounds = array<i64: 1, 1>, scalar_prefetch = 0 : i64, scratch_operands = 3 : i64, tpu.core_type = #tpu.core_type<tc>, window_params = [{transform_indices = @transform_0, window_bounds = array<i64: 1, 64, 128>}, {pipeline_mode = #tpu.pipeline_mode<synchronous>, transform_indices = @transform_1, window_bounds = array<i64: 8, 128>}, {pipeline_mode = #tpu.pipeline_mode<synchronous>, transform_indices = @transform_2, window_bounds = array<i64: 8, 128>}, {pipeline_mode = #tpu.pipeline_mode<synchronous>, transform_indices = @transform_3, window_bounds = array<i64: 128, 512>}, {pipeline_mode = #tpu.pipeline_mode<synchronous>, transform_indices = @transform_4, window_bounds = array<i64: 128, 512>}, {pipeline_mode = #tpu.pipeline_mode<synchronous>, transform_indices = @transform_5, window_bounds = array<i64: 1, 512>}, {transform_indices = @transform_6, window_bounds = array<i64: 8, 8, 128>}, {transform_indices = @transform_7, window_bounds = array<i64: 8, 128>}, {transform_indices = @transform_8, window_bounds = array<i64: 8, 128>}]} {
    %c0_i32 = arith.constant 0 : i32
    %0 = arith.cmpi eq, %arg1, %c0_i32 : i32
    %1 = arith.extui %0 : i1 to i32
    %c0_i32_0 = arith.constant 0 : i32
    %2 = arith.cmpi ne, %1, %c0_i32_0 : i32
    scf.if %2 {
      %c0_183 = arith.constant 0 : index
      %c0_184 = arith.constant 0 : index
      %351 = vector.load %arg3[%c0_183, %c0_184] : memref<8x128xf32, #tpu.memory_space<vmem>>, vector<8x128xf32>
      %c0_185 = arith.constant 0 : index
      %c0_186 = arith.constant 0 : index
      %352 = vector.load %arg11[%c0_185, %c0_186] : memref<8x128xf32, #tpu.memory_space<vmem>>, vector<8x128xf32>
      tpu.vector_store %arg11[%c0_185, %c0_186], %351 {strides = array<i32>} : memref<8x128xf32, #tpu.memory_space<vmem>>, vector<8x128xf32>,
      %c0_187 = arith.constant 0 : index
      %c0_188 = arith.constant 0 : index
      %353 = vector.load %arg4[%c0_187, %c0_188] : memref<8x128xf32, #tpu.memory_space<vmem>>, vector<8x128xf32>
      %c0_189 = arith.constant 0 : index
      %c0_190 = arith.constant 0 : index
      %354 = vector.load %arg12[%c0_189, %c0_190] : memref<8x128xf32, #tpu.memory_space<vmem>>, vector<8x128xf32>
      tpu.vector_store %arg12[%c0_189, %c0_190], %353 {strides = array<i32>} : memref<8x128xf32, #tpu.memory_space<vmem>>, vector<8x128xf32>,
    } else {
    }
    %c0 = arith.constant 0 : index
    %c0_1 = arith.constant 0 : index
    %c0_2 = arith.constant 0 : index
    %3 = vector.load %arg2[%c0, %c0_1, %c0_2] : memref<1x64x128xbf16, #tpu.memory_space<vmem>>, vector<1x64x128xbf16>
    %4 = vector.shape_cast %3 : vector<1x64x128xbf16> to vector<64x128xbf16>
    %c0_3 = arith.constant 0 : index
    %c0_4 = arith.constant 0 : index
    %5 = vector.load %arg5[%c0_3, %c0_4] : memref<128x512xbf16, #tpu.memory_space<vmem>>, vector<128x512xbf16>
    %cst = arith.constant dense<0.000000e+00> : vector<64x512xf32>
    %6 = tpu.matmul %4, %5, %cst {dimension_numbers = #tpu.dot_dimension_numbers<[1], [0], [0], [1], [0, 0, 1, 1], [], []>} : vector<64x128xbf16>, vector<128x512xbf16>, vector<64x512xf32> -> vector<64x512xf32>
    %c0_5 = arith.constant 0 : index
    %c0_6 = arith.constant 0 : index
    %7 = vector.load %arg7[%c0_5, %c0_6] : memref<1x512xf32, #tpu.memory_space<vmem>>, vector<1x512xf32>
    %8 = vector.broadcast %7 : vector<1x512xf32> to vector<64x512xf32>
    %9 = arith.addf %6, %8 : vector<64x512xf32>
    %c0_7 = arith.constant 0 : index
    %c0_8 = arith.constant 0 : index
    %10 = vector.load %arg13[%c0_7, %c0_8] : memref<64x512xf32, #tpu.memory_space<vmem>>, vector<64x512xf32>
    tpu.vector_store %arg13[%c0_7, %c0_8], %9 {strides = array<i32>} : memref<64x512xf32, #tpu.memory_space<vmem>>, vector<64x512xf32>,
    %c0_9 = arith.constant 0 : index
    %c0_10 = arith.constant 0 : index
    %11 = vector.load %arg6[%c0_9, %c0_10] : memref<128x512xbf16, #tpu.memory_space<vmem>>, vector<128x512xbf16>
    %c0_11 = arith.constant 0 : index
    %c0_12 = arith.constant 0 : index
    %12 = vector.load %arg11[%c0_11, %c0_12] : memref<8x128xf32, #tpu.memory_space<vmem>>, vector<8x128xf32>
    %c0_13 = arith.constant 0 : index
    %c0_14 = arith.constant 0 : index
    %13 = vector.load %arg12[%c0_13, %c0_14] : memref<8x128xf32, #tpu.memory_space<vmem>>, vector<8x128xf32>
    %c0_15 = arith.constant 0 : index
    %c0_16 = arith.constant 0 : index
    %14 = vector.load %arg13[%c0_15, %c0_16] : memref<64x512xf32, #tpu.memory_space<vmem>>, vector<8x512xf32>
    %15 = arith.truncf %12 : vector<8x128xf32> to vector<8x128xbf16>
    %cst_17 = arith.constant dense<0.000000e+00> : vector<8x512xf32>
    %16 = tpu.matmul %15, %11, %cst_17 {dimension_numbers = #tpu.dot_dimension_numbers<[1], [0], [0], [1], [0, 0, 1, 1], [], []>} : vector<8x128xbf16>, vector<128x512xbf16>, vector<8x512xf32> -> vector<8x512xf32>
    %17 = arith.addf %14, %16 : vector<8x512xf32>
    %18 = vector.extract_strided_slice %17 {offsets = [0, 0], sizes = [8, 128], strides = [1, 1]} : vector<8x512xf32> to vector<8x128xf32>
    %cst_18 = arith.constant 5.000000e-01 : f32
    %19 = vector.broadcast %cst_18 : f32 to vector<8x128xf32>
    %20 = arith.mulf %19, %18 : vector<8x128xf32>
    %21 = math.tanh %20 : vector<8x128xf32>
    %cst_19 = arith.constant 5.000000e-01 : f32
    %22 = vector.broadcast %cst_19 : f32 to vector<8x128xf32>
    %23 = arith.mulf %22, %21 : vector<8x128xf32>
    %cst_20 = arith.constant 5.000000e-01 : f32
    %24 = vector.broadcast %cst_20 : f32 to vector<8x128xf32>
    %25 = arith.addf %23, %24 : vector<8x128xf32>
    %26 = vector.extract_strided_slice %17 {offsets = [0, 128], sizes = [8, 128], strides = [1, 1]} : vector<8x512xf32> to vector<8x128xf32>
    %cst_21 = arith.constant 5.000000e-01 : f32
    %27 = vector.broadcast %cst_21 : f32 to vector<8x128xf32>
    %28 = arith.mulf %27, %26 : vector<8x128xf32>
    %29 = math.tanh %28 : vector<8x128xf32>
    %cst_22 = arith.constant 5.000000e-01 : f32
    %30 = vector.broadcast %cst_22 : f32 to vector<8x128xf32>
    %31 = arith.mulf %30, %29 : vector<8x128xf32>
    %cst_23 = arith.constant 5.000000e-01 : f32
    %32 = vector.broadcast %cst_23 : f32 to vector<8x128xf32>
    %33 = arith.addf %31, %32 : vector<8x128xf32>
    %34 = vector.extract_strided_slice %17 {offsets = [0, 256], sizes = [8, 128], strides = [1, 1]} : vector<8x512xf32> to vector<8x128xf32>
    %35 = math.tanh %34 : vector<8x128xf32>
    %36 = vector.extract_strided_slice %17 {offsets = [0, 384], sizes = [8, 128], strides = [1, 1]} : vector<8x512xf32> to vector<8x128xf32>
    %cst_24 = arith.constant 5.000000e-01 : f32
    %37 = vector.broadcast %cst_24 : f32 to vector<8x128xf32>
    %38 = arith.mulf %37, %36 : vector<8x128xf32>
    %39 = math.tanh %38 : vector<8x128xf32>
    %cst_25 = arith.constant 5.000000e-01 : f32
    %40 = vector.broadcast %cst_25 : f32 to vector<8x128xf32>
    %41 = arith.mulf %40, %39 : vector<8x128xf32>
    %cst_26 = arith.constant 5.000000e-01 : f32
    %42 = vector.broadcast %cst_26 : f32 to vector<8x128xf32>
    %43 = arith.addf %41, %42 : vector<8x128xf32>
    %44 = arith.mulf %33, %13 : vector<8x128xf32>
    %45 = arith.mulf %25, %35 : vector<8x128xf32>
    %46 = arith.addf %44, %45 : vector<8x128xf32>
    %47 = math.tanh %46 : vector<8x128xf32>
    %48 = arith.mulf %43, %47 : vector<8x128xf32>
    %c0_27 = arith.constant 0 : index
    %c0_28 = arith.constant 0 : index
    %49 = vector.load %arg11[%c0_27, %c0_28] : memref<8x128xf32, #tpu.memory_space<vmem>>, vector<8x128xf32>
    tpu.vector_store %arg11[%c0_27, %c0_28], %48 {strides = array<i32>} : memref<8x128xf32, #tpu.memory_space<vmem>>, vector<8x128xf32>,
    %c0_29 = arith.constant 0 : index
    %c0_30 = arith.constant 0 : index
    %50 = vector.load %arg12[%c0_29, %c0_30] : memref<8x128xf32, #tpu.memory_space<vmem>>, vector<8x128xf32>
    tpu.vector_store %arg12[%c0_29, %c0_30], %46 {strides = array<i32>} : memref<8x128xf32, #tpu.memory_space<vmem>>, vector<8x128xf32>,
    %c0_31 = arith.constant 0 : index
    %c0_32 = arith.constant 0 : index
    %c0_33 = arith.constant 0 : index
    %51 = vector.load %arg8[%c0_31, %c0_32, %c0_33] : memref<8x8x128xf32, #tpu.memory_space<vmem>>, vector<8x1x128xf32>
    %52 = vector.shape_cast %51 : vector<8x1x128xf32> to vector<8x128xf32>
    %53 = vector.shape_cast %48 : vector<8x128xf32> to vector<8x1x128xf32>
    tpu.vector_store %arg8[%c0_31, %c0_32, %c0_33], %53 {strides = array<i32>} : memref<8x8x128xf32, #tpu.memory_space<vmem>>, vector<8x1x128xf32>,
    %c0_34 = arith.constant 0 : index
    %c0_35 = arith.constant 0 : index
    %54 = vector.load %arg11[%c0_34, %c0_35] : memref<8x128xf32, #tpu.memory_space<vmem>>, vector<8x128xf32>
    %c0_36 = arith.constant 0 : index
    %c0_37 = arith.constant 0 : index
    %55 = vector.load %arg12[%c0_36, %c0_37] : memref<8x128xf32, #tpu.memory_space<vmem>>, vector<8x128xf32>
    %c8 = arith.constant 8 : index
    %c0_38 = arith.constant 0 : index
    %56 = vector.load %arg13[%c8, %c0_38] : memref<64x512xf32, #tpu.memory_space<vmem>>, vector<8x512xf32>
    %57 = arith.truncf %54 : vector<8x128xf32> to vector<8x128xbf16>
    %cst_39 = arith.constant dense<0.000000e+00> : vector<8x512xf32>
    %58 = tpu.matmul %57, %11, %cst_39 {dimension_numbers = #tpu.dot_dimension_numbers<[1], [0], [0], [1], [0, 0, 1, 1], [], []>} : vector<8x128xbf16>, vector<128x512xbf16>, vector<8x512xf32> -> vector<8x512xf32>
    %59 = arith.addf %56, %58 : vector<8x512xf32>
    %60 = vector.extract_strided_slice %59 {offsets = [0, 0], sizes = [8, 128], strides = [1, 1]} : vector<8x512xf32> to vector<8x128xf32>
    %cst_40 = arith.constant 5.000000e-01 : f32
    %61 = vector.broadcast %cst_40 : f32 to vector<8x128xf32>
    %62 = arith.mulf %61, %60 : vector<8x128xf32>
    %63 = math.tanh %62 : vector<8x128xf32>
    %cst_41 = arith.constant 5.000000e-01 : f32
    %64 = vector.broadcast %cst_41 : f32 to vector<8x128xf32>
    %65 = arith.mulf %64, %63 : vector<8x128xf32>
    %cst_42 = arith.constant 5.000000e-01 : f32
    %66 = vector.broadcast %cst_42 : f32 to vector<8x128xf32>
    %67 = arith.addf %65, %66 : vector<8x128xf32>
    %68 = vector.extract_strided_slice %59 {offsets = [0, 128], sizes = [8, 128], strides = [1, 1]} : vector<8x512xf32> to vector<8x128xf32>
    %cst_43 = arith.constant 5.000000e-01 : f32
    %69 = vector.broadcast %cst_43 : f32 to vector<8x128xf32>
    %70 = arith.mulf %69, %68 : vector<8x128xf32>
    %71 = math.tanh %70 : vector<8x128xf32>
    %cst_44 = arith.constant 5.000000e-01 : f32
    %72 = vector.broadcast %cst_44 : f32 to vector<8x128xf32>
    %73 = arith.mulf %72, %71 : vector<8x128xf32>
    %cst_45 = arith.constant 5.000000e-01 : f32
    %74 = vector.broadcast %cst_45 : f32 to vector<8x128xf32>
    %75 = arith.addf %73, %74 : vector<8x128xf32>
    %76 = vector.extract_strided_slice %59 {offsets = [0, 256], sizes = [8, 128], strides = [1, 1]} : vector<8x512xf32> to vector<8x128xf32>
    %77 = math.tanh %76 : vector<8x128xf32>
    %78 = vector.extract_strided_slice %59 {offsets = [0, 384], sizes = [8, 128], strides = [1, 1]} : vector<8x512xf32> to vector<8x128xf32>
    %cst_46 = arith.constant 5.000000e-01 : f32
    %79 = vector.broadcast %cst_46 : f32 to vector<8x128xf32>
    %80 = arith.mulf %79, %78 : vector<8x128xf32>
    %81 = math.tanh %80 : vector<8x128xf32>
    %cst_47 = arith.constant 5.000000e-01 : f32
    %82 = vector.broadcast %cst_47 : f32 to vector<8x128xf32>
    %83 = arith.mulf %82, %81 : vector<8x128xf32>
    %cst_48 = arith.constant 5.000000e-01 : f32
    %84 = vector.broadcast %cst_48 : f32 to vector<8x128xf32>
    %85 = arith.addf %83, %84 : vector<8x128xf32>
    %86 = arith.mulf %75, %55 : vector<8x128xf32>
    %87 = arith.mulf %67, %77 : vector<8x128xf32>
    %88 = arith.addf %86, %87 : vector<8x128xf32>
    %89 = math.tanh %88 : vector<8x128xf32>
    %90 = arith.mulf %85, %89 : vector<8x128xf32>
    %c0_49 = arith.constant 0 : index
    %c0_50 = arith.constant 0 : index
    %91 = vector.load %arg11[%c0_49, %c0_50] : memref<8x128xf32, #tpu.memory_space<vmem>>, vector<8x128xf32>
    tpu.vector_store %arg11[%c0_49, %c0_50], %90 {strides = array<i32>} : memref<8x128xf32, #tpu.memory_space<vmem>>, vector<8x128xf32>,
    %c0_51 = arith.constant 0 : index
    %c0_52 = arith.constant 0 : index
    %92 = vector.load %arg12[%c0_51, %c0_52] : memref<8x128xf32, #tpu.memory_space<vmem>>, vector<8x128xf32>
    tpu.vector_store %arg12[%c0_51, %c0_52], %88 {strides = array<i32>} : memref<8x128xf32, #tpu.memory_space<vmem>>, vector<8x128xf32>,
    %c0_53 = arith.constant 0 : index
    %c1 = arith.constant 1 : index
    %c0_54 = arith.constant 0 : index
    %93 = vector.load %arg8[%c0_53, %c1, %c0_54] : memref<8x8x128xf32, #tpu.memory_space<vmem>>, vector<8x1x128xf32>
    %94 = vector.shape_cast %93 : vector<8x1x128xf32> to vector<8x128xf32>
    %95 = vector.shape_cast %90 : vector<8x128xf32> to vector<8x1x128xf32>
    tpu.vector_store %arg8[%c0_53, %c1, %c0_54], %95 {strides = array<i32>} : memref<8x8x128xf32, #tpu.memory_space<vmem>>, vector<8x1x128xf32>,
    %c0_55 = arith.constant 0 : index
    %c0_56 = arith.constant 0 : index
    %96 = vector.load %arg11[%c0_55, %c0_56] : memref<8x128xf32, #tpu.memory_space<vmem>>, vector<8x128xf32>
    %c0_57 = arith.constant 0 : index
    %c0_58 = arith.constant 0 : index
    %97 = vector.load %arg12[%c0_57, %c0_58] : memref<8x128xf32, #tpu.memory_space<vmem>>, vector<8x128xf32>
    %c16 = arith.constant 16 : index
    %c0_59 = arith.constant 0 : index
    %98 = vector.load %arg13[%c16, %c0_59] : memref<64x512xf32, #tpu.memory_space<vmem>>, vector<8x512xf32>
    %99 = arith.truncf %96 : vector<8x128xf32> to vector<8x128xbf16>
    %cst_60 = arith.constant dense<0.000000e+00> : vector<8x512xf32>
    %100 = tpu.matmul %99, %11, %cst_60 {dimension_numbers = #tpu.dot_dimension_numbers<[1], [0], [0], [1], [0, 0, 1, 1], [], []>} : vector<8x128xbf16>, vector<128x512xbf16>, vector<8x512xf32> -> vector<8x512xf32>
    %101 = arith.addf %98, %100 : vector<8x512xf32>
    %102 = vector.extract_strided_slice %101 {offsets = [0, 0], sizes = [8, 128], strides = [1, 1]} : vector<8x512xf32> to vector<8x128xf32>
    %cst_61 = arith.constant 5.000000e-01 : f32
    %103 = vector.broadcast %cst_61 : f32 to vector<8x128xf32>
    %104 = arith.mulf %103, %102 : vector<8x128xf32>
    %105 = math.tanh %104 : vector<8x128xf32>
    %cst_62 = arith.constant 5.000000e-01 : f32
    %106 = vector.broadcast %cst_62 : f32 to vector<8x128xf32>
    %107 = arith.mulf %106, %105 : vector<8x128xf32>
    %cst_63 = arith.constant 5.000000e-01 : f32
    %108 = vector.broadcast %cst_63 : f32 to vector<8x128xf32>
    %109 = arith.addf %107, %108 : vector<8x128xf32>
    %110 = vector.extract_strided_slice %101 {offsets = [0, 128], sizes = [8, 128], strides = [1, 1]} : vector<8x512xf32> to vector<8x128xf32>
    %cst_64 = arith.constant 5.000000e-01 : f32
    %111 = vector.broadcast %cst_64 : f32 to vector<8x128xf32>
    %112 = arith.mulf %111, %110 : vector<8x128xf32>
    %113 = math.tanh %112 : vector<8x128xf32>
    %cst_65 = arith.constant 5.000000e-01 : f32
    %114 = vector.broadcast %cst_65 : f32 to vector<8x128xf32>
    %115 = arith.mulf %114, %113 : vector<8x128xf32>
    %cst_66 = arith.constant 5.000000e-01 : f32
    %116 = vector.broadcast %cst_66 : f32 to vector<8x128xf32>
    %117 = arith.addf %115, %116 : vector<8x128xf32>
    %118 = vector.extract_strided_slice %101 {offsets = [0, 256], sizes = [8, 128], strides = [1, 1]} : vector<8x512xf32> to vector<8x128xf32>
    %119 = math.tanh %118 : vector<8x128xf32>
    %120 = vector.extract_strided_slice %101 {offsets = [0, 384], sizes = [8, 128], strides = [1, 1]} : vector<8x512xf32> to vector<8x128xf32>
    %cst_67 = arith.constant 5.000000e-01 : f32
    %121 = vector.broadcast %cst_67 : f32 to vector<8x128xf32>
    %122 = arith.mulf %121, %120 : vector<8x128xf32>
    %123 = math.tanh %122 : vector<8x128xf32>
    %cst_68 = arith.constant 5.000000e-01 : f32
    %124 = vector.broadcast %cst_68 : f32 to vector<8x128xf32>
    %125 = arith.mulf %124, %123 : vector<8x128xf32>
    %cst_69 = arith.constant 5.000000e-01 : f32
    %126 = vector.broadcast %cst_69 : f32 to vector<8x128xf32>
    %127 = arith.addf %125, %126 : vector<8x128xf32>
    %128 = arith.mulf %117, %97 : vector<8x128xf32>
    %129 = arith.mulf %109, %119 : vector<8x128xf32>
    %130 = arith.addf %128, %129 : vector<8x128xf32>
    %131 = math.tanh %130 : vector<8x128xf32>
    %132 = arith.mulf %127, %131 : vector<8x128xf32>
    %c0_70 = arith.constant 0 : index
    %c0_71 = arith.constant 0 : index
    %133 = vector.load %arg11[%c0_70, %c0_71] : memref<8x128xf32, #tpu.memory_space<vmem>>, vector<8x128xf32>
    tpu.vector_store %arg11[%c0_70, %c0_71], %132 {strides = array<i32>} : memref<8x128xf32, #tpu.memory_space<vmem>>, vector<8x128xf32>,
    %c0_72 = arith.constant 0 : index
    %c0_73 = arith.constant 0 : index
    %134 = vector.load %arg12[%c0_72, %c0_73] : memref<8x128xf32, #tpu.memory_space<vmem>>, vector<8x128xf32>
    tpu.vector_store %arg12[%c0_72, %c0_73], %130 {strides = array<i32>} : memref<8x128xf32, #tpu.memory_space<vmem>>, vector<8x128xf32>,
    %c0_74 = arith.constant 0 : index
    %c2 = arith.constant 2 : index
    %c0_75 = arith.constant 0 : index
    %135 = vector.load %arg8[%c0_74, %c2, %c0_75] : memref<8x8x128xf32, #tpu.memory_space<vmem>>, vector<8x1x128xf32>
    %136 = vector.shape_cast %135 : vector<8x1x128xf32> to vector<8x128xf32>
    %137 = vector.shape_cast %132 : vector<8x128xf32> to vector<8x1x128xf32>
    tpu.vector_store %arg8[%c0_74, %c2, %c0_75], %137 {strides = array<i32>} : memref<8x8x128xf32, #tpu.memory_space<vmem>>, vector<8x1x128xf32>,
    %c0_76 = arith.constant 0 : index
    %c0_77 = arith.constant 0 : index
    %138 = vector.load %arg11[%c0_76, %c0_77] : memref<8x128xf32, #tpu.memory_space<vmem>>, vector<8x128xf32>
    %c0_78 = arith.constant 0 : index
    %c0_79 = arith.constant 0 : index
    %139 = vector.load %arg12[%c0_78, %c0_79] : memref<8x128xf32, #tpu.memory_space<vmem>>, vector<8x128xf32>
    %c24 = arith.constant 24 : index
    %c0_80 = arith.constant 0 : index
    %140 = vector.load %arg13[%c24, %c0_80] : memref<64x512xf32, #tpu.memory_space<vmem>>, vector<8x512xf32>
    %141 = arith.truncf %138 : vector<8x128xf32> to vector<8x128xbf16>
    %cst_81 = arith.constant dense<0.000000e+00> : vector<8x512xf32>
    %142 = tpu.matmul %141, %11, %cst_81 {dimension_numbers = #tpu.dot_dimension_numbers<[1], [0], [0], [1], [0, 0, 1, 1], [], []>} : vector<8x128xbf16>, vector<128x512xbf16>, vector<8x512xf32> -> vector<8x512xf32>
    %143 = arith.addf %140, %142 : vector<8x512xf32>
    %144 = vector.extract_strided_slice %143 {offsets = [0, 0], sizes = [8, 128], strides = [1, 1]} : vector<8x512xf32> to vector<8x128xf32>
    %cst_82 = arith.constant 5.000000e-01 : f32
    %145 = vector.broadcast %cst_82 : f32 to vector<8x128xf32>
    %146 = arith.mulf %145, %144 : vector<8x128xf32>
    %147 = math.tanh %146 : vector<8x128xf32>
    %cst_83 = arith.constant 5.000000e-01 : f32
    %148 = vector.broadcast %cst_83 : f32 to vector<8x128xf32>
    %149 = arith.mulf %148, %147 : vector<8x128xf32>
    %cst_84 = arith.constant 5.000000e-01 : f32
    %150 = vector.broadcast %cst_84 : f32 to vector<8x128xf32>
    %151 = arith.addf %149, %150 : vector<8x128xf32>
    %152 = vector.extract_strided_slice %143 {offsets = [0, 128], sizes = [8, 128], strides = [1, 1]} : vector<8x512xf32> to vector<8x128xf32>
    %cst_85 = arith.constant 5.000000e-01 : f32
    %153 = vector.broadcast %cst_85 : f32 to vector<8x128xf32>
    %154 = arith.mulf %153, %152 : vector<8x128xf32>
    %155 = math.tanh %154 : vector<8x128xf32>
    %cst_86 = arith.constant 5.000000e-01 : f32
    %156 = vector.broadcast %cst_86 : f32 to vector<8x128xf32>
    %157 = arith.mulf %156, %155 : vector<8x128xf32>
    %cst_87 = arith.constant 5.000000e-01 : f32
    %158 = vector.broadcast %cst_87 : f32 to vector<8x128xf32>
    %159 = arith.addf %157, %158 : vector<8x128xf32>
    %160 = vector.extract_strided_slice %143 {offsets = [0, 256], sizes = [8, 128], strides = [1, 1]} : vector<8x512xf32> to vector<8x128xf32>
    %161 = math.tanh %160 : vector<8x128xf32>
    %162 = vector.extract_strided_slice %143 {offsets = [0, 384], sizes = [8, 128], strides = [1, 1]} : vector<8x512xf32> to vector<8x128xf32>
    %cst_88 = arith.constant 5.000000e-01 : f32
    %163 = vector.broadcast %cst_88 : f32 to vector<8x128xf32>
    %164 = arith.mulf %163, %162 : vector<8x128xf32>
    %165 = math.tanh %164 : vector<8x128xf32>
    %cst_89 = arith.constant 5.000000e-01 : f32
    %166 = vector.broadcast %cst_89 : f32 to vector<8x128xf32>
    %167 = arith.mulf %166, %165 : vector<8x128xf32>
    %cst_90 = arith.constant 5.000000e-01 : f32
    %168 = vector.broadcast %cst_90 : f32 to vector<8x128xf32>
    %169 = arith.addf %167, %168 : vector<8x128xf32>
    %170 = arith.mulf %159, %139 : vector<8x128xf32>
    %171 = arith.mulf %151, %161 : vector<8x128xf32>
    %172 = arith.addf %170, %171 : vector<8x128xf32>
    %173 = math.tanh %172 : vector<8x128xf32>
    %174 = arith.mulf %169, %173 : vector<8x128xf32>
    %c0_91 = arith.constant 0 : index
    %c0_92 = arith.constant 0 : index
    %175 = vector.load %arg11[%c0_91, %c0_92] : memref<8x128xf32, #tpu.memory_space<vmem>>, vector<8x128xf32>
    tpu.vector_store %arg11[%c0_91, %c0_92], %174 {strides = array<i32>} : memref<8x128xf32, #tpu.memory_space<vmem>>, vector<8x128xf32>,
    %c0_93 = arith.constant 0 : index
    %c0_94 = arith.constant 0 : index
    %176 = vector.load %arg12[%c0_93, %c0_94] : memref<8x128xf32, #tpu.memory_space<vmem>>, vector<8x128xf32>
    tpu.vector_store %arg12[%c0_93, %c0_94], %172 {strides = array<i32>} : memref<8x128xf32, #tpu.memory_space<vmem>>, vector<8x128xf32>,
    %c0_95 = arith.constant 0 : index
    %c3 = arith.constant 3 : index
    %c0_96 = arith.constant 0 : index
    %177 = vector.load %arg8[%c0_95, %c3, %c0_96] : memref<8x8x128xf32, #tpu.memory_space<vmem>>, vector<8x1x128xf32>
    %178 = vector.shape_cast %177 : vector<8x1x128xf32> to vector<8x128xf32>
    %179 = vector.shape_cast %174 : vector<8x128xf32> to vector<8x1x128xf32>
    tpu.vector_store %arg8[%c0_95, %c3, %c0_96], %179 {strides = array<i32>} : memref<8x8x128xf32, #tpu.memory_space<vmem>>, vector<8x1x128xf32>,
    %c0_97 = arith.constant 0 : index
    %c0_98 = arith.constant 0 : index
    %180 = vector.load %arg11[%c0_97, %c0_98] : memref<8x128xf32, #tpu.memory_space<vmem>>, vector<8x128xf32>
    %c0_99 = arith.constant 0 : index
    %c0_100 = arith.constant 0 : index
    %181 = vector.load %arg12[%c0_99, %c0_100] : memref<8x128xf32, #tpu.memory_space<vmem>>, vector<8x128xf32>
    %c32 = arith.constant 32 : index
    %c0_101 = arith.constant 0 : index
    %182 = vector.load %arg13[%c32, %c0_101] : memref<64x512xf32, #tpu.memory_space<vmem>>, vector<8x512xf32>
    %183 = arith.truncf %180 : vector<8x128xf32> to vector<8x128xbf16>
    %cst_102 = arith.constant dense<0.000000e+00> : vector<8x512xf32>
    %184 = tpu.matmul %183, %11, %cst_102 {dimension_numbers = #tpu.dot_dimension_numbers<[1], [0], [0], [1], [0, 0, 1, 1], [], []>} : vector<8x128xbf16>, vector<128x512xbf16>, vector<8x512xf32> -> vector<8x512xf32>
    %185 = arith.addf %182, %184 : vector<8x512xf32>
    %186 = vector.extract_strided_slice %185 {offsets = [0, 0], sizes = [8, 128], strides = [1, 1]} : vector<8x512xf32> to vector<8x128xf32>
    %cst_103 = arith.constant 5.000000e-01 : f32
    %187 = vector.broadcast %cst_103 : f32 to vector<8x128xf32>
    %188 = arith.mulf %187, %186 : vector<8x128xf32>
    %189 = math.tanh %188 : vector<8x128xf32>
    %cst_104 = arith.constant 5.000000e-01 : f32
    %190 = vector.broadcast %cst_104 : f32 to vector<8x128xf32>
    %191 = arith.mulf %190, %189 : vector<8x128xf32>
    %cst_105 = arith.constant 5.000000e-01 : f32
    %192 = vector.broadcast %cst_105 : f32 to vector<8x128xf32>
    %193 = arith.addf %191, %192 : vector<8x128xf32>
    %194 = vector.extract_strided_slice %185 {offsets = [0, 128], sizes = [8, 128], strides = [1, 1]} : vector<8x512xf32> to vector<8x128xf32>
    %cst_106 = arith.constant 5.000000e-01 : f32
    %195 = vector.broadcast %cst_106 : f32 to vector<8x128xf32>
    %196 = arith.mulf %195, %194 : vector<8x128xf32>
    %197 = math.tanh %196 : vector<8x128xf32>
    %cst_107 = arith.constant 5.000000e-01 : f32
    %198 = vector.broadcast %cst_107 : f32 to vector<8x128xf32>
    %199 = arith.mulf %198, %197 : vector<8x128xf32>
    %cst_108 = arith.constant 5.000000e-01 : f32
    %200 = vector.broadcast %cst_108 : f32 to vector<8x128xf32>
    %201 = arith.addf %199, %200 : vector<8x128xf32>
    %202 = vector.extract_strided_slice %185 {offsets = [0, 256], sizes = [8, 128], strides = [1, 1]} : vector<8x512xf32> to vector<8x128xf32>
    %203 = math.tanh %202 : vector<8x128xf32>
    %204 = vector.extract_strided_slice %185 {offsets = [0, 384], sizes = [8, 128], strides = [1, 1]} : vector<8x512xf32> to vector<8x128xf32>
    %cst_109 = arith.constant 5.000000e-01 : f32
    %205 = vector.broadcast %cst_109 : f32 to vector<8x128xf32>
    %206 = arith.mulf %205, %204 : vector<8x128xf32>
    %207 = math.tanh %206 : vector<8x128xf32>
    %cst_110 = arith.constant 5.000000e-01 : f32
    %208 = vector.broadcast %cst_110 : f32 to vector<8x128xf32>
    %209 = arith.mulf %208, %207 : vector<8x128xf32>
    %cst_111 = arith.constant 5.000000e-01 : f32
    %210 = vector.broadcast %cst_111 : f32 to vector<8x128xf32>
    %211 = arith.addf %209, %210 : vector<8x128xf32>
    %212 = arith.mulf %201, %181 : vector<8x128xf32>
    %213 = arith.mulf %193, %203 : vector<8x128xf32>
    %214 = arith.addf %212, %213 : vector<8x128xf32>
    %215 = math.tanh %214 : vector<8x128xf32>
    %216 = arith.mulf %211, %215 : vector<8x128xf32>
    %c0_112 = arith.constant 0 : index
    %c0_113 = arith.constant 0 : index
    %217 = vector.load %arg11[%c0_112, %c0_113] : memref<8x128xf32, #tpu.memory_space<vmem>>, vector<8x128xf32>
    tpu.vector_store %arg11[%c0_112, %c0_113], %216 {strides = array<i32>} : memref<8x128xf32, #tpu.memory_space<vmem>>, vector<8x128xf32>,
    %c0_114 = arith.constant 0 : index
    %c0_115 = arith.constant 0 : index
    %218 = vector.load %arg12[%c0_114, %c0_115] : memref<8x128xf32, #tpu.memory_space<vmem>>, vector<8x128xf32>
    tpu.vector_store %arg12[%c0_114, %c0_115], %214 {strides = array<i32>} : memref<8x128xf32, #tpu.memory_space<vmem>>, vector<8x128xf32>,
    %c0_116 = arith.constant 0 : index
    %c4 = arith.constant 4 : index
    %c0_117 = arith.constant 0 : index
    %219 = vector.load %arg8[%c0_116, %c4, %c0_117] : memref<8x8x128xf32, #tpu.memory_space<vmem>>, vector<8x1x128xf32>
    %220 = vector.shape_cast %219 : vector<8x1x128xf32> to vector<8x128xf32>
    %221 = vector.shape_cast %216 : vector<8x128xf32> to vector<8x1x128xf32>
    tpu.vector_store %arg8[%c0_116, %c4, %c0_117], %221 {strides = array<i32>} : memref<8x8x128xf32, #tpu.memory_space<vmem>>, vector<8x1x128xf32>,
    %c0_118 = arith.constant 0 : index
    %c0_119 = arith.constant 0 : index
    %222 = vector.load %arg11[%c0_118, %c0_119] : memref<8x128xf32, #tpu.memory_space<vmem>>, vector<8x128xf32>
    %c0_120 = arith.constant 0 : index
    %c0_121 = arith.constant 0 : index
    %223 = vector.load %arg12[%c0_120, %c0_121] : memref<8x128xf32, #tpu.memory_space<vmem>>, vector<8x128xf32>
    %c40 = arith.constant 40 : index
    %c0_122 = arith.constant 0 : index
    %224 = vector.load %arg13[%c40, %c0_122] : memref<64x512xf32, #tpu.memory_space<vmem>>, vector<8x512xf32>
    %225 = arith.truncf %222 : vector<8x128xf32> to vector<8x128xbf16>
    %cst_123 = arith.constant dense<0.000000e+00> : vector<8x512xf32>
    %226 = tpu.matmul %225, %11, %cst_123 {dimension_numbers = #tpu.dot_dimension_numbers<[1], [0], [0], [1], [0, 0, 1, 1], [], []>} : vector<8x128xbf16>, vector<128x512xbf16>, vector<8x512xf32> -> vector<8x512xf32>
    %227 = arith.addf %224, %226 : vector<8x512xf32>
    %228 = vector.extract_strided_slice %227 {offsets = [0, 0], sizes = [8, 128], strides = [1, 1]} : vector<8x512xf32> to vector<8x128xf32>
    %cst_124 = arith.constant 5.000000e-01 : f32
    %229 = vector.broadcast %cst_124 : f32 to vector<8x128xf32>
    %230 = arith.mulf %229, %228 : vector<8x128xf32>
    %231 = math.tanh %230 : vector<8x128xf32>
    %cst_125 = arith.constant 5.000000e-01 : f32
    %232 = vector.broadcast %cst_125 : f32 to vector<8x128xf32>
    %233 = arith.mulf %232, %231 : vector<8x128xf32>
    %cst_126 = arith.constant 5.000000e-01 : f32
    %234 = vector.broadcast %cst_126 : f32 to vector<8x128xf32>
    %235 = arith.addf %233, %234 : vector<8x128xf32>
    %236 = vector.extract_strided_slice %227 {offsets = [0, 128], sizes = [8, 128], strides = [1, 1]} : vector<8x512xf32> to vector<8x128xf32>
    %cst_127 = arith.constant 5.000000e-01 : f32
    %237 = vector.broadcast %cst_127 : f32 to vector<8x128xf32>
    %238 = arith.mulf %237, %236 : vector<8x128xf32>
    %239 = math.tanh %238 : vector<8x128xf32>
    %cst_128 = arith.constant 5.000000e-01 : f32
    %240 = vector.broadcast %cst_128 : f32 to vector<8x128xf32>
    %241 = arith.mulf %240, %239 : vector<8x128xf32>
    %cst_129 = arith.constant 5.000000e-01 : f32
    %242 = vector.broadcast %cst_129 : f32 to vector<8x128xf32>
    %243 = arith.addf %241, %242 : vector<8x128xf32>
    %244 = vector.extract_strided_slice %227 {offsets = [0, 256], sizes = [8, 128], strides = [1, 1]} : vector<8x512xf32> to vector<8x128xf32>
    %245 = math.tanh %244 : vector<8x128xf32>
    %246 = vector.extract_strided_slice %227 {offsets = [0, 384], sizes = [8, 128], strides = [1, 1]} : vector<8x512xf32> to vector<8x128xf32>
    %cst_130 = arith.constant 5.000000e-01 : f32
    %247 = vector.broadcast %cst_130 : f32 to vector<8x128xf32>
    %248 = arith.mulf %247, %246 : vector<8x128xf32>
    %249 = math.tanh %248 : vector<8x128xf32>
    %cst_131 = arith.constant 5.000000e-01 : f32
    %250 = vector.broadcast %cst_131 : f32 to vector<8x128xf32>
    %251 = arith.mulf %250, %249 : vector<8x128xf32>
    %cst_132 = arith.constant 5.000000e-01 : f32
    %252 = vector.broadcast %cst_132 : f32 to vector<8x128xf32>
    %253 = arith.addf %251, %252 : vector<8x128xf32>
    %254 = arith.mulf %243, %223 : vector<8x128xf32>
    %255 = arith.mulf %235, %245 : vector<8x128xf32>
    %256 = arith.addf %254, %255 : vector<8x128xf32>
    %257 = math.tanh %256 : vector<8x128xf32>
    %258 = arith.mulf %253, %257 : vector<8x128xf32>
    %c0_133 = arith.constant 0 : index
    %c0_134 = arith.constant 0 : index
    %259 = vector.load %arg11[%c0_133, %c0_134] : memref<8x128xf32, #tpu.memory_space<vmem>>, vector<8x128xf32>
    tpu.vector_store %arg11[%c0_133, %c0_134], %258 {strides = array<i32>} : memref<8x128xf32, #tpu.memory_space<vmem>>, vector<8x128xf32>,
    %c0_135 = arith.constant 0 : index
    %c0_136 = arith.constant 0 : index
    %260 = vector.load %arg12[%c0_135, %c0_136] : memref<8x128xf32, #tpu.memory_space<vmem>>, vector<8x128xf32>
    tpu.vector_store %arg12[%c0_135, %c0_136], %256 {strides = array<i32>} : memref<8x128xf32, #tpu.memory_space<vmem>>, vector<8x128xf32>,
    %c0_137 = arith.constant 0 : index
    %c5 = arith.constant 5 : index
    %c0_138 = arith.constant 0 : index
    %261 = vector.load %arg8[%c0_137, %c5, %c0_138] : memref<8x8x128xf32, #tpu.memory_space<vmem>>, vector<8x1x128xf32>
    %262 = vector.shape_cast %261 : vector<8x1x128xf32> to vector<8x128xf32>
    %263 = vector.shape_cast %258 : vector<8x128xf32> to vector<8x1x128xf32>
    tpu.vector_store %arg8[%c0_137, %c5, %c0_138], %263 {strides = array<i32>} : memref<8x8x128xf32, #tpu.memory_space<vmem>>, vector<8x1x128xf32>,
    %c0_139 = arith.constant 0 : index
    %c0_140 = arith.constant 0 : index
    %264 = vector.load %arg11[%c0_139, %c0_140] : memref<8x128xf32, #tpu.memory_space<vmem>>, vector<8x128xf32>
    %c0_141 = arith.constant 0 : index
    %c0_142 = arith.constant 0 : index
    %265 = vector.load %arg12[%c0_141, %c0_142] : memref<8x128xf32, #tpu.memory_space<vmem>>, vector<8x128xf32>
    %c48 = arith.constant 48 : index
    %c0_143 = arith.constant 0 : index
    %266 = vector.load %arg13[%c48, %c0_143] : memref<64x512xf32, #tpu.memory_space<vmem>>, vector<8x512xf32>
    %267 = arith.truncf %264 : vector<8x128xf32> to vector<8x128xbf16>
    %cst_144 = arith.constant dense<0.000000e+00> : vector<8x512xf32>
    %268 = tpu.matmul %267, %11, %cst_144 {dimension_numbers = #tpu.dot_dimension_numbers<[1], [0], [0], [1], [0, 0, 1, 1], [], []>} : vector<8x128xbf16>, vector<128x512xbf16>, vector<8x512xf32> -> vector<8x512xf32>
    %269 = arith.addf %266, %268 : vector<8x512xf32>
    %270 = vector.extract_strided_slice %269 {offsets = [0, 0], sizes = [8, 128], strides = [1, 1]} : vector<8x512xf32> to vector<8x128xf32>
    %cst_145 = arith.constant 5.000000e-01 : f32
    %271 = vector.broadcast %cst_145 : f32 to vector<8x128xf32>
    %272 = arith.mulf %271, %270 : vector<8x128xf32>
    %273 = math.tanh %272 : vector<8x128xf32>
    %cst_146 = arith.constant 5.000000e-01 : f32
    %274 = vector.broadcast %cst_146 : f32 to vector<8x128xf32>
    %275 = arith.mulf %274, %273 : vector<8x128xf32>
    %cst_147 = arith.constant 5.000000e-01 : f32
    %276 = vector.broadcast %cst_147 : f32 to vector<8x128xf32>
    %277 = arith.addf %275, %276 : vector<8x128xf32>
    %278 = vector.extract_strided_slice %269 {offsets = [0, 128], sizes = [8, 128], strides = [1, 1]} : vector<8x512xf32> to vector<8x128xf32>
    %cst_148 = arith.constant 5.000000e-01 : f32
    %279 = vector.broadcast %cst_148 : f32 to vector<8x128xf32>
    %280 = arith.mulf %279, %278 : vector<8x128xf32>
    %281 = math.tanh %280 : vector<8x128xf32>
    %cst_149 = arith.constant 5.000000e-01 : f32
    %282 = vector.broadcast %cst_149 : f32 to vector<8x128xf32>
    %283 = arith.mulf %282, %281 : vector<8x128xf32>
    %cst_150 = arith.constant 5.000000e-01 : f32
    %284 = vector.broadcast %cst_150 : f32 to vector<8x128xf32>
    %285 = arith.addf %283, %284 : vector<8x128xf32>
    %286 = vector.extract_strided_slice %269 {offsets = [0, 256], sizes = [8, 128], strides = [1, 1]} : vector<8x512xf32> to vector<8x128xf32>
    %287 = math.tanh %286 : vector<8x128xf32>
    %288 = vector.extract_strided_slice %269 {offsets = [0, 384], sizes = [8, 128], strides = [1, 1]} : vector<8x512xf32> to vector<8x128xf32>
    %cst_151 = arith.constant 5.000000e-01 : f32
    %289 = vector.broadcast %cst_151 : f32 to vector<8x128xf32>
    %290 = arith.mulf %289, %288 : vector<8x128xf32>
    %291 = math.tanh %290 : vector<8x128xf32>
    %cst_152 = arith.constant 5.000000e-01 : f32
    %292 = vector.broadcast %cst_152 : f32 to vector<8x128xf32>
    %293 = arith.mulf %292, %291 : vector<8x128xf32>
    %cst_153 = arith.constant 5.000000e-01 : f32
    %294 = vector.broadcast %cst_153 : f32 to vector<8x128xf32>
    %295 = arith.addf %293, %294 : vector<8x128xf32>
    %296 = arith.mulf %285, %265 : vector<8x128xf32>
    %297 = arith.mulf %277, %287 : vector<8x128xf32>
    %298 = arith.addf %296, %297 : vector<8x128xf32>
    %299 = math.tanh %298 : vector<8x128xf32>
    %300 = arith.mulf %295, %299 : vector<8x128xf32>
    %c0_154 = arith.constant 0 : index
    %c0_155 = arith.constant 0 : index
    %301 = vector.load %arg11[%c0_154, %c0_155] : memref<8x128xf32, #tpu.memory_space<vmem>>, vector<8x128xf32>
    tpu.vector_store %arg11[%c0_154, %c0_155], %300 {strides = array<i32>} : memref<8x128xf32, #tpu.memory_space<vmem>>, vector<8x128xf32>,
    %c0_156 = arith.constant 0 : index
    %c0_157 = arith.constant 0 : index
    %302 = vector.load %arg12[%c0_156, %c0_157] : memref<8x128xf32, #tpu.memory_space<vmem>>, vector<8x128xf32>
    tpu.vector_store %arg12[%c0_156, %c0_157], %298 {strides = array<i32>} : memref<8x128xf32, #tpu.memory_space<vmem>>, vector<8x128xf32>,
    %c0_158 = arith.constant 0 : index
    %c6 = arith.constant 6 : index
    %c0_159 = arith.constant 0 : index
    %303 = vector.load %arg8[%c0_158, %c6, %c0_159] : memref<8x8x128xf32, #tpu.memory_space<vmem>>, vector<8x1x128xf32>
    %304 = vector.shape_cast %303 : vector<8x1x128xf32> to vector<8x128xf32>
    %305 = vector.shape_cast %300 : vector<8x128xf32> to vector<8x1x128xf32>
    tpu.vector_store %arg8[%c0_158, %c6, %c0_159], %305 {strides = array<i32>} : memref<8x8x128xf32, #tpu.memory_space<vmem>>, vector<8x1x128xf32>,
    %c0_160 = arith.constant 0 : index
    %c0_161 = arith.constant 0 : index
    %306 = vector.load %arg11[%c0_160, %c0_161] : memref<8x128xf32, #tpu.memory_space<vmem>>, vector<8x128xf32>
    %c0_162 = arith.constant 0 : index
    %c0_163 = arith.constant 0 : index
    %307 = vector.load %arg12[%c0_162, %c0_163] : memref<8x128xf32, #tpu.memory_space<vmem>>, vector<8x128xf32>
    %c56 = arith.constant 56 : index
    %c0_164 = arith.constant 0 : index
    %308 = vector.load %arg13[%c56, %c0_164] : memref<64x512xf32, #tpu.memory_space<vmem>>, vector<8x512xf32>
    %309 = arith.truncf %306 : vector<8x128xf32> to vector<8x128xbf16>
    %cst_165 = arith.constant dense<0.000000e+00> : vector<8x512xf32>
    %310 = tpu.matmul %309, %11, %cst_165 {dimension_numbers = #tpu.dot_dimension_numbers<[1], [0], [0], [1], [0, 0, 1, 1], [], []>} : vector<8x128xbf16>, vector<128x512xbf16>, vector<8x512xf32> -> vector<8x512xf32>
    %311 = arith.addf %308, %310 : vector<8x512xf32>
    %312 = vector.extract_strided_slice %311 {offsets = [0, 0], sizes = [8, 128], strides = [1, 1]} : vector<8x512xf32> to vector<8x128xf32>
    %cst_166 = arith.constant 5.000000e-01 : f32
    %313 = vector.broadcast %cst_166 : f32 to vector<8x128xf32>
    %314 = arith.mulf %313, %312 : vector<8x128xf32>
    %315 = math.tanh %314 : vector<8x128xf32>
    %cst_167 = arith.constant 5.000000e-01 : f32
    %316 = vector.broadcast %cst_167 : f32 to vector<8x128xf32>
    %317 = arith.mulf %316, %315 : vector<8x128xf32>
    %cst_168 = arith.constant 5.000000e-01 : f32
    %318 = vector.broadcast %cst_168 : f32 to vector<8x128xf32>
    %319 = arith.addf %317, %318 : vector<8x128xf32>
    %320 = vector.extract_strided_slice %311 {offsets = [0, 128], sizes = [8, 128], strides = [1, 1]} : vector<8x512xf32> to vector<8x128xf32>
    %cst_169 = arith.constant 5.000000e-01 : f32
    %321 = vector.broadcast %cst_169 : f32 to vector<8x128xf32>
    %322 = arith.mulf %321, %320 : vector<8x128xf32>
    %323 = math.tanh %322 : vector<8x128xf32>
    %cst_170 = arith.constant 5.000000e-01 : f32
    %324 = vector.broadcast %cst_170 : f32 to vector<8x128xf32>
    %325 = arith.mulf %324, %323 : vector<8x128xf32>
    %cst_171 = arith.constant 5.000000e-01 : f32
    %326 = vector.broadcast %cst_171 : f32 to vector<8x128xf32>
    %327 = arith.addf %325, %326 : vector<8x128xf32>
    %328 = vector.extract_strided_slice %311 {offsets = [0, 256], sizes = [8, 128], strides = [1, 1]} : vector<8x512xf32> to vector<8x128xf32>
    %329 = math.tanh %328 : vector<8x128xf32>
    %330 = vector.extract_strided_slice %311 {offsets = [0, 384], sizes = [8, 128], strides = [1, 1]} : vector<8x512xf32> to vector<8x128xf32>
    %cst_172 = arith.constant 5.000000e-01 : f32
    %331 = vector.broadcast %cst_172 : f32 to vector<8x128xf32>
    %332 = arith.mulf %331, %330 : vector<8x128xf32>
    %333 = math.tanh %332 : vector<8x128xf32>
    %cst_173 = arith.constant 5.000000e-01 : f32
    %334 = vector.broadcast %cst_173 : f32 to vector<8x128xf32>
    %335 = arith.mulf %334, %333 : vector<8x128xf32>
    %cst_174 = arith.constant 5.000000e-01 : f32
    %336 = vector.broadcast %cst_174 : f32 to vector<8x128xf32>
    %337 = arith.addf %335, %336 : vector<8x128xf32>
    %338 = arith.mulf %327, %307 : vector<8x128xf32>
    %339 = arith.mulf %319, %329 : vector<8x128xf32>
    %340 = arith.addf %338, %339 : vector<8x128xf32>
    %341 = math.tanh %340 : vector<8x128xf32>
    %342 = arith.mulf %337, %341 : vector<8x128xf32>
    %c0_175 = arith.constant 0 : index
    %c0_176 = arith.constant 0 : index
    %343 = vector.load %arg11[%c0_175, %c0_176] : memref<8x128xf32, #tpu.memory_space<vmem>>, vector<8x128xf32>
    tpu.vector_store %arg11[%c0_175, %c0_176], %342 {strides = array<i32>} : memref<8x128xf32, #tpu.memory_space<vmem>>, vector<8x128xf32>,
    %c0_177 = arith.constant 0 : index
    %c0_178 = arith.constant 0 : index
    %344 = vector.load %arg12[%c0_177, %c0_178] : memref<8x128xf32, #tpu.memory_space<vmem>>, vector<8x128xf32>
    tpu.vector_store %arg12[%c0_177, %c0_178], %340 {strides = array<i32>} : memref<8x128xf32, #tpu.memory_space<vmem>>, vector<8x128xf32>,
    %c0_179 = arith.constant 0 : index
    %c7 = arith.constant 7 : index
    %c0_180 = arith.constant 0 : index
    %345 = vector.load %arg8[%c0_179, %c7, %c0_180] : memref<8x8x128xf32, #tpu.memory_space<vmem>>, vector<8x1x128xf32>
    %346 = vector.shape_cast %345 : vector<8x1x128xf32> to vector<8x128xf32>
    %347 = vector.shape_cast %342 : vector<8x128xf32> to vector<8x1x128xf32>
    tpu.vector_store %arg8[%c0_179, %c7, %c0_180], %347 {strides = array<i32>} : memref<8x8x128xf32, #tpu.memory_space<vmem>>, vector<8x1x128xf32>,
    %c0_i32_181 = arith.constant 0 : i32
    %348 = arith.cmpi eq, %arg1, %c0_i32_181 : i32
    %349 = arith.extui %348 : i1 to i32
    %c0_i32_182 = arith.constant 0 : i32
    %350 = arith.cmpi ne, %349, %c0_i32_182 : i32
    scf.if %350 {
      %c0_183 = arith.constant 0 : index
      %c0_184 = arith.constant 0 : index
      %351 = vector.load %arg11[%c0_183, %c0_184] : memref<8x128xf32, #tpu.memory_space<vmem>>, vector<8x128xf32>
      %c0_185 = arith.constant 0 : index
      %c0_186 = arith.constant 0 : index
      %352 = vector.load %arg9[%c0_185, %c0_186] : memref<8x128xf32, #tpu.memory_space<vmem>>, vector<8x128xf32>
      tpu.vector_store %arg9[%c0_185, %c0_186], %351 {strides = array<i32>} : memref<8x128xf32, #tpu.memory_space<vmem>>, vector<8x128xf32>,
      %c0_187 = arith.constant 0 : index
      %c0_188 = arith.constant 0 : index
      %353 = vector.load %arg12[%c0_187, %c0_188] : memref<8x128xf32, #tpu.memory_space<vmem>>, vector<8x128xf32>
      %c0_189 = arith.constant 0 : index
      %c0_190 = arith.constant 0 : index
      %354 = vector.load %arg10[%c0_189, %c0_190] : memref<8x128xf32, #tpu.memory_space<vmem>>, vector<8x128xf32>
      tpu.vector_store %arg10[%c0_189, %c0_190], %353 {strides = array<i32>} : memref<8x128xf32, #tpu.memory_space<vmem>>, vector<8x128xf32>,
    } else {
    }
    return
  }
  func.func @transform_0(%arg0: i32, %arg1: i32) -> (i32, i32, i32) {
    %c0_i32 = arith.constant 0 : i32
    %c0_i32_0 = arith.constant 0 : i32
    return %arg0, %arg1, %c0_i32 : i32, i32, i32
  }
  func.func @transform_1(%arg0: i32, %arg1: i32) -> (i32, i32) {
    %c0_i32 = arith.constant 0 : i32
    %c0_i32_0 = arith.constant 0 : i32
    return %arg0, %c0_i32 : i32, i32
  }
  func.func @transform_2(%arg0: i32, %arg1: i32) -> (i32, i32) {
    %c0_i32 = arith.constant 0 : i32
    %c0_i32_0 = arith.constant 0 : i32
    return %arg0, %c0_i32 : i32, i32
  }
  func.func @transform_3(%arg0: i32, %arg1: i32) -> (i32, i32) {
    %c0_i32 = arith.constant 0 : i32
    %c0_i32_0 = arith.constant 0 : i32
    %c0_i32_1 = arith.constant 0 : i32
    return %c0_i32, %c0_i32_0 : i32, i32
  }
  func.func @transform_4(%arg0: i32, %arg1: i32) -> (i32, i32) {
    %c0_i32 = arith.constant 0 : i32
    %c0_i32_0 = arith.constant 0 : i32
    %c0_i32_1 = arith.constant 0 : i32
    return %c0_i32, %c0_i32_0 : i32, i32
  }
  func.func @transform_5(%arg0: i32, %arg1: i32) -> (i32, i32) {
    %c0_i32 = arith.constant 0 : i32
    %c0_i32_0 = arith.constant 0 : i32
    %c0_i32_1 = arith.constant 0 : i32
    return %c0_i32, %c0_i32_0 : i32, i32
  }
  func.func @transform_6(%arg0: i32, %arg1: i32) -> (i32, i32, i32) {
    %c0_i32 = arith.constant 0 : i32
    %c0_i32_0 = arith.constant 0 : i32
    return %arg0, %arg1, %c0_i32 : i32, i32, i32
  }
  func.func @transform_7(%arg0: i32, %arg1: i32) -> (i32, i32) {
    %c0_i32 = arith.constant 0 : i32
    %c0_i32_0 = arith.constant 0 : i32
    return %arg0, %c0_i32 : i32, i32
  }
  func.func @transform_8(%arg0: i32, %arg1: i32) -> (i32, i32) {
    %c0_i32 = arith.constant 0 : i32
    %c0_i32_0 = arith.constant 0 : i32
    return %arg0, %c0_i32 : i32, i32
  }
}

module attributes {stable_mosaic.version = 11 : i64} {
  func.func @lstm_chunk_kernel(%arg0: i32, %arg1: i32, %arg2: memref<1x64x128xbf16, #tpu.memory_space<vmem>>, %arg3: memref<8x128xf32, #tpu.memory_space<vmem>>, %arg4: memref<8x128xf32, #tpu.memory_space<vmem>>, %arg5: memref<128x512xbf16, #tpu.memory_space<vmem>>, %arg6: memref<128x512xbf16, #tpu.memory_space<vmem>>, %arg7: memref<1x512xf32, #tpu.memory_space<vmem>>, %arg8: memref<8x8x128xf32, #tpu.memory_space<vmem>>, %arg9: memref<8x128xf32, #tpu.memory_space<vmem>>, %arg10: memref<8x128xf32, #tpu.memory_space<vmem>>, %arg11: memref<8x128xf32, #tpu.memory_space<vmem>>, %arg12: memref<8x128xf32, #tpu.memory_space<vmem>>, %arg13: memref<64x512xf32, #tpu.memory_space<vmem>>) attributes {dimension_semantics = [#tpu.dimension_semantics<parallel>, #tpu.dimension_semantics<arbitrary>], iteration_bounds = array<i64: 1, 1>, scalar_prefetch = 0 : i64, scratch_operands = 3 : i64, tpu.core_type = #tpu.core_type<tc>, window_params = [{transform_indices = @transform_0, window_bounds = array<i64: 1, 64, 128>}, {transform_indices = @transform_1, window_bounds = array<i64: 8, 128>}, {transform_indices = @transform_2, window_bounds = array<i64: 8, 128>}, {pipeline_mode = #tpu.pipeline_mode<synchronous>, transform_indices = @transform_3, window_bounds = array<i64: 128, 512>}, {pipeline_mode = #tpu.pipeline_mode<synchronous>, transform_indices = @transform_4, window_bounds = array<i64: 128, 512>}, {pipeline_mode = #tpu.pipeline_mode<synchronous>, transform_indices = @transform_5, window_bounds = array<i64: 1, 512>}, {transform_indices = @transform_6, window_bounds = array<i64: 8, 8, 128>}, {transform_indices = @transform_7, window_bounds = array<i64: 8, 128>}, {transform_indices = @transform_8, window_bounds = array<i64: 8, 128>}]} {
    %c0_i32 = arith.constant 0 : i32
    %0 = arith.cmpi eq, %arg1, %c0_i32 : i32
    %1 = arith.extui %0 : i1 to i32
    %c0_i32_0 = arith.constant 0 : i32
    %2 = arith.cmpi ne, %1, %c0_i32_0 : i32
    scf.if %2 {
      %c0_183 = arith.constant 0 : index
      %c0_184 = arith.constant 0 : index
      %351 = vector.load %arg3[%c0_183, %c0_184] : memref<8x128xf32, #tpu.memory_space<vmem>>, vector<8x128xf32>
      %c0_185 = arith.constant 0 : index
      %c0_186 = arith.constant 0 : index
      %352 = vector.load %arg11[%c0_185, %c0_186] : memref<8x128xf32, #tpu.memory_space<vmem>>, vector<8x128xf32>
      tpu.vector_store %arg11[%c0_185, %c0_186], %351 {strides = array<i32>} : memref<8x128xf32, #tpu.memory_space<vmem>>, vector<8x128xf32>,
      %c0_187 = arith.constant 0 : index
      %c0_188 = arith.constant 0 : index
      %353 = vector.load %arg4[%c0_187, %c0_188] : memref<8x128xf32, #tpu.memory_space<vmem>>, vector<8x128xf32>
      %c0_189 = arith.constant 0 : index
      %c0_190 = arith.constant 0 : index
      %354 = vector.load %arg12[%c0_189, %c0_190] : memref<8x128xf32, #tpu.memory_space<vmem>>, vector<8x128xf32>
      tpu.vector_store %arg12[%c0_189, %c0_190], %353 {strides = array<i32>} : memref<8x128xf32, #tpu.memory_space<vmem>>, vector<8x128xf32>,
    } else {
    }
    %c0 = arith.constant 0 : index
    %c0_1 = arith.constant 0 : index
    %c0_2 = arith.constant 0 : index
    %3 = vector.load %arg2[%c0, %c0_1, %c0_2] : memref<1x64x128xbf16, #tpu.memory_space<vmem>>, vector<1x64x128xbf16>
    %4 = vector.shape_cast %3 : vector<1x64x128xbf16> to vector<64x128xbf16>
    %c0_3 = arith.constant 0 : index
    %c0_4 = arith.constant 0 : index
    %5 = vector.load %arg5[%c0_3, %c0_4] : memref<128x512xbf16, #tpu.memory_space<vmem>>, vector<128x512xbf16>
    %cst = arith.constant dense<0.000000e+00> : vector<64x512xf32>
    %6 = tpu.matmul %4, %5, %cst {dimension_numbers = #tpu.dot_dimension_numbers<[1], [0], [0], [1], [0, 0, 1, 1], [], []>} : vector<64x128xbf16>, vector<128x512xbf16>, vector<64x512xf32> -> vector<64x512xf32>
    %c0_5 = arith.constant 0 : index
    %c0_6 = arith.constant 0 : index
    %7 = vector.load %arg7[%c0_5, %c0_6] : memref<1x512xf32, #tpu.memory_space<vmem>>, vector<1x512xf32>
    %8 = vector.broadcast %7 : vector<1x512xf32> to vector<64x512xf32>
    %9 = arith.addf %6, %8 : vector<64x512xf32>
    %c0_7 = arith.constant 0 : index
    %c0_8 = arith.constant 0 : index
    %10 = vector.load %arg13[%c0_7, %c0_8] : memref<64x512xf32, #tpu.memory_space<vmem>>, vector<64x512xf32>
    tpu.vector_store %arg13[%c0_7, %c0_8], %9 {strides = array<i32>} : memref<64x512xf32, #tpu.memory_space<vmem>>, vector<64x512xf32>,
    %c0_9 = arith.constant 0 : index
    %c0_10 = arith.constant 0 : index
    %11 = vector.load %arg6[%c0_9, %c0_10] : memref<128x512xbf16, #tpu.memory_space<vmem>>, vector<128x512xbf16>
    %c0_11 = arith.constant 0 : index
    %c0_12 = arith.constant 0 : index
    %12 = vector.load %arg11[%c0_11, %c0_12] : memref<8x128xf32, #tpu.memory_space<vmem>>, vector<8x128xf32>
    %c0_13 = arith.constant 0 : index
    %c0_14 = arith.constant 0 : index
    %13 = vector.load %arg12[%c0_13, %c0_14] : memref<8x128xf32, #tpu.memory_space<vmem>>, vector<8x128xf32>
    %c0_15 = arith.constant 0 : index
    %c0_16 = arith.constant 0 : index
    %14 = vector.load %arg13[%c0_15, %c0_16] : memref<64x512xf32, #tpu.memory_space<vmem>>, vector<8x512xf32>
    %15 = arith.truncf %12 : vector<8x128xf32> to vector<8x128xbf16>
    %cst_17 = arith.constant dense<0.000000e+00> : vector<8x512xf32>
    %16 = tpu.matmul %15, %11, %cst_17 {dimension_numbers = #tpu.dot_dimension_numbers<[1], [0], [0], [1], [0, 0, 1, 1], [], []>} : vector<8x128xbf16>, vector<128x512xbf16>, vector<8x512xf32> -> vector<8x512xf32>
    %17 = arith.addf %14, %16 : vector<8x512xf32>
    %18 = vector.extract_strided_slice %17 {offsets = [0, 0], sizes = [8, 128], strides = [1, 1]} : vector<8x512xf32> to vector<8x128xf32>
    %cst_18 = arith.constant 5.000000e-01 : f32
    %19 = vector.broadcast %cst_18 : f32 to vector<8x128xf32>
    %20 = arith.mulf %19, %18 : vector<8x128xf32>
    %21 = math.tanh %20 : vector<8x128xf32>
    %cst_19 = arith.constant 5.000000e-01 : f32
    %22 = vector.broadcast %cst_19 : f32 to vector<8x128xf32>
    %23 = arith.mulf %22, %21 : vector<8x128xf32>
    %cst_20 = arith.constant 5.000000e-01 : f32
    %24 = vector.broadcast %cst_20 : f32 to vector<8x128xf32>
    %25 = arith.addf %23, %24 : vector<8x128xf32>
    %26 = vector.extract_strided_slice %17 {offsets = [0, 128], sizes = [8, 128], strides = [1, 1]} : vector<8x512xf32> to vector<8x128xf32>
    %cst_21 = arith.constant 5.000000e-01 : f32
    %27 = vector.broadcast %cst_21 : f32 to vector<8x128xf32>
    %28 = arith.mulf %27, %26 : vector<8x128xf32>
    %29 = math.tanh %28 : vector<8x128xf32>
    %cst_22 = arith.constant 5.000000e-01 : f32
    %30 = vector.broadcast %cst_22 : f32 to vector<8x128xf32>
    %31 = arith.mulf %30, %29 : vector<8x128xf32>
    %cst_23 = arith.constant 5.000000e-01 : f32
    %32 = vector.broadcast %cst_23 : f32 to vector<8x128xf32>
    %33 = arith.addf %31, %32 : vector<8x128xf32>
    %34 = vector.extract_strided_slice %17 {offsets = [0, 256], sizes = [8, 128], strides = [1, 1]} : vector<8x512xf32> to vector<8x128xf32>
    %35 = math.tanh %34 : vector<8x128xf32>
    %36 = vector.extract_strided_slice %17 {offsets = [0, 384], sizes = [8, 128], strides = [1, 1]} : vector<8x512xf32> to vector<8x128xf32>
    %cst_24 = arith.constant 5.000000e-01 : f32
    %37 = vector.broadcast %cst_24 : f32 to vector<8x128xf32>
    %38 = arith.mulf %37, %36 : vector<8x128xf32>
    %39 = math.tanh %38 : vector<8x128xf32>
    %cst_25 = arith.constant 5.000000e-01 : f32
    %40 = vector.broadcast %cst_25 : f32 to vector<8x128xf32>
    %41 = arith.mulf %40, %39 : vector<8x128xf32>
    %cst_26 = arith.constant 5.000000e-01 : f32
    %42 = vector.broadcast %cst_26 : f32 to vector<8x128xf32>
    %43 = arith.addf %41, %42 : vector<8x128xf32>
    %44 = arith.mulf %33, %13 : vector<8x128xf32>
    %45 = arith.mulf %25, %35 : vector<8x128xf32>
    %46 = arith.addf %44, %45 : vector<8x128xf32>
    %47 = math.tanh %46 : vector<8x128xf32>
    %48 = arith.mulf %43, %47 : vector<8x128xf32>
    %c0_27 = arith.constant 0 : index
    %c0_28 = arith.constant 0 : index
    %49 = vector.load %arg11[%c0_27, %c0_28] : memref<8x128xf32, #tpu.memory_space<vmem>>, vector<8x128xf32>
    tpu.vector_store %arg11[%c0_27, %c0_28], %48 {strides = array<i32>} : memref<8x128xf32, #tpu.memory_space<vmem>>, vector<8x128xf32>,
    %c0_29 = arith.constant 0 : index
    %c0_30 = arith.constant 0 : index
    %50 = vector.load %arg12[%c0_29, %c0_30] : memref<8x128xf32, #tpu.memory_space<vmem>>, vector<8x128xf32>
    tpu.vector_store %arg12[%c0_29, %c0_30], %46 {strides = array<i32>} : memref<8x128xf32, #tpu.memory_space<vmem>>, vector<8x128xf32>,
    %c0_31 = arith.constant 0 : index
    %c0_32 = arith.constant 0 : index
    %c0_33 = arith.constant 0 : index
    %51 = vector.load %arg8[%c0_31, %c0_32, %c0_33] : memref<8x8x128xf32, #tpu.memory_space<vmem>>, vector<8x1x128xf32>
    %52 = vector.shape_cast %51 : vector<8x1x128xf32> to vector<8x128xf32>
    %53 = vector.shape_cast %48 : vector<8x128xf32> to vector<8x1x128xf32>
    tpu.vector_store %arg8[%c0_31, %c0_32, %c0_33], %53 {strides = array<i32>} : memref<8x8x128xf32, #tpu.memory_space<vmem>>, vector<8x1x128xf32>,
    %c0_34 = arith.constant 0 : index
    %c0_35 = arith.constant 0 : index
    %54 = vector.load %arg11[%c0_34, %c0_35] : memref<8x128xf32, #tpu.memory_space<vmem>>, vector<8x128xf32>
    %c0_36 = arith.constant 0 : index
    %c0_37 = arith.constant 0 : index
    %55 = vector.load %arg12[%c0_36, %c0_37] : memref<8x128xf32, #tpu.memory_space<vmem>>, vector<8x128xf32>
    %c8 = arith.constant 8 : index
    %c0_38 = arith.constant 0 : index
    %56 = vector.load %arg13[%c8, %c0_38] : memref<64x512xf32, #tpu.memory_space<vmem>>, vector<8x512xf32>
    %57 = arith.truncf %54 : vector<8x128xf32> to vector<8x128xbf16>
    %cst_39 = arith.constant dense<0.000000e+00> : vector<8x512xf32>
    %58 = tpu.matmul %57, %11, %cst_39 {dimension_numbers = #tpu.dot_dimension_numbers<[1], [0], [0], [1], [0, 0, 1, 1], [], []>} : vector<8x128xbf16>, vector<128x512xbf16>, vector<8x512xf32> -> vector<8x512xf32>
    %59 = arith.addf %56, %58 : vector<8x512xf32>
    %60 = vector.extract_strided_slice %59 {offsets = [0, 0], sizes = [8, 128], strides = [1, 1]} : vector<8x512xf32> to vector<8x128xf32>
    %cst_40 = arith.constant 5.000000e-01 : f32
    %61 = vector.broadcast %cst_40 : f32 to vector<8x128xf32>
    %62 = arith.mulf %61, %60 : vector<8x128xf32>
    %63 = math.tanh %62 : vector<8x128xf32>
    %cst_41 = arith.constant 5.000000e-01 : f32
    %64 = vector.broadcast %cst_41 : f32 to vector<8x128xf32>
    %65 = arith.mulf %64, %63 : vector<8x128xf32>
    %cst_42 = arith.constant 5.000000e-01 : f32
    %66 = vector.broadcast %cst_42 : f32 to vector<8x128xf32>
    %67 = arith.addf %65, %66 : vector<8x128xf32>
    %68 = vector.extract_strided_slice %59 {offsets = [0, 128], sizes = [8, 128], strides = [1, 1]} : vector<8x512xf32> to vector<8x128xf32>
    %cst_43 = arith.constant 5.000000e-01 : f32
    %69 = vector.broadcast %cst_43 : f32 to vector<8x128xf32>
    %70 = arith.mulf %69, %68 : vector<8x128xf32>
    %71 = math.tanh %70 : vector<8x128xf32>
    %cst_44 = arith.constant 5.000000e-01 : f32
    %72 = vector.broadcast %cst_44 : f32 to vector<8x128xf32>
    %73 = arith.mulf %72, %71 : vector<8x128xf32>
    %cst_45 = arith.constant 5.000000e-01 : f32
    %74 = vector.broadcast %cst_45 : f32 to vector<8x128xf32>
    %75 = arith.addf %73, %74 : vector<8x128xf32>
    %76 = vector.extract_strided_slice %59 {offsets = [0, 256], sizes = [8, 128], strides = [1, 1]} : vector<8x512xf32> to vector<8x128xf32>
    %77 = math.tanh %76 : vector<8x128xf32>
    %78 = vector.extract_strided_slice %59 {offsets = [0, 384], sizes = [8, 128], strides = [1, 1]} : vector<8x512xf32> to vector<8x128xf32>
    %cst_46 = arith.constant 5.000000e-01 : f32
    %79 = vector.broadcast %cst_46 : f32 to vector<8x128xf32>
    %80 = arith.mulf %79, %78 : vector<8x128xf32>
    %81 = math.tanh %80 : vector<8x128xf32>
    %cst_47 = arith.constant 5.000000e-01 : f32
    %82 = vector.broadcast %cst_47 : f32 to vector<8x128xf32>
    %83 = arith.mulf %82, %81 : vector<8x128xf32>
    %cst_48 = arith.constant 5.000000e-01 : f32
    %84 = vector.broadcast %cst_48 : f32 to vector<8x128xf32>
    %85 = arith.addf %83, %84 : vector<8x128xf32>
    %86 = arith.mulf %75, %55 : vector<8x128xf32>
    %87 = arith.mulf %67, %77 : vector<8x128xf32>
    %88 = arith.addf %86, %87 : vector<8x128xf32>
    %89 = math.tanh %88 : vector<8x128xf32>
    %90 = arith.mulf %85, %89 : vector<8x128xf32>
    %c0_49 = arith.constant 0 : index
    %c0_50 = arith.constant 0 : index
    %91 = vector.load %arg11[%c0_49, %c0_50] : memref<8x128xf32, #tpu.memory_space<vmem>>, vector<8x128xf32>
    tpu.vector_store %arg11[%c0_49, %c0_50], %90 {strides = array<i32>} : memref<8x128xf32, #tpu.memory_space<vmem>>, vector<8x128xf32>,
    %c0_51 = arith.constant 0 : index
    %c0_52 = arith.constant 0 : index
    %92 = vector.load %arg12[%c0_51, %c0_52] : memref<8x128xf32, #tpu.memory_space<vmem>>, vector<8x128xf32>
    tpu.vector_store %arg12[%c0_51, %c0_52], %88 {strides = array<i32>} : memref<8x128xf32, #tpu.memory_space<vmem>>, vector<8x128xf32>,
    %c0_53 = arith.constant 0 : index
    %c1 = arith.constant 1 : index
    %c0_54 = arith.constant 0 : index
    %93 = vector.load %arg8[%c0_53, %c1, %c0_54] : memref<8x8x128xf32, #tpu.memory_space<vmem>>, vector<8x1x128xf32>
    %94 = vector.shape_cast %93 : vector<8x1x128xf32> to vector<8x128xf32>
    %95 = vector.shape_cast %90 : vector<8x128xf32> to vector<8x1x128xf32>
    tpu.vector_store %arg8[%c0_53, %c1, %c0_54], %95 {strides = array<i32>} : memref<8x8x128xf32, #tpu.memory_space<vmem>>, vector<8x1x128xf32>,
    %c0_55 = arith.constant 0 : index
    %c0_56 = arith.constant 0 : index
    %96 = vector.load %arg11[%c0_55, %c0_56] : memref<8x128xf32, #tpu.memory_space<vmem>>, vector<8x128xf32>
    %c0_57 = arith.constant 0 : index
    %c0_58 = arith.constant 0 : index
    %97 = vector.load %arg12[%c0_57, %c0_58] : memref<8x128xf32, #tpu.memory_space<vmem>>, vector<8x128xf32>
    %c16 = arith.constant 16 : index
    %c0_59 = arith.constant 0 : index
    %98 = vector.load %arg13[%c16, %c0_59] : memref<64x512xf32, #tpu.memory_space<vmem>>, vector<8x512xf32>
    %99 = arith.truncf %96 : vector<8x128xf32> to vector<8x128xbf16>
    %cst_60 = arith.constant dense<0.000000e+00> : vector<8x512xf32>
    %100 = tpu.matmul %99, %11, %cst_60 {dimension_numbers = #tpu.dot_dimension_numbers<[1], [0], [0], [1], [0, 0, 1, 1], [], []>} : vector<8x128xbf16>, vector<128x512xbf16>, vector<8x512xf32> -> vector<8x512xf32>
    %101 = arith.addf %98, %100 : vector<8x512xf32>
    %102 = vector.extract_strided_slice %101 {offsets = [0, 0], sizes = [8, 128], strides = [1, 1]} : vector<8x512xf32> to vector<8x128xf32>
    %cst_61 = arith.constant 5.000000e-01 : f32
    %103 = vector.broadcast %cst_61 : f32 to vector<8x128xf32>
    %104 = arith.mulf %103, %102 : vector<8x128xf32>
    %105 = math.tanh %104 : vector<8x128xf32>
    %cst_62 = arith.constant 5.000000e-01 : f32
    %106 = vector.broadcast %cst_62 : f32 to vector<8x128xf32>
    %107 = arith.mulf %106, %105 : vector<8x128xf32>
    %cst_63 = arith.constant 5.000000e-01 : f32
    %108 = vector.broadcast %cst_63 : f32 to vector<8x128xf32>
    %109 = arith.addf %107, %108 : vector<8x128xf32>
    %110 = vector.extract_strided_slice %101 {offsets = [0, 128], sizes = [8, 128], strides = [1, 1]} : vector<8x512xf32> to vector<8x128xf32>
    %cst_64 = arith.constant 5.000000e-01 : f32
    %111 = vector.broadcast %cst_64 : f32 to vector<8x128xf32>
    %112 = arith.mulf %111, %110 : vector<8x128xf32>
    %113 = math.tanh %112 : vector<8x128xf32>
    %cst_65 = arith.constant 5.000000e-01 : f32
    %114 = vector.broadcast %cst_65 : f32 to vector<8x128xf32>
    %115 = arith.mulf %114, %113 : vector<8x128xf32>
    %cst_66 = arith.constant 5.000000e-01 : f32
    %116 = vector.broadcast %cst_66 : f32 to vector<8x128xf32>
    %117 = arith.addf %115, %116 : vector<8x128xf32>
    %118 = vector.extract_strided_slice %101 {offsets = [0, 256], sizes = [8, 128], strides = [1, 1]} : vector<8x512xf32> to vector<8x128xf32>
    %119 = math.tanh %118 : vector<8x128xf32>
    %120 = vector.extract_strided_slice %101 {offsets = [0, 384], sizes = [8, 128], strides = [1, 1]} : vector<8x512xf32> to vector<8x128xf32>
    %cst_67 = arith.constant 5.000000e-01 : f32
    %121 = vector.broadcast %cst_67 : f32 to vector<8x128xf32>
    %122 = arith.mulf %121, %120 : vector<8x128xf32>
    %123 = math.tanh %122 : vector<8x128xf32>
    %cst_68 = arith.constant 5.000000e-01 : f32
    %124 = vector.broadcast %cst_68 : f32 to vector<8x128xf32>
    %125 = arith.mulf %124, %123 : vector<8x128xf32>
    %cst_69 = arith.constant 5.000000e-01 : f32
    %126 = vector.broadcast %cst_69 : f32 to vector<8x128xf32>
    %127 = arith.addf %125, %126 : vector<8x128xf32>
    %128 = arith.mulf %117, %97 : vector<8x128xf32>
    %129 = arith.mulf %109, %119 : vector<8x128xf32>
    %130 = arith.addf %128, %129 : vector<8x128xf32>
    %131 = math.tanh %130 : vector<8x128xf32>
    %132 = arith.mulf %127, %131 : vector<8x128xf32>
    %c0_70 = arith.constant 0 : index
    %c0_71 = arith.constant 0 : index
    %133 = vector.load %arg11[%c0_70, %c0_71] : memref<8x128xf32, #tpu.memory_space<vmem>>, vector<8x128xf32>
    tpu.vector_store %arg11[%c0_70, %c0_71], %132 {strides = array<i32>} : memref<8x128xf32, #tpu.memory_space<vmem>>, vector<8x128xf32>,
    %c0_72 = arith.constant 0 : index
    %c0_73 = arith.constant 0 : index
    %134 = vector.load %arg12[%c0_72, %c0_73] : memref<8x128xf32, #tpu.memory_space<vmem>>, vector<8x128xf32>
    tpu.vector_store %arg12[%c0_72, %c0_73], %130 {strides = array<i32>} : memref<8x128xf32, #tpu.memory_space<vmem>>, vector<8x128xf32>,
    %c0_74 = arith.constant 0 : index
    %c2 = arith.constant 2 : index
    %c0_75 = arith.constant 0 : index
    %135 = vector.load %arg8[%c0_74, %c2, %c0_75] : memref<8x8x128xf32, #tpu.memory_space<vmem>>, vector<8x1x128xf32>
    %136 = vector.shape_cast %135 : vector<8x1x128xf32> to vector<8x128xf32>
    %137 = vector.shape_cast %132 : vector<8x128xf32> to vector<8x1x128xf32>
    tpu.vector_store %arg8[%c0_74, %c2, %c0_75], %137 {strides = array<i32>} : memref<8x8x128xf32, #tpu.memory_space<vmem>>, vector<8x1x128xf32>,
    %c0_76 = arith.constant 0 : index
    %c0_77 = arith.constant 0 : index
    %138 = vector.load %arg11[%c0_76, %c0_77] : memref<8x128xf32, #tpu.memory_space<vmem>>, vector<8x128xf32>
    %c0_78 = arith.constant 0 : index
    %c0_79 = arith.constant 0 : index
    %139 = vector.load %arg12[%c0_78, %c0_79] : memref<8x128xf32, #tpu.memory_space<vmem>>, vector<8x128xf32>
    %c24 = arith.constant 24 : index
    %c0_80 = arith.constant 0 : index
    %140 = vector.load %arg13[%c24, %c0_80] : memref<64x512xf32, #tpu.memory_space<vmem>>, vector<8x512xf32>
    %141 = arith.truncf %138 : vector<8x128xf32> to vector<8x128xbf16>
    %cst_81 = arith.constant dense<0.000000e+00> : vector<8x512xf32>
    %142 = tpu.matmul %141, %11, %cst_81 {dimension_numbers = #tpu.dot_dimension_numbers<[1], [0], [0], [1], [0, 0, 1, 1], [], []>} : vector<8x128xbf16>, vector<128x512xbf16>, vector<8x512xf32> -> vector<8x512xf32>
    %143 = arith.addf %140, %142 : vector<8x512xf32>
    %144 = vector.extract_strided_slice %143 {offsets = [0, 0], sizes = [8, 128], strides = [1, 1]} : vector<8x512xf32> to vector<8x128xf32>
    %cst_82 = arith.constant 5.000000e-01 : f32
    %145 = vector.broadcast %cst_82 : f32 to vector<8x128xf32>
    %146 = arith.mulf %145, %144 : vector<8x128xf32>
    %147 = math.tanh %146 : vector<8x128xf32>
    %cst_83 = arith.constant 5.000000e-01 : f32
    %148 = vector.broadcast %cst_83 : f32 to vector<8x128xf32>
    %149 = arith.mulf %148, %147 : vector<8x128xf32>
    %cst_84 = arith.constant 5.000000e-01 : f32
    %150 = vector.broadcast %cst_84 : f32 to vector<8x128xf32>
    %151 = arith.addf %149, %150 : vector<8x128xf32>
    %152 = vector.extract_strided_slice %143 {offsets = [0, 128], sizes = [8, 128], strides = [1, 1]} : vector<8x512xf32> to vector<8x128xf32>
    %cst_85 = arith.constant 5.000000e-01 : f32
    %153 = vector.broadcast %cst_85 : f32 to vector<8x128xf32>
    %154 = arith.mulf %153, %152 : vector<8x128xf32>
    %155 = math.tanh %154 : vector<8x128xf32>
    %cst_86 = arith.constant 5.000000e-01 : f32
    %156 = vector.broadcast %cst_86 : f32 to vector<8x128xf32>
    %157 = arith.mulf %156, %155 : vector<8x128xf32>
    %cst_87 = arith.constant 5.000000e-01 : f32
    %158 = vector.broadcast %cst_87 : f32 to vector<8x128xf32>
    %159 = arith.addf %157, %158 : vector<8x128xf32>
    %160 = vector.extract_strided_slice %143 {offsets = [0, 256], sizes = [8, 128], strides = [1, 1]} : vector<8x512xf32> to vector<8x128xf32>
    %161 = math.tanh %160 : vector<8x128xf32>
    %162 = vector.extract_strided_slice %143 {offsets = [0, 384], sizes = [8, 128], strides = [1, 1]} : vector<8x512xf32> to vector<8x128xf32>
    %cst_88 = arith.constant 5.000000e-01 : f32
    %163 = vector.broadcast %cst_88 : f32 to vector<8x128xf32>
    %164 = arith.mulf %163, %162 : vector<8x128xf32>
    %165 = math.tanh %164 : vector<8x128xf32>
    %cst_89 = arith.constant 5.000000e-01 : f32
    %166 = vector.broadcast %cst_89 : f32 to vector<8x128xf32>
    %167 = arith.mulf %166, %165 : vector<8x128xf32>
    %cst_90 = arith.constant 5.000000e-01 : f32
    %168 = vector.broadcast %cst_90 : f32 to vector<8x128xf32>
    %169 = arith.addf %167, %168 : vector<8x128xf32>
    %170 = arith.mulf %159, %139 : vector<8x128xf32>
    %171 = arith.mulf %151, %161 : vector<8x128xf32>
    %172 = arith.addf %170, %171 : vector<8x128xf32>
    %173 = math.tanh %172 : vector<8x128xf32>
    %174 = arith.mulf %169, %173 : vector<8x128xf32>
    %c0_91 = arith.constant 0 : index
    %c0_92 = arith.constant 0 : index
    %175 = vector.load %arg11[%c0_91, %c0_92] : memref<8x128xf32, #tpu.memory_space<vmem>>, vector<8x128xf32>
    tpu.vector_store %arg11[%c0_91, %c0_92], %174 {strides = array<i32>} : memref<8x128xf32, #tpu.memory_space<vmem>>, vector<8x128xf32>,
    %c0_93 = arith.constant 0 : index
    %c0_94 = arith.constant 0 : index
    %176 = vector.load %arg12[%c0_93, %c0_94] : memref<8x128xf32, #tpu.memory_space<vmem>>, vector<8x128xf32>
    tpu.vector_store %arg12[%c0_93, %c0_94], %172 {strides = array<i32>} : memref<8x128xf32, #tpu.memory_space<vmem>>, vector<8x128xf32>,
    %c0_95 = arith.constant 0 : index
    %c3 = arith.constant 3 : index
    %c0_96 = arith.constant 0 : index
    %177 = vector.load %arg8[%c0_95, %c3, %c0_96] : memref<8x8x128xf32, #tpu.memory_space<vmem>>, vector<8x1x128xf32>
    %178 = vector.shape_cast %177 : vector<8x1x128xf32> to vector<8x128xf32>
    %179 = vector.shape_cast %174 : vector<8x128xf32> to vector<8x1x128xf32>
    tpu.vector_store %arg8[%c0_95, %c3, %c0_96], %179 {strides = array<i32>} : memref<8x8x128xf32, #tpu.memory_space<vmem>>, vector<8x1x128xf32>,
    %c0_97 = arith.constant 0 : index
    %c0_98 = arith.constant 0 : index
    %180 = vector.load %arg11[%c0_97, %c0_98] : memref<8x128xf32, #tpu.memory_space<vmem>>, vector<8x128xf32>
    %c0_99 = arith.constant 0 : index
    %c0_100 = arith.constant 0 : index
    %181 = vector.load %arg12[%c0_99, %c0_100] : memref<8x128xf32, #tpu.memory_space<vmem>>, vector<8x128xf32>
    %c32 = arith.constant 32 : index
    %c0_101 = arith.constant 0 : index
    %182 = vector.load %arg13[%c32, %c0_101] : memref<64x512xf32, #tpu.memory_space<vmem>>, vector<8x512xf32>
    %183 = arith.truncf %180 : vector<8x128xf32> to vector<8x128xbf16>
    %cst_102 = arith.constant dense<0.000000e+00> : vector<8x512xf32>
    %184 = tpu.matmul %183, %11, %cst_102 {dimension_numbers = #tpu.dot_dimension_numbers<[1], [0], [0], [1], [0, 0, 1, 1], [], []>} : vector<8x128xbf16>, vector<128x512xbf16>, vector<8x512xf32> -> vector<8x512xf32>
    %185 = arith.addf %182, %184 : vector<8x512xf32>
    %186 = vector.extract_strided_slice %185 {offsets = [0, 0], sizes = [8, 128], strides = [1, 1]} : vector<8x512xf32> to vector<8x128xf32>
    %cst_103 = arith.constant 5.000000e-01 : f32
    %187 = vector.broadcast %cst_103 : f32 to vector<8x128xf32>
    %188 = arith.mulf %187, %186 : vector<8x128xf32>
    %189 = math.tanh %188 : vector<8x128xf32>
    %cst_104 = arith.constant 5.000000e-01 : f32
    %190 = vector.broadcast %cst_104 : f32 to vector<8x128xf32>
    %191 = arith.mulf %190, %189 : vector<8x128xf32>
    %cst_105 = arith.constant 5.000000e-01 : f32
    %192 = vector.broadcast %cst_105 : f32 to vector<8x128xf32>
    %193 = arith.addf %191, %192 : vector<8x128xf32>
    %194 = vector.extract_strided_slice %185 {offsets = [0, 128], sizes = [8, 128], strides = [1, 1]} : vector<8x512xf32> to vector<8x128xf32>
    %cst_106 = arith.constant 5.000000e-01 : f32
    %195 = vector.broadcast %cst_106 : f32 to vector<8x128xf32>
    %196 = arith.mulf %195, %194 : vector<8x128xf32>
    %197 = math.tanh %196 : vector<8x128xf32>
    %cst_107 = arith.constant 5.000000e-01 : f32
    %198 = vector.broadcast %cst_107 : f32 to vector<8x128xf32>
    %199 = arith.mulf %198, %197 : vector<8x128xf32>
    %cst_108 = arith.constant 5.000000e-01 : f32
    %200 = vector.broadcast %cst_108 : f32 to vector<8x128xf32>
    %201 = arith.addf %199, %200 : vector<8x128xf32>
    %202 = vector.extract_strided_slice %185 {offsets = [0, 256], sizes = [8, 128], strides = [1, 1]} : vector<8x512xf32> to vector<8x128xf32>
    %203 = math.tanh %202 : vector<8x128xf32>
    %204 = vector.extract_strided_slice %185 {offsets = [0, 384], sizes = [8, 128], strides = [1, 1]} : vector<8x512xf32> to vector<8x128xf32>
    %cst_109 = arith.constant 5.000000e-01 : f32
    %205 = vector.broadcast %cst_109 : f32 to vector<8x128xf32>
    %206 = arith.mulf %205, %204 : vector<8x128xf32>
    %207 = math.tanh %206 : vector<8x128xf32>
    %cst_110 = arith.constant 5.000000e-01 : f32
    %208 = vector.broadcast %cst_110 : f32 to vector<8x128xf32>
    %209 = arith.mulf %208, %207 : vector<8x128xf32>
    %cst_111 = arith.constant 5.000000e-01 : f32
    %210 = vector.broadcast %cst_111 : f32 to vector<8x128xf32>
    %211 = arith.addf %209, %210 : vector<8x128xf32>
    %212 = arith.mulf %201, %181 : vector<8x128xf32>
    %213 = arith.mulf %193, %203 : vector<8x128xf32>
    %214 = arith.addf %212, %213 : vector<8x128xf32>
    %215 = math.tanh %214 : vector<8x128xf32>
    %216 = arith.mulf %211, %215 : vector<8x128xf32>
    %c0_112 = arith.constant 0 : index
    %c0_113 = arith.constant 0 : index
    %217 = vector.load %arg11[%c0_112, %c0_113] : memref<8x128xf32, #tpu.memory_space<vmem>>, vector<8x128xf32>
    tpu.vector_store %arg11[%c0_112, %c0_113], %216 {strides = array<i32>} : memref<8x128xf32, #tpu.memory_space<vmem>>, vector<8x128xf32>,
    %c0_114 = arith.constant 0 : index
    %c0_115 = arith.constant 0 : index
    %218 = vector.load %arg12[%c0_114, %c0_115] : memref<8x128xf32, #tpu.memory_space<vmem>>, vector<8x128xf32>
    tpu.vector_store %arg12[%c0_114, %c0_115], %214 {strides = array<i32>} : memref<8x128xf32, #tpu.memory_space<vmem>>, vector<8x128xf32>,
    %c0_116 = arith.constant 0 : index
    %c4 = arith.constant 4 : index
    %c0_117 = arith.constant 0 : index
    %219 = vector.load %arg8[%c0_116, %c4, %c0_117] : memref<8x8x128xf32, #tpu.memory_space<vmem>>, vector<8x1x128xf32>
    %220 = vector.shape_cast %219 : vector<8x1x128xf32> to vector<8x128xf32>
    %221 = vector.shape_cast %216 : vector<8x128xf32> to vector<8x1x128xf32>
    tpu.vector_store %arg8[%c0_116, %c4, %c0_117], %221 {strides = array<i32>} : memref<8x8x128xf32, #tpu.memory_space<vmem>>, vector<8x1x128xf32>,
    %c0_118 = arith.constant 0 : index
    %c0_119 = arith.constant 0 : index
    %222 = vector.load %arg11[%c0_118, %c0_119] : memref<8x128xf32, #tpu.memory_space<vmem>>, vector<8x128xf32>
    %c0_120 = arith.constant 0 : index
    %c0_121 = arith.constant 0 : index
    %223 = vector.load %arg12[%c0_120, %c0_121] : memref<8x128xf32, #tpu.memory_space<vmem>>, vector<8x128xf32>
    %c40 = arith.constant 40 : index
    %c0_122 = arith.constant 0 : index
    %224 = vector.load %arg13[%c40, %c0_122] : memref<64x512xf32, #tpu.memory_space<vmem>>, vector<8x512xf32>
    %225 = arith.truncf %222 : vector<8x128xf32> to vector<8x128xbf16>
    %cst_123 = arith.constant dense<0.000000e+00> : vector<8x512xf32>
    %226 = tpu.matmul %225, %11, %cst_123 {dimension_numbers = #tpu.dot_dimension_numbers<[1], [0], [0], [1], [0, 0, 1, 1], [], []>} : vector<8x128xbf16>, vector<128x512xbf16>, vector<8x512xf32> -> vector<8x512xf32>
    %227 = arith.addf %224, %226 : vector<8x512xf32>
    %228 = vector.extract_strided_slice %227 {offsets = [0, 0], sizes = [8, 128], strides = [1, 1]} : vector<8x512xf32> to vector<8x128xf32>
    %cst_124 = arith.constant 5.000000e-01 : f32
    %229 = vector.broadcast %cst_124 : f32 to vector<8x128xf32>
    %230 = arith.mulf %229, %228 : vector<8x128xf32>
    %231 = math.tanh %230 : vector<8x128xf32>
    %cst_125 = arith.constant 5.000000e-01 : f32
    %232 = vector.broadcast %cst_125 : f32 to vector<8x128xf32>
    %233 = arith.mulf %232, %231 : vector<8x128xf32>
    %cst_126 = arith.constant 5.000000e-01 : f32
    %234 = vector.broadcast %cst_126 : f32 to vector<8x128xf32>
    %235 = arith.addf %233, %234 : vector<8x128xf32>
    %236 = vector.extract_strided_slice %227 {offsets = [0, 128], sizes = [8, 128], strides = [1, 1]} : vector<8x512xf32> to vector<8x128xf32>
    %cst_127 = arith.constant 5.000000e-01 : f32
    %237 = vector.broadcast %cst_127 : f32 to vector<8x128xf32>
    %238 = arith.mulf %237, %236 : vector<8x128xf32>
    %239 = math.tanh %238 : vector<8x128xf32>
    %cst_128 = arith.constant 5.000000e-01 : f32
    %240 = vector.broadcast %cst_128 : f32 to vector<8x128xf32>
    %241 = arith.mulf %240, %239 : vector<8x128xf32>
    %cst_129 = arith.constant 5.000000e-01 : f32
    %242 = vector.broadcast %cst_129 : f32 to vector<8x128xf32>
    %243 = arith.addf %241, %242 : vector<8x128xf32>
    %244 = vector.extract_strided_slice %227 {offsets = [0, 256], sizes = [8, 128], strides = [1, 1]} : vector<8x512xf32> to vector<8x128xf32>
    %245 = math.tanh %244 : vector<8x128xf32>
    %246 = vector.extract_strided_slice %227 {offsets = [0, 384], sizes = [8, 128], strides = [1, 1]} : vector<8x512xf32> to vector<8x128xf32>
    %cst_130 = arith.constant 5.000000e-01 : f32
    %247 = vector.broadcast %cst_130 : f32 to vector<8x128xf32>
    %248 = arith.mulf %247, %246 : vector<8x128xf32>
    %249 = math.tanh %248 : vector<8x128xf32>
    %cst_131 = arith.constant 5.000000e-01 : f32
    %250 = vector.broadcast %cst_131 : f32 to vector<8x128xf32>
    %251 = arith.mulf %250, %249 : vector<8x128xf32>
    %cst_132 = arith.constant 5.000000e-01 : f32
    %252 = vector.broadcast %cst_132 : f32 to vector<8x128xf32>
    %253 = arith.addf %251, %252 : vector<8x128xf32>
    %254 = arith.mulf %243, %223 : vector<8x128xf32>
    %255 = arith.mulf %235, %245 : vector<8x128xf32>
    %256 = arith.addf %254, %255 : vector<8x128xf32>
    %257 = math.tanh %256 : vector<8x128xf32>
    %258 = arith.mulf %253, %257 : vector<8x128xf32>
    %c0_133 = arith.constant 0 : index
    %c0_134 = arith.constant 0 : index
    %259 = vector.load %arg11[%c0_133, %c0_134] : memref<8x128xf32, #tpu.memory_space<vmem>>, vector<8x128xf32>
    tpu.vector_store %arg11[%c0_133, %c0_134], %258 {strides = array<i32>} : memref<8x128xf32, #tpu.memory_space<vmem>>, vector<8x128xf32>,
    %c0_135 = arith.constant 0 : index
    %c0_136 = arith.constant 0 : index
    %260 = vector.load %arg12[%c0_135, %c0_136] : memref<8x128xf32, #tpu.memory_space<vmem>>, vector<8x128xf32>
    tpu.vector_store %arg12[%c0_135, %c0_136], %256 {strides = array<i32>} : memref<8x128xf32, #tpu.memory_space<vmem>>, vector<8x128xf32>,
    %c0_137 = arith.constant 0 : index
    %c5 = arith.constant 5 : index
    %c0_138 = arith.constant 0 : index
    %261 = vector.load %arg8[%c0_137, %c5, %c0_138] : memref<8x8x128xf32, #tpu.memory_space<vmem>>, vector<8x1x128xf32>
    %262 = vector.shape_cast %261 : vector<8x1x128xf32> to vector<8x128xf32>
    %263 = vector.shape_cast %258 : vector<8x128xf32> to vector<8x1x128xf32>
    tpu.vector_store %arg8[%c0_137, %c5, %c0_138], %263 {strides = array<i32>} : memref<8x8x128xf32, #tpu.memory_space<vmem>>, vector<8x1x128xf32>,
    %c0_139 = arith.constant 0 : index
    %c0_140 = arith.constant 0 : index
    %264 = vector.load %arg11[%c0_139, %c0_140] : memref<8x128xf32, #tpu.memory_space<vmem>>, vector<8x128xf32>
    %c0_141 = arith.constant 0 : index
    %c0_142 = arith.constant 0 : index
    %265 = vector.load %arg12[%c0_141, %c0_142] : memref<8x128xf32, #tpu.memory_space<vmem>>, vector<8x128xf32>
    %c48 = arith.constant 48 : index
    %c0_143 = arith.constant 0 : index
    %266 = vector.load %arg13[%c48, %c0_143] : memref<64x512xf32, #tpu.memory_space<vmem>>, vector<8x512xf32>
    %267 = arith.truncf %264 : vector<8x128xf32> to vector<8x128xbf16>
    %cst_144 = arith.constant dense<0.000000e+00> : vector<8x512xf32>
    %268 = tpu.matmul %267, %11, %cst_144 {dimension_numbers = #tpu.dot_dimension_numbers<[1], [0], [0], [1], [0, 0, 1, 1], [], []>} : vector<8x128xbf16>, vector<128x512xbf16>, vector<8x512xf32> -> vector<8x512xf32>
    %269 = arith.addf %266, %268 : vector<8x512xf32>
    %270 = vector.extract_strided_slice %269 {offsets = [0, 0], sizes = [8, 128], strides = [1, 1]} : vector<8x512xf32> to vector<8x128xf32>
    %cst_145 = arith.constant 5.000000e-01 : f32
    %271 = vector.broadcast %cst_145 : f32 to vector<8x128xf32>
    %272 = arith.mulf %271, %270 : vector<8x128xf32>
    %273 = math.tanh %272 : vector<8x128xf32>
    %cst_146 = arith.constant 5.000000e-01 : f32
    %274 = vector.broadcast %cst_146 : f32 to vector<8x128xf32>
    %275 = arith.mulf %274, %273 : vector<8x128xf32>
    %cst_147 = arith.constant 5.000000e-01 : f32
    %276 = vector.broadcast %cst_147 : f32 to vector<8x128xf32>
    %277 = arith.addf %275, %276 : vector<8x128xf32>
    %278 = vector.extract_strided_slice %269 {offsets = [0, 128], sizes = [8, 128], strides = [1, 1]} : vector<8x512xf32> to vector<8x128xf32>
    %cst_148 = arith.constant 5.000000e-01 : f32
    %279 = vector.broadcast %cst_148 : f32 to vector<8x128xf32>
    %280 = arith.mulf %279, %278 : vector<8x128xf32>
    %281 = math.tanh %280 : vector<8x128xf32>
    %cst_149 = arith.constant 5.000000e-01 : f32
    %282 = vector.broadcast %cst_149 : f32 to vector<8x128xf32>
    %283 = arith.mulf %282, %281 : vector<8x128xf32>
    %cst_150 = arith.constant 5.000000e-01 : f32
    %284 = vector.broadcast %cst_150 : f32 to vector<8x128xf32>
    %285 = arith.addf %283, %284 : vector<8x128xf32>
    %286 = vector.extract_strided_slice %269 {offsets = [0, 256], sizes = [8, 128], strides = [1, 1]} : vector<8x512xf32> to vector<8x128xf32>
    %287 = math.tanh %286 : vector<8x128xf32>
    %288 = vector.extract_strided_slice %269 {offsets = [0, 384], sizes = [8, 128], strides = [1, 1]} : vector<8x512xf32> to vector<8x128xf32>
    %cst_151 = arith.constant 5.000000e-01 : f32
    %289 = vector.broadcast %cst_151 : f32 to vector<8x128xf32>
    %290 = arith.mulf %289, %288 : vector<8x128xf32>
    %291 = math.tanh %290 : vector<8x128xf32>
    %cst_152 = arith.constant 5.000000e-01 : f32
    %292 = vector.broadcast %cst_152 : f32 to vector<8x128xf32>
    %293 = arith.mulf %292, %291 : vector<8x128xf32>
    %cst_153 = arith.constant 5.000000e-01 : f32
    %294 = vector.broadcast %cst_153 : f32 to vector<8x128xf32>
    %295 = arith.addf %293, %294 : vector<8x128xf32>
    %296 = arith.mulf %285, %265 : vector<8x128xf32>
    %297 = arith.mulf %277, %287 : vector<8x128xf32>
    %298 = arith.addf %296, %297 : vector<8x128xf32>
    %299 = math.tanh %298 : vector<8x128xf32>
    %300 = arith.mulf %295, %299 : vector<8x128xf32>
    %c0_154 = arith.constant 0 : index
    %c0_155 = arith.constant 0 : index
    %301 = vector.load %arg11[%c0_154, %c0_155] : memref<8x128xf32, #tpu.memory_space<vmem>>, vector<8x128xf32>
    tpu.vector_store %arg11[%c0_154, %c0_155], %300 {strides = array<i32>} : memref<8x128xf32, #tpu.memory_space<vmem>>, vector<8x128xf32>,
    %c0_156 = arith.constant 0 : index
    %c0_157 = arith.constant 0 : index
    %302 = vector.load %arg12[%c0_156, %c0_157] : memref<8x128xf32, #tpu.memory_space<vmem>>, vector<8x128xf32>
    tpu.vector_store %arg12[%c0_156, %c0_157], %298 {strides = array<i32>} : memref<8x128xf32, #tpu.memory_space<vmem>>, vector<8x128xf32>,
    %c0_158 = arith.constant 0 : index
    %c6 = arith.constant 6 : index
    %c0_159 = arith.constant 0 : index
    %303 = vector.load %arg8[%c0_158, %c6, %c0_159] : memref<8x8x128xf32, #tpu.memory_space<vmem>>, vector<8x1x128xf32>
    %304 = vector.shape_cast %303 : vector<8x1x128xf32> to vector<8x128xf32>
    %305 = vector.shape_cast %300 : vector<8x128xf32> to vector<8x1x128xf32>
    tpu.vector_store %arg8[%c0_158, %c6, %c0_159], %305 {strides = array<i32>} : memref<8x8x128xf32, #tpu.memory_space<vmem>>, vector<8x1x128xf32>,
    %c0_160 = arith.constant 0 : index
    %c0_161 = arith.constant 0 : index
    %306 = vector.load %arg11[%c0_160, %c0_161] : memref<8x128xf32, #tpu.memory_space<vmem>>, vector<8x128xf32>
    %c0_162 = arith.constant 0 : index
    %c0_163 = arith.constant 0 : index
    %307 = vector.load %arg12[%c0_162, %c0_163] : memref<8x128xf32, #tpu.memory_space<vmem>>, vector<8x128xf32>
    %c56 = arith.constant 56 : index
    %c0_164 = arith.constant 0 : index
    %308 = vector.load %arg13[%c56, %c0_164] : memref<64x512xf32, #tpu.memory_space<vmem>>, vector<8x512xf32>
    %309 = arith.truncf %306 : vector<8x128xf32> to vector<8x128xbf16>
    %cst_165 = arith.constant dense<0.000000e+00> : vector<8x512xf32>
    %310 = tpu.matmul %309, %11, %cst_165 {dimension_numbers = #tpu.dot_dimension_numbers<[1], [0], [0], [1], [0, 0, 1, 1], [], []>} : vector<8x128xbf16>, vector<128x512xbf16>, vector<8x512xf32> -> vector<8x512xf32>
    %311 = arith.addf %308, %310 : vector<8x512xf32>
    %312 = vector.extract_strided_slice %311 {offsets = [0, 0], sizes = [8, 128], strides = [1, 1]} : vector<8x512xf32> to vector<8x128xf32>
    %cst_166 = arith.constant 5.000000e-01 : f32
    %313 = vector.broadcast %cst_166 : f32 to vector<8x128xf32>
    %314 = arith.mulf %313, %312 : vector<8x128xf32>
    %315 = math.tanh %314 : vector<8x128xf32>
    %cst_167 = arith.constant 5.000000e-01 : f32
    %316 = vector.broadcast %cst_167 : f32 to vector<8x128xf32>
    %317 = arith.mulf %316, %315 : vector<8x128xf32>
    %cst_168 = arith.constant 5.000000e-01 : f32
    %318 = vector.broadcast %cst_168 : f32 to vector<8x128xf32>
    %319 = arith.addf %317, %318 : vector<8x128xf32>
    %320 = vector.extract_strided_slice %311 {offsets = [0, 128], sizes = [8, 128], strides = [1, 1]} : vector<8x512xf32> to vector<8x128xf32>
    %cst_169 = arith.constant 5.000000e-01 : f32
    %321 = vector.broadcast %cst_169 : f32 to vector<8x128xf32>
    %322 = arith.mulf %321, %320 : vector<8x128xf32>
    %323 = math.tanh %322 : vector<8x128xf32>
    %cst_170 = arith.constant 5.000000e-01 : f32
    %324 = vector.broadcast %cst_170 : f32 to vector<8x128xf32>
    %325 = arith.mulf %324, %323 : vector<8x128xf32>
    %cst_171 = arith.constant 5.000000e-01 : f32
    %326 = vector.broadcast %cst_171 : f32 to vector<8x128xf32>
    %327 = arith.addf %325, %326 : vector<8x128xf32>
    %328 = vector.extract_strided_slice %311 {offsets = [0, 256], sizes = [8, 128], strides = [1, 1]} : vector<8x512xf32> to vector<8x128xf32>
    %329 = math.tanh %328 : vector<8x128xf32>
    %330 = vector.extract_strided_slice %311 {offsets = [0, 384], sizes = [8, 128], strides = [1, 1]} : vector<8x512xf32> to vector<8x128xf32>
    %cst_172 = arith.constant 5.000000e-01 : f32
    %331 = vector.broadcast %cst_172 : f32 to vector<8x128xf32>
    %332 = arith.mulf %331, %330 : vector<8x128xf32>
    %333 = math.tanh %332 : vector<8x128xf32>
    %cst_173 = arith.constant 5.000000e-01 : f32
    %334 = vector.broadcast %cst_173 : f32 to vector<8x128xf32>
    %335 = arith.mulf %334, %333 : vector<8x128xf32>
    %cst_174 = arith.constant 5.000000e-01 : f32
    %336 = vector.broadcast %cst_174 : f32 to vector<8x128xf32>
    %337 = arith.addf %335, %336 : vector<8x128xf32>
    %338 = arith.mulf %327, %307 : vector<8x128xf32>
    %339 = arith.mulf %319, %329 : vector<8x128xf32>
    %340 = arith.addf %338, %339 : vector<8x128xf32>
    %341 = math.tanh %340 : vector<8x128xf32>
    %342 = arith.mulf %337, %341 : vector<8x128xf32>
    %c0_175 = arith.constant 0 : index
    %c0_176 = arith.constant 0 : index
    %343 = vector.load %arg11[%c0_175, %c0_176] : memref<8x128xf32, #tpu.memory_space<vmem>>, vector<8x128xf32>
    tpu.vector_store %arg11[%c0_175, %c0_176], %342 {strides = array<i32>} : memref<8x128xf32, #tpu.memory_space<vmem>>, vector<8x128xf32>,
    %c0_177 = arith.constant 0 : index
    %c0_178 = arith.constant 0 : index
    %344 = vector.load %arg12[%c0_177, %c0_178] : memref<8x128xf32, #tpu.memory_space<vmem>>, vector<8x128xf32>
    tpu.vector_store %arg12[%c0_177, %c0_178], %340 {strides = array<i32>} : memref<8x128xf32, #tpu.memory_space<vmem>>, vector<8x128xf32>,
    %c0_179 = arith.constant 0 : index
    %c7 = arith.constant 7 : index
    %c0_180 = arith.constant 0 : index
    %345 = vector.load %arg8[%c0_179, %c7, %c0_180] : memref<8x8x128xf32, #tpu.memory_space<vmem>>, vector<8x1x128xf32>
    %346 = vector.shape_cast %345 : vector<8x1x128xf32> to vector<8x128xf32>
    %347 = vector.shape_cast %342 : vector<8x128xf32> to vector<8x1x128xf32>
    tpu.vector_store %arg8[%c0_179, %c7, %c0_180], %347 {strides = array<i32>} : memref<8x8x128xf32, #tpu.memory_space<vmem>>, vector<8x1x128xf32>,
    %c0_i32_181 = arith.constant 0 : i32
    %348 = arith.cmpi eq, %arg1, %c0_i32_181 : i32
    %349 = arith.extui %348 : i1 to i32
    %c0_i32_182 = arith.constant 0 : i32
    %350 = arith.cmpi ne, %349, %c0_i32_182 : i32
    scf.if %350 {
      %c0_183 = arith.constant 0 : index
      %c0_184 = arith.constant 0 : index
      %351 = vector.load %arg11[%c0_183, %c0_184] : memref<8x128xf32, #tpu.memory_space<vmem>>, vector<8x128xf32>
      %c0_185 = arith.constant 0 : index
      %c0_186 = arith.constant 0 : index
      %352 = vector.load %arg9[%c0_185, %c0_186] : memref<8x128xf32, #tpu.memory_space<vmem>>, vector<8x128xf32>
      tpu.vector_store %arg9[%c0_185, %c0_186], %351 {strides = array<i32>} : memref<8x128xf32, #tpu.memory_space<vmem>>, vector<8x128xf32>,
      %c0_187 = arith.constant 0 : index
      %c0_188 = arith.constant 0 : index
      %353 = vector.load %arg12[%c0_187, %c0_188] : memref<8x128xf32, #tpu.memory_space<vmem>>, vector<8x128xf32>
      %c0_189 = arith.constant 0 : index
      %c0_190 = arith.constant 0 : index
      %354 = vector.load %arg10[%c0_189, %c0_190] : memref<8x128xf32, #tpu.memory_space<vmem>>, vector<8x128xf32>
      tpu.vector_store %arg10[%c0_189, %c0_190], %353 {strides = array<i32>} : memref<8x128xf32, #tpu.memory_space<vmem>>, vector<8x128xf32>,
    } else {
    }
    return
  }
  func.func @transform_0(%arg0: i32, %arg1: i32) -> (i32, i32, i32) {
    %c0_i32 = arith.constant 0 : i32
    %c0_i32_0 = arith.constant 0 : i32
    return %arg0, %arg1, %c0_i32 : i32, i32, i32
  }
  func.func @transform_1(%arg0: i32, %arg1: i32) -> (i32, i32) {
    %c0_i32 = arith.constant 0 : i32
    %c0_i32_0 = arith.constant 0 : i32
    return %arg0, %c0_i32 : i32, i32
  }
  func.func @transform_2(%arg0: i32, %arg1: i32) -> (i32, i32) {
    %c0_i32 = arith.constant 0 : i32
    %c0_i32_0 = arith.constant 0 : i32
    return %arg0, %c0_i32 : i32, i32
  }
  func.func @transform_3(%arg0: i32, %arg1: i32) -> (i32, i32) {
    %c0_i32 = arith.constant 0 : i32
    %c0_i32_0 = arith.constant 0 : i32
    %c0_i32_1 = arith.constant 0 : i32
    return %c0_i32, %c0_i32_0 : i32, i32
  }
  func.func @transform_4(%arg0: i32, %arg1: i32) -> (i32, i32) {
    %c0_i32 = arith.constant 0 : i32
    %c0_i32_0 = arith.constant 0 : i32
    %c0_i32_1 = arith.constant 0 : i32
    return %c0_i32, %c0_i32_0 : i32, i32
  }
  func.func @transform_5(%arg0: i32, %arg1: i32) -> (i32, i32) {
    %c0_i32 = arith.constant 0 : i32
    %c0_i32_0 = arith.constant 0 : i32
    %c0_i32_1 = arith.constant 0 : i32
    return %c0_i32, %c0_i32_0 : i32, i32
  }
  func.func @transform_6(%arg0: i32, %arg1: i32) -> (i32, i32, i32) {
    %c0_i32 = arith.constant 0 : i32
    %c0_i32_0 = arith.constant 0 : i32
    return %arg0, %arg1, %c0_i32 : i32, i32, i32
  }
  func.func @transform_7(%arg0: i32, %arg1: i32) -> (i32, i32) {
    %c0_i32 = arith.constant 0 : i32
    %c0_i32_0 = arith.constant 0 : i32
    return %arg0, %c0_i32 : i32, i32
  }
  func.func @transform_8(%arg0: i32, %arg1: i32) -> (i32, i32) {
    %c0_i32 = arith.constant 0 : i32
    %c0_i32_0 = arith.constant 0 : i32
    return %arg0, %c0_i32 : i32, i32
  }
}

</mosaic_0001>

<llo_original>
// kernel: tpu_custom_call.1
$region0: #{tpu_custom_call.1}
  #allocation0 [shape = 'u32[]', space=smem, size = 0x4, offset = 0x4, fixed_abs, tag = 'smem constant byte address 0x4 - core index']
  #allocation1 [shape = 'u32[72,128]{1,0:T(1,128)}', space=vmem, size = 0x9000, scoped, tag = 'internal scratch']
  #allocation2 [shape = 'f32[8,128]{1,0:T(8,128)}', space=vmem, size = 0x1000, scoped, tag = 'scratch operand']
  #allocation3 [shape = 'f32[8,128]{1,0:T(8,128)}', space=vmem, size = 0x1000, scoped, tag = 'scratch operand']
  #allocation4 [shape = 'f32[64,512]{1,0:T(8,128)}', space=vmem, size = 0x20000, scoped, tag = 'scratch operand']
  %s0 = inlined_call_operand.hbm [shape: bf16[1,64,128], index: 0, kind: input, shape index: {}]
  %s1 = inlined_call_operand.hbm [shape: f32[8,128], index: 1, kind: input, shape index: {}]
  %s2 = inlined_call_operand.hbm [shape: f32[8,128], index: 2, kind: input, shape index: {}]
  %s3 = inlined_call_operand.hbm [shape: bf16[128,512], index: 3, kind: input, shape index: {}]
  %s4 = inlined_call_operand.hbm [shape: bf16[128,512], index: 4, kind: input, shape index: {}]
  %s5 = inlined_call_operand.vmem [shape: f32[1,512], index: 5, kind: input, shape index: {}]
  %s6 = inlined_call_operand.hbm [shape: f32[8,8,128], index: 6, kind: output, shape index: {0}]
  %s7 = inlined_call_operand.hbm [shape: f32[8,128], index: 7, kind: output, shape index: {1}]
  %s8 = inlined_call_operand.hbm [shape: f32[8,128], index: 8, kind: output, shape index: {2}]
  %9 = xla_tuple %s6, %s7, %s8
  %s10 = sld [smem:[#allocation0]]
  $region78: #{tpu_custom_call.1} parent=0
    _
  %s12 = ssub.s32 1, %s10
  %s13 = scalar_select 0, %s12, %s10
  $region1: #{tpu_custom_call.1} parent=0
    #allocation5 [shape = 'u8[16384]{0}', space=vmem, size = 0x4000, scoped, tag = 'input window, operand 0, single buffered']
    #allocation6 [shape = 's32[1]{0}', space=sflag, size = 0x4, scoped, tag = 'scoped memory for tpu_custom_call.1']
    #allocation7 [shape = 's32[1]{0}', space=sflag, size = 0x4, scoped, tag = 'scoped memory for tpu_custom_call.1']
    #allocation8 [shape = 'u8[4096]{0}', space=vmem, size = 0x1000, scoped, tag = 'input window, operand 1, single buffered']
    #allocation9 [shape = 's32[1]{0}', space=sflag, size = 0x4, scoped, tag = 'scoped memory for tpu_custom_call.1']
    #allocation10 [shape = 'u8[4096]{0}', space=vmem, size = 0x1000, scoped, tag = 'input window, operand 2, single buffered']
    #allocation11 [shape = 'u8[131072]{0}', space=vmem, size = 0x20000, scoped, tag = 'input window, operand 3, single buffered']
    #allocation12 [shape = 's32[1]{0}', space=sflag, size = 0x4, scoped, tag = 'scoped memory for tpu_custom_call.1']
    #allocation13 [shape = 'u8[131072]{0}', space=vmem, size = 0x20000, scoped, tag = 'input window, operand 4, single buffered']
    #allocation14 [shape = 'u8[32768]{0}', space=vmem, size = 0x8000, scoped, tag = 'output window, operand 0, single buffered']
    #allocation15 [shape = 'u8[4096]{0}', space=vmem, size = 0x1000, scoped, tag = 'output window, operand 1, single buffered']
    #allocation16 [shape = 's32[1]{0}', space=sflag, size = 0x4, scoped, tag = 'scoped memory for tpu_custom_call.1']
    #allocation17 [shape = 'u8[4096]{0}', space=vmem, size = 0x1000, scoped, tag = 'output window, operand 2, single buffered']
    %14 = vsyncpa [#allocation6], 0
    %15 = vsyncpa [#allocation9], 0
    %16 = vsyncpa [#allocation12], 0
    %17 = vsyncpa [#allocation7], 0
    %18 = vsyncpa [#allocation16], 0
    // Predicated region
    $region2: #{tpu_custom_call.1} parent=1 // pred_check
      _
    $region3: #{tpu_custom_call.1} parent=1 // pred_check_branch
      %20 = sbr.rel (0) target = $region5
    $region4: #{tpu_custom_call.1} parent=1 // pred_region
      %22 = vsyncadd [#allocation6], 0
      %s23 = sshll.u32 %s0, 4
      %s24 = int_to_ptr.hbm [resolvable:$true] %s23
      %s25 = sshll.u32 [#allocation5], 4
      %s26 = int_to_ptr.vmem [resolvable:$true] %s25
      %31 = dma.hbm_to_vmem [thread:$0]  %s24, 512, %s26, [#allocation6], 64, 64, 4
    $region5: #{tpu_custom_call.1} parent=1 // pred_fallthru
      _
    // Predicated region
    $region6: #{tpu_custom_call.1} parent=1 // pred_check
      _
    $region7: #{tpu_custom_call.1} parent=1 // pred_check_branch
      %33 = sbr.rel (0) target = $region9
    $region8: #{tpu_custom_call.1} parent=1 // pred_region
      %35 = vsyncadd [#allocation9], 0
      %s37 = sshll.u32 %s1, 4
      %s38 = int_to_ptr.hbm [resolvable:$true] %s37
      %s39 = sshll.u32 [#allocation8], 4
      %s40 = int_to_ptr.vmem [resolvable:$true] %s39
      %42 = dma.hbm_to_vmem [thread:$0]  %s38, 128, %s40, [#allocation9]
    $region9: #{tpu_custom_call.1} parent=1 // pred_fallthru
      _
    // Predicated region
    $region10: #{tpu_custom_call.1} parent=1 // pred_check
      _
    $region11: #{tpu_custom_call.1} parent=1 // pred_check_branch
      %44 = sbr.rel (0) target = $region13
    $region12: #{tpu_custom_call.1} parent=1 // pred_region
      %46 = vsyncadd [#allocation9], 0
      %s48 = sshll.u32 %s2, 4
      %s49 = int_to_ptr.hbm [resolvable:$true] %s48
      %s50 = sshll.u32 [#allocation10], 4
      %s51 = int_to_ptr.vmem [resolvable:$true] %s50
      %53 = dma.hbm_to_vmem [thread:$0]  %s49, 128, %s51, [#allocation9]
    $region13: #{tpu_custom_call.1} parent=1 // pred_fallthru
      _
    // Predicated region
    $region14: #{tpu_custom_call.1} parent=1 // pred_check
      _
    $region15: #{tpu_custom_call.1} parent=1 // pred_check_branch
      %55 = sbr.rel (0) target = $region17
    $region16: #{tpu_custom_call.1} parent=1 // pred_region
      %57 = vsyncadd [#allocation12], 0
      %s58 = sshll.u32 %s3, 4
      %s59 = int_to_ptr.hbm [resolvable:$true] %s58
      %s60 = sshll.u32 [#allocation11], 4
      %s61 = int_to_ptr.vmem [resolvable:$true] %s60
      %66 = dma.hbm_to_vmem [thread:$0]  %s59, 4096, %s61, [#allocation12], 256, 256, 16
    $region17: #{tpu_custom_call.1} parent=1 // pred_fallthru
      _
    // Predicated region
    $region18: #{tpu_custom_call.1} parent=1 // pred_check
      _
    $region19: #{tpu_custom_call.1} parent=1 // pred_check_branch
      %68 = sbr.rel (0) target = $region21
    $region20: #{tpu_custom_call.1} parent=1 // pred_region
      %70 = vsyncadd [#allocation12], 0
      %s71 = sshll.u32 %s4, 4
      %s72 = int_to_ptr.hbm [resolvable:$true] %s71
      %s73 = sshll.u32 [#allocation13], 4
      %s74 = int_to_ptr.vmem [resolvable:$true] %s73
      %79 = dma.hbm_to_vmem [thread:$0]  %s72, 4096, %s74, [#allocation12], 256, 256, 16
    $region21: #{tpu_custom_call.1} parent=1 // pred_fallthru
      _
    // Predicated region
    $region22: #{tpu_custom_call.1} parent=1 // pred_check
      _
    $region23: #{tpu_custom_call.1} parent=1 // pred_check_branch
      %81 = sbr.rel (0) target = $region25
    $region24: #{tpu_custom_call.1} parent=1 // pred_region
      _
    $region25: #{tpu_custom_call.1} parent=1 // pred_fallthru
      _
    // Predicated region
    $region26: #{tpu_custom_call.1} parent=1 // pred_check
      _
    $region27: #{tpu_custom_call.1} parent=1 // pred_check_branch
      %83 = sbr.rel (0) target = $region29
    $region28: #{tpu_custom_call.1} parent=1 // pred_region
      %85 = dma.done [#allocation6], 512
    $region29: #{tpu_custom_call.1} parent=1 // pred_fallthru
      _
    // Predicated region
    $region30: #{tpu_custom_call.1} parent=1 // pred_check
      _
    $region31: #{tpu_custom_call.1} parent=1 // pred_check_branch
      %87 = sbr.rel (0) target = $region33
    $region32: #{tpu_custom_call.1} parent=1 // pred_region
      %89 = dma.done [#allocation9], 128
    $region33: #{tpu_custom_call.1} parent=1 // pred_fallthru
      _
    // Predicated region
    $region34: #{tpu_custom_call.1} parent=1 // pred_check
      _
    $region35: #{tpu_custom_call.1} parent=1 // pred_check_branch
      %91 = sbr.rel (0) target = $region37
    $region36: #{tpu_custom_call.1} parent=1 // pred_region
      %93 = dma.done [#allocation9], 128
    $region37: #{tpu_custom_call.1} parent=1 // pred_fallthru
      _
    // Predicated region
    $region38: #{tpu_custom_call.1} parent=1 // pred_check
      _
    $region39: #{tpu_custom_call.1} parent=1 // pred_check_branch
      %95 = sbr.rel (0) target = $region41
    $region40: #{tpu_custom_call.1} parent=1 // pred_region
      %97 = dma.done [#allocation12], 4096
    $region41: #{tpu_custom_call.1} parent=1 // pred_fallthru
      _
    // Predicated region
    $region42: #{tpu_custom_call.1} parent=1 // pred_check
      _
    $region43: #{tpu_custom_call.1} parent=1 // pred_check_branch
      %99 = sbr.rel (0) target = $region45
    $region44: #{tpu_custom_call.1} parent=1 // pred_region
      %101 = dma.done [#allocation12], 4096
    $region45: #{tpu_custom_call.1} parent=1 // pred_fallthru
      _
    %p102 = scmp.eq.s32.totalorder 0, 0
    // Predicated region
    $region46: #{tpu_custom_call.1} parent=1 // pred_check
      %p103 = pneg %p102
    $region47: #{tpu_custom_call.1} parent=1 // pred_check_branch
      %105 = sbr.rel (%p103) target = $region49
    $region48: #{tpu_custom_call.1} parent=1 // pred_region
      %v106 = vld [vmem:[#allocation8] sm:$0xff]
      %107 = vst [vmem:[#allocation2] sm:$0xff] %v106
      %v108 = vld [vmem:[#allocation10] sm:$0xff]
      %109 = vst [vmem:[#allocation3] sm:$0xff] %v108
    $region49: #{tpu_custom_call.1} parent=1 // pred_fallthru
      _
    %v110 = vld [vmem:[#allocation5] sm:$0xf]
    %v111 = vld [vmem:[#allocation5 + $0x4] sm:$0xf]
    %v112 = vld [vmem:[#allocation5 + $0x8] sm:$0xf]
    %v113 = vld [vmem:[#allocation5 + $0xc] sm:$0xf]
    %v114 = vld [vmem:[#allocation5 + $0x10] sm:$0xf]
    %v115 = vld [vmem:[#allocation5 + $0x14] sm:$0xf]
    %v116 = vld [vmem:[#allocation5 + $0x18] sm:$0xf]
    %v117 = vld [vmem:[#allocation5 + $0x1c] sm:$0xf]
    %v118 = vld [vmem:[#allocation11] sm:$0xff]
    %v119 = vld [vmem:[#allocation11 + $0x8] sm:$0xff]
    %v120 = vld [vmem:[#allocation11 + $0x10] sm:$0xff]
    %v121 = vld [vmem:[#allocation11 + $0x18] sm:$0xff]
    %v122 = vld [vmem:[#allocation11 + $0x20] sm:$0xff]
    %v123 = vld [vmem:[#allocation11 + $0x28] sm:$0xff]
    %v124 = vld [vmem:[#allocation11 + $0x30] sm:$0xff]
    %v125 = vld [vmem:[#allocation11 + $0x38] sm:$0xff]
    %v126 = vld [vmem:[#allocation11 + $0x40] sm:$0xff]
    %v127 = vld [vmem:[#allocation11 + $0x48] sm:$0xff]
    %v128 = vld [vmem:[#allocation11 + $0x50] sm:$0xff]
    %v129 = vld [vmem:[#allocation11 + $0x58] sm:$0xff]
    %v130 = vld [vmem:[#allocation11 + $0x60] sm:$0xff]
    %v131 = vld [vmem:[#allocation11 + $0x68] sm:$0xff]
    %v132 = vld [vmem:[#allocation11 + $0x70] sm:$0xff]
    %v133 = vld [vmem:[#allocation11 + $0x78] sm:$0xff]
    %v134 = vld [vmem:[#allocation11 + $0x80] sm:$0xff]
    %v135 = vld [vmem:[#allocation11 + $0x88] sm:$0xff]
    %v136 = vld [vmem:[#allocation11 + $0x90] sm:$0xff]
    %v137 = vld [vmem:[#allocation11 + $0x98] sm:$0xff]
    %v138 = vld [vmem:[#allocation11 + $0xa0] sm:$0xff]
    %v139 = vld [vmem:[#allocation11 + $0xa8] sm:$0xff]
    %v140 = vld [vmem:[#allocation11 + $0xb0] sm:$0xff]
    %v141 = vld [vmem:[#allocation11 + $0xb8] sm:$0xff]
    %v142 = vld [vmem:[#allocation11 + $0xc0] sm:$0xff]
    %v143 = vld [vmem:[#allocation11 + $0xc8] sm:$0xff]
    %v144 = vld [vmem:[#allocation11 + $0xd0] sm:$0xff]
    %v145 = vld [vmem:[#allocation11 + $0xd8] sm:$0xff]
    %v146 = vld [vmem:[#allocation11 + $0xe0] sm:$0xff]
    %v147 = vld [vmem:[#allocation11 + $0xe8] sm:$0xff]
    %v148 = vld [vmem:[#allocation11 + $0xf0] sm:$0xff]
    %v149 = vld [vmem:[#allocation11 + $0xf8] sm:$0xff]
    %v150 = vld [vmem:[%s5] sm:$0xf]
    %v152 = vperm.slane %v150, 0
    %v153 = vperm.slane %v150, 1
    %v154 = vperm.slane %v150, 2
    %v155 = vperm.slane %v150, 3
    %v168 = vunpack.c.l.b16 %v110
    %v169 = vunpack.c.l.b16 %v111
    %v170 = vunpack.c.l.b16 %v112
    %v171 = vunpack.c.l.b16 %v113
    %v172 = vunpack.c.l.b16 %v114
    %v173 = vunpack.c.l.b16 %v115
    %v174 = vunpack.c.l.b16 %v116
    %v175 = vunpack.c.l.b16 %v117
    %v176 = vpack.c.b16 %v169, %v168
    %v177 = vpack.c.b16 %v171, %v170
    %v178 = vpack.c.b16 %v173, %v172
    %v179 = vpack.c.b16 %v175, %v174
    %v216 = vunpack.c.l.b16 %v118
    %v217 = vunpack.c.h.b16 %v118
    %v218 = vunpack.c.l.b16 %v119
    %v219 = vunpack.c.h.b16 %v119
    %v220 = vunpack.c.l.b16 %v120
    %v221 = vunpack.c.h.b16 %v120
    %v222 = vunpack.c.l.b16 %v121
    %v223 = vunpack.c.h.b16 %v121
    %v224 = vunpack.c.l.b16 %v122
    %v225 = vunpack.c.h.b16 %v122
    %v226 = vunpack.c.l.b16 %v123
    %v227 = vunpack.c.h.b16 %v123
    %v228 = vunpack.c.l.b16 %v124
    %v229 = vunpack.c.h.b16 %v124
    %v230 = vunpack.c.l.b16 %v125
    %v231 = vunpack.c.h.b16 %v125
    %v232 = vunpack.c.l.b16 %v126
    %v233 = vunpack.c.h.b16 %v126
    %v234 = vunpack.c.l.b16 %v127
    %v235 = vunpack.c.h.b16 %v127
    %v236 = vunpack.c.l.b16 %v128
    %v237 = vunpack.c.h.b16 %v128
    %v238 = vunpack.c.l.b16 %v129
    %v239 = vunpack.c.h.b16 %v129
    %v240 = vunpack.c.l.b16 %v130
    %v241 = vunpack.c.h.b16 %v130
    %v242 = vunpack.c.l.b16 %v131
    %v243 = vunpack.c.h.b16 %v131
    %v244 = vunpack.c.l.b16 %v132
    %v245 = vunpack.c.h.b16 %v132
    %v246 = vunpack.c.l.b16 %v133
    %v247 = vunpack.c.h.b16 %v133
    %v248 = vunpack.c.l.b16 %v134
    %v249 = vunpack.c.h.b16 %v134
    %v250 = vunpack.c.l.b16 %v135
    %v251 = vunpack.c.h.b16 %v135
    %v252 = vunpack.c.l.b16 %v136
    %v253 = vunpack.c.h.b16 %v136
    %v254 = vunpack.c.l.b16 %v137
    %v255 = vunpack.c.h.b16 %v137
    %v256 = vunpack.c.l.b16 %v138
    %v257 = vunpack.c.h.b16 %v138
    %v258 = vunpack.c.l.b16 %v139
    %v259 = vunpack.c.h.b16 %v139
    %v260 = vunpack.c.l.b16 %v140
    %v261 = vunpack.c.h.b16 %v140
    %v262 = vunpack.c.l.b16 %v141
    %v263 = vunpack.c.h.b16 %v141
    %v264 = vunpack.c.l.b16 %v142
    %v265 = vunpack.c.h.b16 %v142
    %v266 = vunpack.c.l.b16 %v143
    %v267 = vunpack.c.h.b16 %v143
    %v268 = vunpack.c.l.b16 %v144
    %v269 = vunpack.c.h.b16 %v144
    %v270 = vunpack.c.l.b16 %v145
    %v271 = vunpack.c.h.b16 %v145
    %v272 = vunpack.c.l.b16 %v146
    %v273 = vunpack.c.h.b16 %v146
    %v274 = vunpack.c.l.b16 %v147
    %v275 = vunpack.c.h.b16 %v147
    %v276 = vunpack.c.l.b16 %v148
    %v277 = vunpack.c.h.b16 %v148
    %v278 = vunpack.c.l.b16 %v149
    %v279 = vunpack.c.h.b16 %v149
    %v280 = vpack.c.b16 %v220, %v216
    %v281 = vpack.c.b16 %v221, %v217
    %v282 = vpack.c.b16 %v222, %v218
    %v283 = vpack.c.b16 %v223, %v219
    %v284 = vpack.c.b16 %v228, %v224
    %v285 = vpack.c.b16 %v229, %v225
    %v286 = vpack.c.b16 %v230, %v226
    %v287 = vpack.c.b16 %v231, %v227
    %v288 = vpack.c.b16 %v236, %v232
    %v289 = vpack.c.b16 %v237, %v233
    %v290 = vpack.c.b16 %v238, %v234
    %v291 = vpack.c.b16 %v239, %v235
    %v292 = vpack.c.b16 %v244, %v240
    %v293 = vpack.c.b16 %v245, %v241
    %v294 = vpack.c.b16 %v246, %v242
    %v295 = vpack.c.b16 %v247, %v243
    %v296 = vpack.c.b16 %v252, %v248
    %v297 = vpack.c.b16 %v253, %v249
    %v298 = vpack.c.b16 %v254, %v250
    %v299 = vpack.c.b16 %v255, %v251
    %v300 = vpack.c.b16 %v260, %v256
    %v301 = vpack.c.b16 %v261, %v257
    %v302 = vpack.c.b16 %v262, %v258
    %v303 = vpack.c.b16 %v263, %v259
    %v304 = vpack.c.b16 %v268, %v264
    %v305 = vpack.c.b16 %v269, %v265
    %v306 = vpack.c.b16 %v270, %v266
    %v307 = vpack.c.b16 %v271, %v267
    %v308 = vpack.c.b16 %v276, %v272
    %v309 = vpack.c.b16 %v277, %v273
    %v310 = vpack.c.b16 %v278, %v274
    %v311 = vpack.c.b16 %v279, %v275
    %344 = vmatpush.bf16.msra.mxu0 %v308
    %345 = vmatpush.bf16.msra.mxu0 %v304
    %346 = vmatpush.bf16.msra.mxu0 %v300
    %347 = vmatpush.bf16.msra.mxu0 %v296
    %348 = vmatpush.bf16.msra.mxu0 %v292
    %349 = vmatpush.bf16.msra.mxu0 %v288
    %350 = vmatpush.bf16.msra.mxu0 %v284
    %351 = vmatpush.bf16.msra.mxu0 %v280
    %352 = vmatmul.bf16.gmra.mxu0 %v176
    %v353 = vpop.f32.mrf.mxu0
    %v354 = vadd.f32 %v152, %v353
    %v355 = vpop.f32.mrf.mxu0
    %v356 = vadd.f32 %v152, %v355
    %357 = vmatmul.bf16.gmra.mxu0 %v177
    %v358 = vpop.f32.mrf.mxu0
    %v359 = vadd.f32 %v152, %v358
    %v360 = vpop.f32.mrf.mxu0
    %v361 = vadd.f32 %v152, %v360
    %362 = vmatmul.bf16.gmra.mxu0 %v178
    %v363 = vpop.f32.mrf.mxu0
    %v364 = vadd.f32 %v152, %v363
    %v365 = vpop.f32.mrf.mxu0
    %v366 = vadd.f32 %v152, %v365
    %367 = vmatmul.bf16.gmra.mxu0 %v179
    %v368 = vpop.f32.mrf.mxu0
    %v369 = vadd.f32 %v152, %v368
    %v370 = vpop.f32.mrf.mxu0
    %v371 = vadd.f32 %v152, %v370
    %372 = vdwg.mxu0
    %373 = vmatpush.bf16.msra.mxu0 %v309
    %374 = vmatpush.bf16.msra.mxu0 %v305
    %375 = vmatpush.bf16.msra.mxu0 %v301
    %376 = vmatpush.bf16.msra.mxu0 %v297
    %377 = vmatpush.bf16.msra.mxu0 %v293
    %378 = vmatpush.bf16.msra.mxu0 %v289
    %379 = vmatpush.bf16.msra.mxu0 %v285
    %380 = vmatpush.bf16.msra.mxu0 %v281
    %381 = vmatmul.bf16.gmra.mxu0 %v176
    %v382 = vpop.f32.mrf.mxu0
    %v383 = vadd.f32 %v153, %v382
    %v384 = vpop.f32.mrf.mxu0
    %v385 = vadd.f32 %v153, %v384
    %386 = vmatmul.bf16.gmra.mxu0 %v177
    %v387 = vpop.f32.mrf.mxu0
    %v388 = vadd.f32 %v153, %v387
    %v389 = vpop.f32.mrf.mxu0
    %v390 = vadd.f32 %v153, %v389
    %391 = vmatmul.bf16.gmra.mxu0 %v178
    %v392 = vpop.f32.mrf.mxu0
    %v393 = vadd.f32 %v153, %v392
    %v394 = vpop.f32.mrf.mxu0
    %v395 = vadd.f32 %v153, %v394
    %396 = vmatmul.bf16.gmra.mxu0 %v179
    %v397 = vpop.f32.mrf.mxu0
    %v398 = vadd.f32 %v153, %v397
    %v399 = vpop.f32.mrf.mxu0
    %v400 = vadd.f32 %v153, %v399
    %401 = vdwg.mxu0
    %402 = vmatpush.bf16.msra.mxu0 %v310
    %403 = vmatpush.bf16.msra.mxu0 %v306
    %404 = vmatpush.bf16.msra.mxu0 %v302
    %405 = vmatpush.bf16.msra.mxu0 %v298
    %406 = vmatpush.bf16.msra.mxu0 %v294
    %407 = vmatpush.bf16.msra.mxu0 %v290
    %408 = vmatpush.bf16.msra.mxu0 %v286
    %409 = vmatpush.bf16.msra.mxu0 %v282
    %410 = vmatmul.bf16.gmra.mxu0 %v176
    %v411 = vpop.f32.mrf.mxu0
    %v412 = vadd.f32 %v154, %v411
    %v413 = vpop.f32.mrf.mxu0
    %v414 = vadd.f32 %v154, %v413
    %415 = vmatmul.bf16.gmra.mxu0 %v177
    %v416 = vpop.f32.mrf.mxu0
    %v417 = vadd.f32 %v154, %v416
    %v418 = vpop.f32.mrf.mxu0
    %v419 = vadd.f32 %v154, %v418
    %420 = vmatmul.bf16.gmra.mxu0 %v178
    %v421 = vpop.f32.mrf.mxu0
    %v422 = vadd.f32 %v154, %v421
    %v423 = vpop.f32.mrf.mxu0
    %v424 = vadd.f32 %v154, %v423
    %425 = vmatmul.bf16.gmra.mxu0 %v179
    %v426 = vpop.f32.mrf.mxu0
    %v427 = vadd.f32 %v154, %v426
    %v428 = vpop.f32.mrf.mxu0
    %v429 = vadd.f32 %v154, %v428
    %430 = vdwg.mxu0
    %431 = vmatpush.bf16.msra.mxu0 %v311
    %432 = vmatpush.bf16.msra.mxu0 %v307
    %433 = vmatpush.bf16.msra.mxu0 %v303
    %434 = vmatpush.bf16.msra.mxu0 %v299
    %435 = vmatpush.bf16.msra.mxu0 %v295
    %436 = vmatpush.bf16.msra.mxu0 %v291
    %437 = vmatpush.bf16.msra.mxu0 %v287
    %438 = vmatpush.bf16.msra.mxu0 %v283
    %439 = vmatmul.bf16.gmra.mxu0 %v176
    %v440 = vpop.f32.mrf.mxu0
    %v441 = vadd.f32 %v155, %v440
    %v442 = vpop.f32.mrf.mxu0
    %v443 = vadd.f32 %v155, %v442
    %444 = vmatmul.bf16.gmra.mxu0 %v177
    %v445 = vpop.f32.mrf.mxu0
    %v446 = vadd.f32 %v155, %v445
    %v447 = vpop.f32.mrf.mxu0
    %v448 = vadd.f32 %v155, %v447
    %449 = vmatmul.bf16.gmra.mxu0 %v178
    %v450 = vpop.f32.mrf.mxu0
    %v451 = vadd.f32 %v155, %v450
    %v452 = vpop.f32.mrf.mxu0
    %v453 = vadd.f32 %v155, %v452
    %454 = vmatmul.bf16.gmra.mxu0 %v179
    %v455 = vpop.f32.mrf.mxu0
    %v456 = vadd.f32 %v155, %v455
    %v457 = vpop.f32.mrf.mxu0
    %v458 = vadd.f32 %v155, %v457
    %459 = vdwg.mxu0
    %460 = vst [vmem:[#allocation4] sm:$0xff] %v354
    %461 = vst [vmem:[#allocation4 + $0x8] sm:$0xff] %v383
    %462 = vst [vmem:[#allocation4 + $0x10] sm:$0xff] %v412
    %463 = vst [vmem:[#allocation4 + $0x18] sm:$0xff] %v441
    %464 = vst [vmem:[#allocation4 + $0x20] sm:$0xff] %v356
    %465 = vst [vmem:[#allocation4 + $0x28] sm:$0xff] %v385
    %466 = vst [vmem:[#allocation4 + $0x30] sm:$0xff] %v414
    %467 = vst [vmem:[#allocation4 + $0x38] sm:$0xff] %v443
    %468 = vst [vmem:[#allocation4 + $0x40] sm:$0xff] %v359
    %469 = vst [vmem:[#allocation4 + $0x48] sm:$0xff] %v388
    %470 = vst [vmem:[#allocation4 + $0x50] sm:$0xff] %v417
    %471 = vst [vmem:[#allocation4 + $0x58] sm:$0xff] %v446
    %472 = vst [vmem:[#allocation4 + $0x60] sm:$0xff] %v361
    %473 = vst [vmem:[#allocation4 + $0x68] sm:$0xff] %v390
    %474 = vst [vmem:[#allocation4 + $0x70] sm:$0xff] %v419
    %475 = vst [vmem:[#allocation4 + $0x78] sm:$0xff] %v448
    %476 = vst [vmem:[#allocation4 + $0x80] sm:$0xff] %v364
    %477 = vst [vmem:[#allocation4 + $0x88] sm:$0xff] %v393
    %478 = vst [vmem:[#allocation4 + $0x90] sm:$0xff] %v422
    %479 = vst [vmem:[#allocation4 + $0x98] sm:$0xff] %v451
    %480 = vst [vmem:[#allocation4 + $0xa0] sm:$0xff] %v366
    %481 = vst [vmem:[#allocation4 + $0xa8] sm:$0xff] %v395
    %482 = vst [vmem:[#allocation4 + $0xb0] sm:$0xff] %v424
    %483 = vst [vmem:[#allocation4 + $0xb8] sm:$0xff] %v453
    %484 = vst [vmem:[#allocation4 + $0xc0] sm:$0xff] %v369
    %485 = vst [vmem:[#allocation4 + $0xc8] sm:$0xff] %v398
    %486 = vst [vmem:[#allocation4 + $0xd0] sm:$0xff] %v427
    %487 = vst [vmem:[#allocation4 + $0xd8] sm:$0xff] %v456
    %488 = vst [vmem:[#allocation4 + $0xe0] sm:$0xff] %v371
    %489 = vst [vmem:[#allocation4 + $0xe8] sm:$0xff] %v400
    %490 = vst [vmem:[#allocation4 + $0xf0] sm:$0xff] %v429
    %491 = vst [vmem:[#allocation4 + $0xf8] sm:$0xff] %v458
    %v492 = vld [vmem:[#allocation13] sm:$0xff]
    %v493 = vld [vmem:[#allocation13 + $0x8] sm:$0xff]
    %v494 = vld [vmem:[#allocation13 + $0x10] sm:$0xff]
    %v495 = vld [vmem:[#allocation13 + $0x18] sm:$0xff]
    %v496 = vld [vmem:[#allocation13 + $0x20] sm:$0xff]
    %v497 = vld [vmem:[#allocation13 + $0x28] sm:$0xff]
    %v498 = vld [vmem:[#allocation13 + $0x30] sm:$0xff]
    %v499 = vld [vmem:[#allocation13 + $0x38] sm:$0xff]
    %v500 = vld [vmem:[#allocation13 + $0x40] sm:$0xff]
    %v501 = vld [vmem:[#allocation13 + $0x48] sm:$0xff]
    %v502 = vld [vmem:[#allocation13 + $0x50] sm:$0xff]
    %v503 = vld [vmem:[#allocation13 + $0x58] sm:$0xff]
    %v504 = vld [vmem:[#allocation13 + $0x60] sm:$0xff]
    %v505 = vld [vmem:[#allocation13 + $0x68] sm:$0xff]
    %v506 = vld [vmem:[#allocation13 + $0x70] sm:$0xff]
    %v507 = vld [vmem:[#allocation13 + $0x78] sm:$0xff]
    %v508 = vld [vmem:[#allocation13 + $0x80] sm:$0xff]
    %v509 = vld [vmem:[#allocation13 + $0x88] sm:$0xff]
    %v510 = vld [vmem:[#allocation13 + $0x90] sm:$0xff]
    %v511 = vld [vmem:[#allocation13 + $0x98] sm:$0xff]
    %v512 = vld [vmem:[#allocation13 + $0xa0] sm:$0xff]
    %v513 = vld [vmem:[#allocation13 + $0xa8] sm:$0xff]
    %v514 = vld [vmem:[#allocation13 + $0xb0] sm:$0xff]
    %v515 = vld [vmem:[#allocation13 + $0xb8] sm:$0xff]
    %v516 = vld [vmem:[#allocation13 + $0xc0] sm:$0xff]
    %v517 = vld [vmem:[#allocation13 + $0xc8] sm:$0xff]
    %v518 = vld [vmem:[#allocation13 + $0xd0] sm:$0xff]
    %v519 = vld [vmem:[#allocation13 + $0xd8] sm:$0xff]
    %v520 = vld [vmem:[#allocation13 + $0xe0] sm:$0xff]
    %v521 = vld [vmem:[#allocation13 + $0xe8] sm:$0xff]
    %v522 = vld [vmem:[#allocation13 + $0xf0] sm:$0xff]
    %v523 = vld [vmem:[#allocation13 + $0xf8] sm:$0xff]
    %v524 = vld [vmem:[#allocation2] sm:$0xff]
    %v525 = vld [vmem:[#allocation3] sm:$0xff]
    %v526 = vld [vmem:[#allocation4] sm:$0xff]
    %v527 = vld [vmem:[#allocation4 + $0x8] sm:$0xff]
    %v528 = vld [vmem:[#allocation4 + $0x10] sm:$0xff]
    %v529 = vld [vmem:[#allocation4 + $0x18] sm:$0xff]
    %v530 = vpack.c.bf16 %v524, %v524
    %v563 = vunpack.c.l.b16 %v492
    %v564 = vunpack.c.h.b16 %v492
    %v565 = vunpack.c.l.b16 %v493
    %v566 = vunpack.c.h.b16 %v493
    %v567 = vunpack.c.l.b16 %v494
    %v568 = vunpack.c.h.b16 %v494
    %v569 = vunpack.c.l.b16 %v495
    %v570 = vunpack.c.h.b16 %v495
    %v571 = vunpack.c.l.b16 %v496
    %v572 = vunpack.c.h.b16 %v496
    %v573 = vunpack.c.l.b16 %v497
    %v574 = vunpack.c.h.b16 %v497
    %v575 = vunpack.c.l.b16 %v498
    %v576 = vunpack.c.h.b16 %v498
    %v577 = vunpack.c.l.b16 %v499
    %v578 = vunpack.c.h.b16 %v499
    %v579 = vunpack.c.l.b16 %v500
    %v580 = vunpack.c.h.b16 %v500
    %v581 = vunpack.c.l.b16 %v501
    %v582 = vunpack.c.h.b16 %v501
    %v583 = vunpack.c.l.b16 %v502
    %v584 = vunpack.c.h.b16 %v502
    %v585 = vunpack.c.l.b16 %v503
    %v586 = vunpack.c.h.b16 %v503
    %v587 = vunpack.c.l.b16 %v504
    %v588 = vunpack.c.h.b16 %v504
    %v589 = vunpack.c.l.b16 %v505
    %v590 = vunpack.c.h.b16 %v505
    %v591 = vunpack.c.l.b16 %v506
    %v592 = vunpack.c.h.b16 %v506
    %v593 = vunpack.c.l.b16 %v507
    %v594 = vunpack.c.h.b16 %v507
    %v595 = vunpack.c.l.b16 %v508
    %v596 = vunpack.c.h.b16 %v508
    %v597 = vunpack.c.l.b16 %v509
    %v598 = vunpack.c.h.b16 %v509
    %v599 = vunpack.c.l.b16 %v510
    %v600 = vunpack.c.h.b16 %v510
    %v601 = vunpack.c.l.b16 %v511
    %v602 = vunpack.c.h.b16 %v511
    %v603 = vunpack.c.l.b16 %v512
    %v604 = vunpack.c.h.b16 %v512
    %v605 = vunpack.c.l.b16 %v513
    %v606 = vunpack.c.h.b16 %v513
    %v607 = vunpack.c.l.b16 %v514
    %v608 = vunpack.c.h.b16 %v514
    %v609 = vunpack.c.l.b16 %v515
    %v610 = vunpack.c.h.b16 %v515
    %v611 = vunpack.c.l.b16 %v516
    %v612 = vunpack.c.h.b16 %v516
    %v613 = vunpack.c.l.b16 %v517
    %v614 = vunpack.c.h.b16 %v517
    %v615 = vunpack.c.l.b16 %v518
    %v616 = vunpack.c.h.b16 %v518
    %v617 = vunpack.c.l.b16 %v519
    %v618 = vunpack.c.h.b16 %v519
    %v619 = vunpack.c.l.b16 %v520
    %v620 = vunpack.c.h.b16 %v520
    %v621 = vunpack.c.l.b16 %v521
    %v622 = vunpack.c.h.b16 %v521
    %v623 = vunpack.c.l.b16 %v522
    %v624 = vunpack.c.h.b16 %v522
    %v625 = vunpack.c.l.b16 %v523
    %v626 = vunpack.c.h.b16 %v523
    %v627 = vpack.c.b16 %v567, %v563
    %v628 = vpack.c.b16 %v568, %v564
    %v629 = vpack.c.b16 %v569, %v565
    %v630 = vpack.c.b16 %v570, %v566
    %v631 = vpack.c.b16 %v575, %v571
    %v632 = vpack.c.b16 %v576, %v572
    %v633 = vpack.c.b16 %v577, %v573
    %v634 = vpack.c.b16 %v578, %v574
    %v635 = vpack.c.b16 %v583, %v579
    %v636 = vpack.c.b16 %v584, %v580
    %v637 = vpack.c.b16 %v585, %v581
    %v638 = vpack.c.b16 %v586, %v582
    %v639 = vpack.c.b16 %v591, %v587
    %v640 = vpack.c.b16 %v592, %v588
    %v641 = vpack.c.b16 %v593, %v589
    %v642 = vpack.c.b16 %v594, %v590
    %v643 = vpack.c.b16 %v599, %v595
    %v644 = vpack.c.b16 %v600, %v596
    %v645 = vpack.c.b16 %v601, %v597
    %v646 = vpack.c.b16 %v602, %v598
    %v647 = vpack.c.b16 %v607, %v603
    %v648 = vpack.c.b16 %v608, %v604
    %v649 = vpack.c.b16 %v609, %v605
    %v650 = vpack.c.b16 %v610, %v606
    %v651 = vpack.c.b16 %v615, %v611
    %v652 = vpack.c.b16 %v616, %v612
    %v653 = vpack.c.b16 %v617, %v613
    %v654 = vpack.c.b16 %v618, %v614
    %v655 = vpack.c.b16 %v623, %v619
    %v656 = vpack.c.b16 %v624, %v620
    %v657 = vpack.c.b16 %v625, %v621
    %v658 = vpack.c.b16 %v626, %v622
    %691 = vmatpush.bf16.msra.mxu0 %v655
    %692 = vmatpush.bf16.msra.mxu0 %v651
    %693 = vmatpush.bf16.msra.mxu0 %v647
    %694 = vmatpush.bf16.msra.mxu0 %v643
    %695 = vmatpush.bf16.msra.mxu0 %v639
    %696 = vmatpush.bf16.msra.mxu0 %v635
    %697 = vmatpush.bf16.msra.mxu0 %v631
    %698 = vmatpush.bf16.msra.mxu0 %v627
    %699 = vmatmul.bf16.gmra.mxu0 %v530
    %v700 = vpop.f32.mrf.mxu0
    %v701 = vadd.f32 0.0, %v700
    %v702 = vpop.f32.mrf.mxu0
    %703 = vdwg.mxu0
    %704 = vmatpush.bf16.msra.mxu0 %v656
    %705 = vmatpush.bf16.msra.mxu0 %v652
    %706 = vmatpush.bf16.msra.mxu0 %v648
    %707 = vmatpush.bf16.msra.mxu0 %v644
    %708 = vmatpush.bf16.msra.mxu0 %v640
    %709 = vmatpush.bf16.msra.mxu0 %v636
    %710 = vmatpush.bf16.msra.mxu0 %v632
    %711 = vmatpush.bf16.msra.mxu0 %v628
    %712 = vmatmul.bf16.gmra.mxu0 %v530
    %v713 = vpop.f32.mrf.mxu0
    %v714 = vadd.f32 0.0, %v713
    %v715 = vpop.f32.mrf.mxu0
    %716 = vdwg.mxu0
    %717 = vmatpush.bf16.msra.mxu0 %v657
    %718 = vmatpush.bf16.msra.mxu0 %v653
    %719 = vmatpush.bf16.msra.mxu0 %v649
    %720 = vmatpush.bf16.msra.mxu0 %v645
    %721 = vmatpush.bf16.msra.mxu0 %v641
    %722 = vmatpush.bf16.msra.mxu0 %v637
    %723 = vmatpush.bf16.msra.mxu0 %v633
    %724 = vmatpush.bf16.msra.mxu0 %v629
    %725 = vmatmul.bf16.gmra.mxu0 %v530
    %v726 = vpop.f32.mrf.mxu0
    %v727 = vadd.f32 0.0, %v726
    %v728 = vpop.f32.mrf.mxu0
    %729 = vdwg.mxu0
    %730 = vmatpush.bf16.msra.mxu0 %v658
    %731 = vmatpush.bf16.msra.mxu0 %v654
    %732 = vmatpush.bf16.msra.mxu0 %v650
    %733 = vmatpush.bf16.msra.mxu0 %v646
    %734 = vmatpush.bf16.msra.mxu0 %v642
    %735 = vmatpush.bf16.msra.mxu0 %v638
    %736 = vmatpush.bf16.msra.mxu0 %v634
    %737 = vmatpush.bf16.msra.mxu0 %v630
    %738 = vmatmul.bf16.gmra.mxu0 %v530
    %v739 = vpop.f32.mrf.mxu0
    %v740 = vadd.f32 0.0, %v739
    %v741 = vpop.f32.mrf.mxu0
    %742 = vdwg.mxu0
    %v743 = vadd.f32 %v526, %v701
    %v744 = vadd.f32 %v527, %v714
    %v745 = vadd.f32 %v528, %v727
    %v746 = vadd.f32 %v529, %v740
    %v747 = vmul.f32 %v743, 0.5
    %v748 = vtanh.pop %v747
    %v749 = vmul.f32 %v748, 0.5
    %v750 = vadd.f32 %v749, 0.5
    %v751 = vmul.f32 %v744, 0.5
    %v752 = vtanh.pop %v751
    %v753 = vmul.f32 %v752, 0.5
    %v754 = vadd.f32 %v753, 0.5
    %v755 = vtanh.pop %v745
    %v756 = vmul.f32 %v746, 0.5
    %v757 = vtanh.pop %v756
    %v758 = vmul.f32 %v757, 0.5
    %v759 = vadd.f32 %v758, 0.5
    %v760 = vmul.f32 %v754, %v525
    %v761 = vmul.f32 %v750, %v755
    %v762 = vadd.f32 %v760, %v761
    %v763 = vtanh.pop %v762
    %v764 = vmul.f32 %v759, %v763
    %765 = vst [vmem:[#allocation2] sm:$0xff] %v764
    %766 = vst [vmem:[#allocation3] sm:$0xff] %v762
    %v768 = vrot.slane %v764, 1
    %v769 = vrot.slane %v764, 2
    %v770 = vrot.slane %v764, 3
    %v771 = vrot.slane %v764, 4
    %v772 = vrot.slane %v764, 5
    %v773 = vrot.slane %v764, 6
    %v774 = vrot.slane %v764, 7
    %782 = vst [vmem:[#allocation14] sm:$0x1] %v764
    %783 = vst [vmem:[#allocation14 + $0x8] sm:$0x1] %v768
    %784 = vst [vmem:[#allocation14 + $0x10] sm:$0x1] %v769
    %785 = vst [vmem:[#allocation14 + $0x18] sm:$0x1] %v770
    %786 = vst [vmem:[#allocation14 + $0x20] sm:$0x1] %v771
    %787 = vst [vmem:[#allocation14 + $0x28] sm:$0x1] %v772
    %788 = vst [vmem:[#allocation14 + $0x30] sm:$0x1] %v773
    %789 = vst [vmem:[#allocation14 + $0x38] sm:$0x1] %v774
    %v790 = vld [vmem:[#allocation2] sm:$0xff]
    %v791 = vld [vmem:[#allocation3] sm:$0xff]
    %v792 = vld [vmem:[#allocation4 + $0x20] sm:$0xff]
    %v793 = vld [vmem:[#allocation4 + $0x28] sm:$0xff]
    %v794 = vld [vmem:[#allocation4 + $0x30] sm:$0xff]
    %v795 = vld [vmem:[#allocation4 + $0x38] sm:$0xff]
    %v796 = vpack.c.bf16 %v790, %v790
    %797 = vmatpush.bf16.msra.mxu0 %v655
    %798 = vmatpush.bf16.msra.mxu0 %v651
    %799 = vmatpush.bf16.msra.mxu0 %v647
    %800 = vmatpush.bf16.msra.mxu0 %v643
    %801 = vmatpush.bf16.msra.mxu0 %v639
    %802 = vmatpush.bf16.msra.mxu0 %v635
    %803 = vmatpush.bf16.msra.mxu0 %v631
    %804 = vmatpush.bf16.msra.mxu0 %v627
    %805 = vmatmul.bf16.gmra.mxu0 %v796
    %v806 = vpop.f32.mrf.mxu0
    %v807 = vadd.f32 0.0, %v806
    %v808 = vpop.f32.mrf.mxu0
    %809 = vdwg.mxu0
    %810 = vmatpush.bf16.msra.mxu0 %v656
    %811 = vmatpush.bf16.msra.mxu0 %v652
    %812 = vmatpush.bf16.msra.mxu0 %v648
    %813 = vmatpush.bf16.msra.mxu0 %v644
    %814 = vmatpush.bf16.msra.mxu0 %v640
    %815 = vmatpush.bf16.msra.mxu0 %v636
    %816 = vmatpush.bf16.msra.mxu0 %v632
    %817 = vmatpush.bf16.msra.mxu0 %v628
    %818 = vmatmul.bf16.gmra.mxu0 %v796
    %v819 = vpop.f32.mrf.mxu0
    %v820 = vadd.f32 0.0, %v819
    %v821 = vpop.f32.mrf.mxu0
    %822 = vdwg.mxu0
    %823 = vmatpush.bf16.msra.mxu0 %v657
    %824 = vmatpush.bf16.msra.mxu0 %v653
    %825 = vmatpush.bf16.msra.mxu0 %v649
    %826 = vmatpush.bf16.msra.mxu0 %v645
    %827 = vmatpush.bf16.msra.mxu0 %v641
    %828 = vmatpush.bf16.msra.mxu0 %v637
    %829 = vmatpush.bf16.msra.mxu0 %v633
    %830 = vmatpush.bf16.msra.mxu0 %v629
    %831 = vmatmul.bf16.gmra.mxu0 %v796
    %v832 = vpop.f32.mrf.mxu0
    %v833 = vadd.f32 0.0, %v832
    %v834 = vpop.f32.mrf.mxu0
    %835 = vdwg.mxu0
    %836 = vmatpush.bf16.msra.mxu0 %v658
    %837 = vmatpush.bf16.msra.mxu0 %v654
    %838 = vmatpush.bf16.msra.mxu0 %v650
    %839 = vmatpush.bf16.msra.mxu0 %v646
    %840 = vmatpush.bf16.msra.mxu0 %v642
    %841 = vmatpush.bf16.msra.mxu0 %v638
    %842 = vmatpush.bf16.msra.mxu0 %v634
    %843 = vmatpush.bf16.msra.mxu0 %v630
    %844 = vmatmul.bf16.gmra.mxu0 %v796
    %v845 = vpop.f32.mrf.mxu0
    %v846 = vadd.f32 0.0, %v845
    %v847 = vpop.f32.mrf.mxu0
    %848 = vdwg.mxu0
    %v849 = vadd.f32 %v792, %v807
    %v850 = vadd.f32 %v793, %v820
    %v851 = vadd.f32 %v794, %v833
    %v852 = vadd.f32 %v795, %v846
    %v853 = vmul.f32 %v849, 0.5
    %v854 = vtanh.pop %v853
    %v855 = vmul.f32 %v854, 0.5
    %v856 = vadd.f32 %v855, 0.5
    %v857 = vmul.f32 %v850, 0.5
    %v858 = vtanh.pop %v857
    %v859 = vmul.f32 %v858, 0.5
    %v860 = vadd.f32 %v859, 0.5
    %v861 = vtanh.pop %v851
    %v862 = vmul.f32 %v852, 0.5
    %v863 = vtanh.pop %v862
    %v864 = vmul.f32 %v863, 0.5
    %v865 = vadd.f32 %v864, 0.5
    %v866 = vmul.f32 %v860, %v791
    %v867 = vmul.f32 %v856, %v861
    %v868 = vadd.f32 %v866, %v867
    %v869 = vtanh.pop %v868
    %v870 = vmul.f32 %v865, %v869
    %871 = vst [vmem:[#allocation2] sm:$0xff] %v870
    %872 = vst [vmem:[#allocation3] sm:$0xff] %v868
    %v874 = vrot.slane %v870, 1
    %v875 = vrot.slane %v870, 2
    %v876 = vrot.slane %v870, 3
    %v877 = vrot.slane %v870, 4
    %v878 = vrot.slane %v870, 5
    %v879 = vrot.slane %v870, 6
    %v880 = vrot.slane %v870, 7
    %888 = vst [vmem:[#allocation14 + $0x1] sm:$0x1] %v870
    %889 = vst [vmem:[#allocation14 + $0x9] sm:$0x1] %v874
    %890 = vst [vmem:[#allocation14 + $0x11] sm:$0x1] %v875
    %891 = vst [vmem:[#allocation14 + $0x19] sm:$0x1] %v876
    %892 = vst [vmem:[#allocation14 + $0x21] sm:$0x1] %v877
    %893 = vst [vmem:[#allocation14 + $0x29] sm:$0x1] %v878
    %894 = vst [vmem:[#allocation14 + $0x31] sm:$0x1] %v879
    %895 = vst [vmem:[#allocation14 + $0x39] sm:$0x1] %v880
    %v896 = vld [vmem:[#allocation2] sm:$0xff]
    %v897 = vld [vmem:[#allocation3] sm:$0xff]
    %v898 = vld [vmem:[#allocation4 + $0x40] sm:$0xff]
    %v899 = vld [vmem:[#allocation4 + $0x48] sm:$0xff]
    %v900 = vld [vmem:[#allocation4 + $0x50] sm:$0xff]
    %v901 = vld [vmem:[#allocation4 + $0x58] sm:$0xff]
    %v902 = vpack.c.bf16 %v896, %v896
    %903 = vmatpush.bf16.msra.mxu0 %v655
    %904 = vmatpush.bf16.msra.mxu0 %v651
    %905 = vmatpush.bf16.msra.mxu0 %v647
    %906 = vmatpush.bf16.msra.mxu0 %v643
    %907 = vmatpush.bf16.msra.mxu0 %v639
    %908 = vmatpush.bf16.msra.mxu0 %v635
    %909 = vmatpush.bf16.msra.mxu0 %v631
    %910 = vmatpush.bf16.msra.mxu0 %v627
    %911 = vmatmul.bf16.gmra.mxu0 %v902
    %v912 = vpop.f32.mrf.mxu0
    %v913 = vadd.f32 0.0, %v912
    %v914 = vpop.f32.mrf.mxu0
    %915 = vdwg.mxu0
    %916 = vmatpush.bf16.msra.mxu0 %v656
    %917 = vmatpush.bf16.msra.mxu0 %v652
    %918 = vmatpush.bf16.msra.mxu0 %v648
    %919 = vmatpush.bf16.msra.mxu0 %v644
    %920 = vmatpush.bf16.msra.mxu0 %v640
    %921 = vmatpush.bf16.msra.mxu0 %v636
    %922 = vmatpush.bf16.msra.mxu0 %v632
    %923 = vmatpush.bf16.msra.mxu0 %v628
    %924 = vmatmul.bf16.gmra.mxu0 %v902
    %v925 = vpop.f32.mrf.mxu0
    %v926 = vadd.f32 0.0, %v925
    %v927 = vpop.f32.mrf.mxu0
    %928 = vdwg.mxu0
    %929 = vmatpush.bf16.msra.mxu0 %v657
    %930 = vmatpush.bf16.msra.mxu0 %v653
    %931 = vmatpush.bf16.msra.mxu0 %v649
    %932 = vmatpush.bf16.msra.mxu0 %v645
    %933 = vmatpush.bf16.msra.mxu0 %v641
    %934 = vmatpush.bf16.msra.mxu0 %v637
    %935 = vmatpush.bf16.msra.mxu0 %v633
    %936 = vmatpush.bf16.msra.mxu0 %v629
    %937 = vmatmul.bf16.gmra.mxu0 %v902
    %v938 = vpop.f32.mrf.mxu0
    %v939 = vadd.f32 0.0, %v938
    %v940 = vpop.f32.mrf.mxu0
    %941 = vdwg.mxu0
    %942 = vmatpush.bf16.msra.mxu0 %v658
    %943 = vmatpush.bf16.msra.mxu0 %v654
    %944 = vmatpush.bf16.msra.mxu0 %v650
    %945 = vmatpush.bf16.msra.mxu0 %v646
    %946 = vmatpush.bf16.msra.mxu0 %v642
    %947 = vmatpush.bf16.msra.mxu0 %v638
    %948 = vmatpush.bf16.msra.mxu0 %v634
    %949 = vmatpush.bf16.msra.mxu0 %v630
    %950 = vmatmul.bf16.gmra.mxu0 %v902
    %v951 = vpop.f32.mrf.mxu0
    %v952 = vadd.f32 0.0, %v951
    %v953 = vpop.f32.mrf.mxu0
    %954 = vdwg.mxu0
    %v955 = vadd.f32 %v898, %v913
    %v956 = vadd.f32 %v899, %v926
    %v957 = vadd.f32 %v900, %v939
    %v958 = vadd.f32 %v901, %v952
    %v959 = vmul.f32 %v955, 0.5
    %v960 = vtanh.pop %v959
    %v961 = vmul.f32 %v960, 0.5
    %v962 = vadd.f32 %v961, 0.5
    %v963 = vmul.f32 %v956, 0.5
    %v964 = vtanh.pop %v963
    %v965 = vmul.f32 %v964, 0.5
    %v966 = vadd.f32 %v965, 0.5
    %v967 = vtanh.pop %v957
    %v968 = vmul.f32 %v958, 0.5
    %v969 = vtanh.pop %v968
    %v970 = vmul.f32 %v969, 0.5
    %v971 = vadd.f32 %v970, 0.5
    %v972 = vmul.f32 %v966, %v897
    %v973 = vmul.f32 %v962, %v967
    %v974 = vadd.f32 %v972, %v973
    %v975 = vtanh.pop %v974
    %v976 = vmul.f32 %v971, %v975
    %977 = vst [vmem:[#allocation2] sm:$0xff] %v976
    %978 = vst [vmem:[#allocation3] sm:$0xff] %v974
    %v980 = vrot.slane %v976, 1
    %v981 = vrot.slane %v976, 2
    %v982 = vrot.slane %v976, 3
    %v983 = vrot.slane %v976, 4
    %v984 = vrot.slane %v976, 5
    %v985 = vrot.slane %v976, 6
    %v986 = vrot.slane %v976, 7
    %994 = vst [vmem:[#allocation14 + $0x2] sm:$0x1] %v976
    %995 = vst [vmem:[#allocation14 + $0xa] sm:$0x1] %v980
    %996 = vst [vmem:[#allocation14 + $0x12] sm:$0x1] %v981
    %997 = vst [vmem:[#allocation14 + $0x1a] sm:$0x1] %v982
    %998 = vst [vmem:[#allocation14 + $0x22] sm:$0x1] %v983
    %999 = vst [vmem:[#allocation14 + $0x2a] sm:$0x1] %v984
    %1000 = vst [vmem:[#allocation14 + $0x32] sm:$0x1] %v985
    %1001 = vst [vmem:[#allocation14 + $0x3a] sm:$0x1] %v986
    %v1002 = vld [vmem:[#allocation2] sm:$0xff]
    %v1003 = vld [vmem:[#allocation3] sm:$0xff]
    %v1004 = vld [vmem:[#allocation4 + $0x60] sm:$0xff]
    %v1005 = vld [vmem:[#allocation4 + $0x68] sm:$0xff]
    %v1006 = vld [vmem:[#allocation4 + $0x70] sm:$0xff]
    %v1007 = vld [vmem:[#allocation4 + $0x78] sm:$0xff]
    %v1008 = vpack.c.bf16 %v1002, %v1002
    %1009 = vmatpush.bf16.msra.mxu0 %v655
    %1010 = vmatpush.bf16.msra.mxu0 %v651
    %1011 = vmatpush.bf16.msra.mxu0 %v647
    %1012 = vmatpush.bf16.msra.mxu0 %v643
    %1013 = vmatpush.bf16.msra.mxu0 %v639
    %1014 = vmatpush.bf16.msra.mxu0 %v635
    %1015 = vmatpush.bf16.msra.mxu0 %v631
    %1016 = vmatpush.bf16.msra.mxu0 %v627
    %1017 = vmatmul.bf16.gmra.mxu0 %v1008
    %v1018 = vpop.f32.mrf.mxu0
    %v1019 = vadd.f32 0.0, %v1018
    %v1020 = vpop.f32.mrf.mxu0
    %1021 = vdwg.mxu0
    %1022 = vmatpush.bf16.msra.mxu0 %v656
    %1023 = vmatpush.bf16.msra.mxu0 %v652
    %1024 = vmatpush.bf16.msra.mxu0 %v648
    %1025 = vmatpush.bf16.msra.mxu0 %v644
    %1026 = vmatpush.bf16.msra.mxu0 %v640
    %1027 = vmatpush.bf16.msra.mxu0 %v636
    %1028 = vmatpush.bf16.msra.mxu0 %v632
    %1029 = vmatpush.bf16.msra.mxu0 %v628
    %1030 = vmatmul.bf16.gmra.mxu0 %v1008
    %v1031 = vpop.f32.mrf.mxu0
    %v1032 = vadd.f32 0.0, %v1031
    %v1033 = vpop.f32.mrf.mxu0
    %1034 = vdwg.mxu0
    %1035 = vmatpush.bf16.msra.mxu0 %v657
    %1036 = vmatpush.bf16.msra.mxu0 %v653
    %1037 = vmatpush.bf16.msra.mxu0 %v649
    %1038 = vmatpush.bf16.msra.mxu0 %v645
    %1039 = vmatpush.bf16.msra.mxu0 %v641
    %1040 = vmatpush.bf16.msra.mxu0 %v637
    %1041 = vmatpush.bf16.msra.mxu0 %v633
    %1042 = vmatpush.bf16.msra.mxu0 %v629
    %1043 = vmatmul.bf16.gmra.mxu0 %v1008
    %v1044 = vpop.f32.mrf.mxu0
    %v1045 = vadd.f32 0.0, %v1044
    %v1046 = vpop.f32.mrf.mxu0
    %1047 = vdwg.mxu0
    %1048 = vmatpush.bf16.msra.mxu0 %v658
    %1049 = vmatpush.bf16.msra.mxu0 %v654
    %1050 = vmatpush.bf16.msra.mxu0 %v650
    %1051 = vmatpush.bf16.msra.mxu0 %v646
    %1052 = vmatpush.bf16.msra.mxu0 %v642
    %1053 = vmatpush.bf16.msra.mxu0 %v638
    %1054 = vmatpush.bf16.msra.mxu0 %v634
    %1055 = vmatpush.bf16.msra.mxu0 %v630
    %1056 = vmatmul.bf16.gmra.mxu0 %v1008
    %v1057 = vpop.f32.mrf.mxu0
    %v1058 = vadd.f32 0.0, %v1057
    %v1059 = vpop.f32.mrf.mxu0
    %1060 = vdwg.mxu0
    %v1061 = vadd.f32 %v1004, %v1019
    %v1062 = vadd.f32 %v1005, %v1032
    %v1063 = vadd.f32 %v1006, %v1045
    %v1064 = vadd.f32 %v1007, %v1058
    %v1065 = vmul.f32 %v1061, 0.5
    %v1066 = vtanh.pop %v1065
    %v1067 = vmul.f32 %v1066, 0.5
    %v1068 = vadd.f32 %v1067, 0.5
    %v1069 = vmul.f32 %v1062, 0.5
    %v1070 = vtanh.pop %v1069
    %v1071 = vmul.f32 %v1070, 0.5
    %v1072 = vadd.f32 %v1071, 0.5
    %v1073 = vtanh.pop %v1063
    %v1074 = vmul.f32 %v1064, 0.5
    %v1075 = vtanh.pop %v1074
    %v1076 = vmul.f32 %v1075, 0.5
    %v1077 = vadd.f32 %v1076, 0.5
    %v1078 = vmul.f32 %v1072, %v1003
    %v1079 = vmul.f32 %v1068, %v1073
    %v1080 = vadd.f32 %v1078, %v1079
    %v1081 = vtanh.pop %v1080
    %v1082 = vmul.f32 %v1077, %v1081
    %1083 = vst [vmem:[#allocation2] sm:$0xff] %v1082
    %1084 = vst [vmem:[#allocation3] sm:$0xff] %v1080
    %v1086 = vrot.slane %v1082, 1
    %v1087 = vrot.slane %v1082, 2
    %v1088 = vrot.slane %v1082, 3
    %v1089 = vrot.slane %v1082, 4
    %v1090 = vrot.slane %v1082, 5
    %v1091 = vrot.slane %v1082, 6
    %v1092 = vrot.slane %v1082, 7
    %1100 = vst [vmem:[#allocation14 + $0x3] sm:$0x1] %v1082
    %1101 = vst [vmem:[#allocation14 + $0xb] sm:$0x1] %v1086
    %1102 = vst [vmem:[#allocation14 + $0x13] sm:$0x1] %v1087
    %1103 = vst [vmem:[#allocation14 + $0x1b] sm:$0x1] %v1088
    %1104 = vst [vmem:[#allocation14 + $0x23] sm:$0x1] %v1089
    %1105 = vst [vmem:[#allocation14 + $0x2b] sm:$0x1] %v1090
    %1106 = vst [vmem:[#allocation14 + $0x33] sm:$0x1] %v1091
    %1107 = vst [vmem:[#allocation14 + $0x3b] sm:$0x1] %v1092
    %v1108 = vld [vmem:[#allocation2] sm:$0xff]
    %v1109 = vld [vmem:[#allocation3] sm:$0xff]
    %v1110 = vld [vmem:[#allocation4 + $0x80] sm:$0xff]
    %v1111 = vld [vmem:[#allocation4 + $0x88] sm:$0xff]
    %v1112 = vld [vmem:[#allocation4 + $0x90] sm:$0xff]
    %v1113 = vld [vmem:[#allocation4 + $0x98] sm:$0xff]
    %v1114 = vpack.c.bf16 %v1108, %v1108
    %1115 = vmatpush.bf16.msra.mxu0 %v655
    %1116 = vmatpush.bf16.msra.mxu0 %v651
    %1117 = vmatpush.bf16.msra.mxu0 %v647
    %1118 = vmatpush.bf16.msra.mxu0 %v643
    %1119 = vmatpush.bf16.msra.mxu0 %v639
    %1120 = vmatpush.bf16.msra.mxu0 %v635
    %1121 = vmatpush.bf16.msra.mxu0 %v631
    %1122 = vmatpush.bf16.msra.mxu0 %v627
    %1123 = vmatmul.bf16.gmra.mxu0 %v1114
    %v1124 = vpop.f32.mrf.mxu0
    %v1125 = vadd.f32 0.0, %v1124
    %v1126 = vpop.f32.mrf.mxu0
    %1127 = vdwg.mxu0
    %1128 = vmatpush.bf16.msra.mxu0 %v656
    %1129 = vmatpush.bf16.msra.mxu0 %v652
    %1130 = vmatpush.bf16.msra.mxu0 %v648
    %1131 = vmatpush.bf16.msra.mxu0 %v644
    %1132 = vmatpush.bf16.msra.mxu0 %v640
    %1133 = vmatpush.bf16.msra.mxu0 %v636
    %1134 = vmatpush.bf16.msra.mxu0 %v632
    %1135 = vmatpush.bf16.msra.mxu0 %v628
    %1136 = vmatmul.bf16.gmra.mxu0 %v1114
    %v1137 = vpop.f32.mrf.mxu0
    %v1138 = vadd.f32 0.0, %v1137
    %v1139 = vpop.f32.mrf.mxu0
    %1140 = vdwg.mxu0
    %1141 = vmatpush.bf16.msra.mxu0 %v657
    %1142 = vmatpush.bf16.msra.mxu0 %v653
    %1143 = vmatpush.bf16.msra.mxu0 %v649
    %1144 = vmatpush.bf16.msra.mxu0 %v645
    %1145 = vmatpush.bf16.msra.mxu0 %v641
    %1146 = vmatpush.bf16.msra.mxu0 %v637
    %1147 = vmatpush.bf16.msra.mxu0 %v633
    %1148 = vmatpush.bf16.msra.mxu0 %v629
    %1149 = vmatmul.bf16.gmra.mxu0 %v1114
    %v1150 = vpop.f32.mrf.mxu0
    %v1151 = vadd.f32 0.0, %v1150
    %v1152 = vpop.f32.mrf.mxu0
    %1153 = vdwg.mxu0
    %1154 = vmatpush.bf16.msra.mxu0 %v658
    %1155 = vmatpush.bf16.msra.mxu0 %v654
    %1156 = vmatpush.bf16.msra.mxu0 %v650
    %1157 = vmatpush.bf16.msra.mxu0 %v646
    %1158 = vmatpush.bf16.msra.mxu0 %v642
    %1159 = vmatpush.bf16.msra.mxu0 %v638
    %1160 = vmatpush.bf16.msra.mxu0 %v634
    %1161 = vmatpush.bf16.msra.mxu0 %v630
    %1162 = vmatmul.bf16.gmra.mxu0 %v1114
    %v1163 = vpop.f32.mrf.mxu0
    %v1164 = vadd.f32 0.0, %v1163
    %v1165 = vpop.f32.mrf.mxu0
    %1166 = vdwg.mxu0
    %v1167 = vadd.f32 %v1110, %v1125
    %v1168 = vadd.f32 %v1111, %v1138
    %v1169 = vadd.f32 %v1112, %v1151
    %v1170 = vadd.f32 %v1113, %v1164
    %v1171 = vmul.f32 %v1167, 0.5
    %v1172 = vtanh.pop %v1171
    %v1173 = vmul.f32 %v1172, 0.5
    %v1174 = vadd.f32 %v1173, 0.5
    %v1175 = vmul.f32 %v1168, 0.5
    %v1176 = vtanh.pop %v1175
    %v1177 = vmul.f32 %v1176, 0.5
    %v1178 = vadd.f32 %v1177, 0.5
    %v1179 = vtanh.pop %v1169
    %v1180 = vmul.f32 %v1170, 0.5
    %v1181 = vtanh.pop %v1180
    %v1182 = vmul.f32 %v1181, 0.5
    %v1183 = vadd.f32 %v1182, 0.5
    %v1184 = vmul.f32 %v1178, %v1109
    %v1185 = vmul.f32 %v1174, %v1179
    %v1186 = vadd.f32 %v1184, %v1185
    %v1187 = vtanh.pop %v1186
    %v1188 = vmul.f32 %v1183, %v1187
    %1189 = vst [vmem:[#allocation2] sm:$0xff] %v1188
    %1190 = vst [vmem:[#allocation3] sm:$0xff] %v1186
    %v1192 = vrot.slane %v1188, 1
    %v1193 = vrot.slane %v1188, 2
    %v1194 = vrot.slane %v1188, 3
    %v1195 = vrot.slane %v1188, 4
    %v1196 = vrot.slane %v1188, 5
    %v1197 = vrot.slane %v1188, 6
    %v1198 = vrot.slane %v1188, 7
    %1206 = vst [vmem:[#allocation14 + $0x4] sm:$0x1] %v1188
    %1207 = vst [vmem:[#allocation14 + $0xc] sm:$0x1] %v1192
    %1208 = vst [vmem:[#allocation14 + $0x14] sm:$0x1] %v1193
    %1209 = vst [vmem:[#allocation14 + $0x1c] sm:$0x1] %v1194
    %1210 = vst [vmem:[#allocation14 + $0x24] sm:$0x1] %v1195
    %1211 = vst [vmem:[#allocation14 + $0x2c] sm:$0x1] %v1196
    %1212 = vst [vmem:[#allocation14 + $0x34] sm:$0x1] %v1197
    %1213 = vst [vmem:[#allocation14 + $0x3c] sm:$0x1] %v1198
    %v1214 = vld [vmem:[#allocation2] sm:$0xff]
    %v1215 = vld [vmem:[#allocation3] sm:$0xff]
    %v1216 = vld [vmem:[#allocation4 + $0xa0] sm:$0xff]
    %v1217 = vld [vmem:[#allocation4 + $0xa8] sm:$0xff]
    %v1218 = vld [vmem:[#allocation4 + $0xb0] sm:$0xff]
    %v1219 = vld [vmem:[#allocation4 + $0xb8] sm:$0xff]
    %v1220 = vpack.c.bf16 %v1214, %v1214
    %1221 = vmatpush.bf16.msra.mxu0 %v655
    %1222 = vmatpush.bf16.msra.mxu0 %v651
    %1223 = vmatpush.bf16.msra.mxu0 %v647
    %1224 = vmatpush.bf16.msra.mxu0 %v643
    %1225 = vmatpush.bf16.msra.mxu0 %v639
    %1226 = vmatpush.bf16.msra.mxu0 %v635
    %1227 = vmatpush.bf16.msra.mxu0 %v631
    %1228 = vmatpush.bf16.msra.mxu0 %v627
    %1229 = vmatmul.bf16.gmra.mxu0 %v1220
    %v1230 = vpop.f32.mrf.mxu0
    %v1231 = vadd.f32 0.0, %v1230
    %v1232 = vpop.f32.mrf.mxu0
    %1233 = vdwg.mxu0
    %1234 = vmatpush.bf16.msra.mxu0 %v656
    %1235 = vmatpush.bf16.msra.mxu0 %v652
    %1236 = vmatpush.bf16.msra.mxu0 %v648
    %1237 = vmatpush.bf16.msra.mxu0 %v644
    %1238 = vmatpush.bf16.msra.mxu0 %v640
    %1239 = vmatpush.bf16.msra.mxu0 %v636
    %1240 = vmatpush.bf16.msra.mxu0 %v632
    %1241 = vmatpush.bf16.msra.mxu0 %v628
    %1242 = vmatmul.bf16.gmra.mxu0 %v1220
    %v1243 = vpop.f32.mrf.mxu0
    %v1244 = vadd.f32 0.0, %v1243
    %v1245 = vpop.f32.mrf.mxu0
    %1246 = vdwg.mxu0
    %1247 = vmatpush.bf16.msra.mxu0 %v657
    %1248 = vmatpush.bf16.msra.mxu0 %v653
    %1249 = vmatpush.bf16.msra.mxu0 %v649
    %1250 = vmatpush.bf16.msra.mxu0 %v645
    %1251 = vmatpush.bf16.msra.mxu0 %v641
    %1252 = vmatpush.bf16.msra.mxu0 %v637
    %1253 = vmatpush.bf16.msra.mxu0 %v633
    %1254 = vmatpush.bf16.msra.mxu0 %v629
    %1255 = vmatmul.bf16.gmra.mxu0 %v1220
    %v1256 = vpop.f32.mrf.mxu0
    %v1257 = vadd.f32 0.0, %v1256
    %v1258 = vpop.f32.mrf.mxu0
    %1259 = vdwg.mxu0
    %1260 = vmatpush.bf16.msra.mxu0 %v658
    %1261 = vmatpush.bf16.msra.mxu0 %v654
    %1262 = vmatpush.bf16.msra.mxu0 %v650
    %1263 = vmatpush.bf16.msra.mxu0 %v646
    %1264 = vmatpush.bf16.msra.mxu0 %v642
    %1265 = vmatpush.bf16.msra.mxu0 %v638
    %1266 = vmatpush.bf16.msra.mxu0 %v634
    %1267 = vmatpush.bf16.msra.mxu0 %v630
    %1268 = vmatmul.bf16.gmra.mxu0 %v1220
    %v1269 = vpop.f32.mrf.mxu0
    %v1270 = vadd.f32 0.0, %v1269
    %v1271 = vpop.f32.mrf.mxu0
    %1272 = vdwg.mxu0
    %v1273 = vadd.f32 %v1216, %v1231
    %v1274 = vadd.f32 %v1217, %v1244
    %v1275 = vadd.f32 %v1218, %v1257
    %v1276 = vadd.f32 %v1219, %v1270
    %v1277 = vmul.f32 %v1273, 0.5
    %v1278 = vtanh.pop %v1277
    %v1279 = vmul.f32 %v1278, 0.5
    %v1280 = vadd.f32 %v1279, 0.5
    %v1281 = vmul.f32 %v1274, 0.5
    %v1282 = vtanh.pop %v1281
    %v1283 = vmul.f32 %v1282, 0.5
    %v1284 = vadd.f32 %v1283, 0.5
    %v1285 = vtanh.pop %v1275
    %v1286 = vmul.f32 %v1276, 0.5
    %v1287 = vtanh.pop %v1286
    %v1288 = vmul.f32 %v1287, 0.5
    %v1289 = vadd.f32 %v1288, 0.5
    %v1290 = vmul.f32 %v1284, %v1215
    %v1291 = vmul.f32 %v1280, %v1285
    %v1292 = vadd.f32 %v1290, %v1291
    %v1293 = vtanh.pop %v1292
    %v1294 = vmul.f32 %v1289, %v1293
    %1295 = vst [vmem:[#allocation2] sm:$0xff] %v1294
    %1296 = vst [vmem:[#allocation3] sm:$0xff] %v1292
    %v1298 = vrot.slane %v1294, 1
    %v1299 = vrot.slane %v1294, 2
    %v1300 = vrot.slane %v1294, 3
    %v1301 = vrot.slane %v1294, 4
    %v1302 = vrot.slane %v1294, 5
    %v1303 = vrot.slane %v1294, 6
    %v1304 = vrot.slane %v1294, 7
    %1312 = vst [vmem:[#allocation14 + $0x5] sm:$0x1] %v1294
    %1313 = vst [vmem:[#allocation14 + $0xd] sm:$0x1] %v1298
    %1314 = vst [vmem:[#allocation14 + $0x15] sm:$0x1] %v1299
    %1315 = vst [vmem:[#allocation14 + $0x1d] sm:$0x1] %v1300
    %1316 = vst [vmem:[#allocation14 + $0x25] sm:$0x1] %v1301
    %1317 = vst [vmem:[#allocation14 + $0x2d] sm:$0x1] %v1302
    %1318 = vst [vmem:[#allocation14 + $0x35] sm:$0x1] %v1303
    %1319 = vst [vmem:[#allocation14 + $0x3d] sm:$0x1] %v1304
    %v1320 = vld [vmem:[#allocation2] sm:$0xff]
    %v1321 = vld [vmem:[#allocation3] sm:$0xff]
    %v1322 = vld [vmem:[#allocation4 + $0xc0] sm:$0xff]
    %v1323 = vld [vmem:[#allocation4 + $0xc8] sm:$0xff]
    %v1324 = vld [vmem:[#allocation4 + $0xd0] sm:$0xff]
    %v1325 = vld [vmem:[#allocation4 + $0xd8] sm:$0xff]
    %v1326 = vpack.c.bf16 %v1320, %v1320
    %1327 = vmatpush.bf16.msra.mxu0 %v655
    %1328 = vmatpush.bf16.msra.mxu0 %v651
    %1329 = vmatpush.bf16.msra.mxu0 %v647
    %1330 = vmatpush.bf16.msra.mxu0 %v643
    %1331 = vmatpush.bf16.msra.mxu0 %v639
    %1332 = vmatpush.bf16.msra.mxu0 %v635
    %1333 = vmatpush.bf16.msra.mxu0 %v631
    %1334 = vmatpush.bf16.msra.mxu0 %v627
    %1335 = vmatmul.bf16.gmra.mxu0 %v1326
    %v1336 = vpop.f32.mrf.mxu0
    %v1337 = vadd.f32 0.0, %v1336
    %v1338 = vpop.f32.mrf.mxu0
    %1339 = vdwg.mxu0
    %1340 = vmatpush.bf16.msra.mxu0 %v656
    %1341 = vmatpush.bf16.msra.mxu0 %v652
    %1342 = vmatpush.bf16.msra.mxu0 %v648
    %1343 = vmatpush.bf16.msra.mxu0 %v644
    %1344 = vmatpush.bf16.msra.mxu0 %v640
    %1345 = vmatpush.bf16.msra.mxu0 %v636
    %1346 = vmatpush.bf16.msra.mxu0 %v632
    %1347 = vmatpush.bf16.msra.mxu0 %v628
    %1348 = vmatmul.bf16.gmra.mxu0 %v1326
    %v1349 = vpop.f32.mrf.mxu0
    %v1350 = vadd.f32 0.0, %v1349
    %v1351 = vpop.f32.mrf.mxu0
    %1352 = vdwg.mxu0
    %1353 = vmatpush.bf16.msra.mxu0 %v657
    %1354 = vmatpush.bf16.msra.mxu0 %v653
    %1355 = vmatpush.bf16.msra.mxu0 %v649
    %1356 = vmatpush.bf16.msra.mxu0 %v645
    %1357 = vmatpush.bf16.msra.mxu0 %v641
    %1358 = vmatpush.bf16.msra.mxu0 %v637
    %1359 = vmatpush.bf16.msra.mxu0 %v633
    %1360 = vmatpush.bf16.msra.mxu0 %v629
    %1361 = vmatmul.bf16.gmra.mxu0 %v1326
    %v1362 = vpop.f32.mrf.mxu0
    %v1363 = vadd.f32 0.0, %v1362
    %v1364 = vpop.f32.mrf.mxu0
    %1365 = vdwg.mxu0
    %1366 = vmatpush.bf16.msra.mxu0 %v658
    %1367 = vmatpush.bf16.msra.mxu0 %v654
    %1368 = vmatpush.bf16.msra.mxu0 %v650
    %1369 = vmatpush.bf16.msra.mxu0 %v646
    %1370 = vmatpush.bf16.msra.mxu0 %v642
    %1371 = vmatpush.bf16.msra.mxu0 %v638
    %1372 = vmatpush.bf16.msra.mxu0 %v634
    %1373 = vmatpush.bf16.msra.mxu0 %v630
    %1374 = vmatmul.bf16.gmra.mxu0 %v1326
    %v1375 = vpop.f32.mrf.mxu0
    %v1376 = vadd.f32 0.0, %v1375
    %v1377 = vpop.f32.mrf.mxu0
    %1378 = vdwg.mxu0
    %v1379 = vadd.f32 %v1322, %v1337
    %v1380 = vadd.f32 %v1323, %v1350
    %v1381 = vadd.f32 %v1324, %v1363
    %v1382 = vadd.f32 %v1325, %v1376
    %v1383 = vmul.f32 %v1379, 0.5
    %v1384 = vtanh.pop %v1383
    %v1385 = vmul.f32 %v1384, 0.5
    %v1386 = vadd.f32 %v1385, 0.5
    %v1387 = vmul.f32 %v1380, 0.5
    %v1388 = vtanh.pop %v1387
    %v1389 = vmul.f32 %v1388, 0.5
    %v1390 = vadd.f32 %v1389, 0.5
    %v1391 = vtanh.pop %v1381
    %v1392 = vmul.f32 %v1382, 0.5
    %v1393 = vtanh.pop %v1392
    %v1394 = vmul.f32 %v1393, 0.5
    %v1395 = vadd.f32 %v1394, 0.5
    %v1396 = vmul.f32 %v1390, %v1321
    %v1397 = vmul.f32 %v1386, %v1391
    %v1398 = vadd.f32 %v1396, %v1397
    %v1399 = vtanh.pop %v1398
    %v1400 = vmul.f32 %v1395, %v1399
    %1401 = vst [vmem:[#allocation2] sm:$0xff] %v1400
    %1402 = vst [vmem:[#allocation3] sm:$0xff] %v1398
    %v1404 = vrot.slane %v1400, 1
    %v1405 = vrot.slane %v1400, 2
    %v1406 = vrot.slane %v1400, 3
    %v1407 = vrot.slane %v1400, 4
    %v1408 = vrot.slane %v1400, 5
    %v1409 = vrot.slane %v1400, 6
    %v1410 = vrot.slane %v1400, 7
    %1418 = vst [vmem:[#allocation14 + $0x6] sm:$0x1] %v1400
    %1419 = vst [vmem:[#allocation14 + $0xe] sm:$0x1] %v1404
    %1420 = vst [vmem:[#allocation14 + $0x16] sm:$0x1] %v1405
    %1421 = vst [vmem:[#allocation14 + $0x1e] sm:$0x1] %v1406
    %1422 = vst [vmem:[#allocation14 + $0x26] sm:$0x1] %v1407
    %1423 = vst [vmem:[#allocation14 + $0x2e] sm:$0x1] %v1408
    %1424 = vst [vmem:[#allocation14 + $0x36] sm:$0x1] %v1409
    %1425 = vst [vmem:[#allocation14 + $0x3e] sm:$0x1] %v1410
    %v1426 = vld [vmem:[#allocation2] sm:$0xff]
    %v1427 = vld [vmem:[#allocation3] sm:$0xff]
    %v1428 = vld [vmem:[#allocation4 + $0xe0] sm:$0xff]
    %v1429 = vld [vmem:[#allocation4 + $0xe8] sm:$0xff]
    %v1430 = vld [vmem:[#allocation4 + $0xf0] sm:$0xff]
    %v1431 = vld [vmem:[#allocation4 + $0xf8] sm:$0xff]
    %v1432 = vpack.c.bf16 %v1426, %v1426
    %1433 = vmatpush.bf16.msra.mxu0 %v655
    %1434 = vmatpush.bf16.msra.mxu0 %v651
    %1435 = vmatpush.bf16.msra.mxu0 %v647
    %1436 = vmatpush.bf16.msra.mxu0 %v643
    %1437 = vmatpush.bf16.msra.mxu0 %v639
    %1438 = vmatpush.bf16.msra.mxu0 %v635
    %1439 = vmatpush.bf16.msra.mxu0 %v631
    %1440 = vmatpush.bf16.msra.mxu0 %v627
    %1441 = vmatmul.bf16.gmra.mxu0 %v1432
    %v1442 = vpop.f32.mrf.mxu0
    %v1443 = vadd.f32 0.0, %v1442
    %v1444 = vpop.f32.mrf.mxu0
    %1445 = vdwg.mxu0
    %1446 = vmatpush.bf16.msra.mxu0 %v656
    %1447 = vmatpush.bf16.msra.mxu0 %v652
    %1448 = vmatpush.bf16.msra.mxu0 %v648
    %1449 = vmatpush.bf16.msra.mxu0 %v644
    %1450 = vmatpush.bf16.msra.mxu0 %v640
    %1451 = vmatpush.bf16.msra.mxu0 %v636
    %1452 = vmatpush.bf16.msra.mxu0 %v632
    %1453 = vmatpush.bf16.msra.mxu0 %v628
    %1454 = vmatmul.bf16.gmra.mxu0 %v1432
    %v1455 = vpop.f32.mrf.mxu0
    %v1456 = vadd.f32 0.0, %v1455
    %v1457 = vpop.f32.mrf.mxu0
    %1458 = vdwg.mxu0
    %1459 = vmatpush.bf16.msra.mxu0 %v657
    %1460 = vmatpush.bf16.msra.mxu0 %v653
    %1461 = vmatpush.bf16.msra.mxu0 %v649
    %1462 = vmatpush.bf16.msra.mxu0 %v645
    %1463 = vmatpush.bf16.msra.mxu0 %v641
    %1464 = vmatpush.bf16.msra.mxu0 %v637
    %1465 = vmatpush.bf16.msra.mxu0 %v633
    %1466 = vmatpush.bf16.msra.mxu0 %v629
    %1467 = vmatmul.bf16.gmra.mxu0 %v1432
    %v1468 = vpop.f32.mrf.mxu0
    %v1469 = vadd.f32 0.0, %v1468
    %v1470 = vpop.f32.mrf.mxu0
    %1471 = vdwg.mxu0
    %1472 = vmatpush.bf16.msra.mxu0 %v658
    %1473 = vmatpush.bf16.msra.mxu0 %v654
    %1474 = vmatpush.bf16.msra.mxu0 %v650
    %1475 = vmatpush.bf16.msra.mxu0 %v646
    %1476 = vmatpush.bf16.msra.mxu0 %v642
    %1477 = vmatpush.bf16.msra.mxu0 %v638
    %1478 = vmatpush.bf16.msra.mxu0 %v634
    %1479 = vmatpush.bf16.msra.mxu0 %v630
    %1480 = vmatmul.bf16.gmra.mxu0 %v1432
    %v1481 = vpop.f32.mrf.mxu0
    %v1482 = vadd.f32 0.0, %v1481
    %v1483 = vpop.f32.mrf.mxu0
    %1484 = vdwg.mxu0
    %v1485 = vadd.f32 %v1428, %v1443
    %v1486 = vadd.f32 %v1429, %v1456
    %v1487 = vadd.f32 %v1430, %v1469
    %v1488 = vadd.f32 %v1431, %v1482
    %v1489 = vmul.f32 %v1485, 0.5
    %v1490 = vtanh.pop %v1489
    %v1491 = vmul.f32 %v1490, 0.5
    %v1492 = vadd.f32 %v1491, 0.5
    %v1493 = vmul.f32 %v1486, 0.5
    %v1494 = vtanh.pop %v1493
    %v1495 = vmul.f32 %v1494, 0.5
    %v1496 = vadd.f32 %v1495, 0.5
    %v1497 = vtanh.pop %v1487
    %v1498 = vmul.f32 %v1488, 0.5
    %v1499 = vtanh.pop %v1498
    %v1500 = vmul.f32 %v1499, 0.5
    %v1501 = vadd.f32 %v1500, 0.5
    %v1502 = vmul.f32 %v1496, %v1427
    %v1503 = vmul.f32 %v1492, %v1497
    %v1504 = vadd.f32 %v1502, %v1503
    %v1505 = vtanh.pop %v1504
    %v1506 = vmul.f32 %v1501, %v1505
    %1507 = vst [vmem:[#allocation2] sm:$0xff] %v1506
    %1508 = vst [vmem:[#allocation3] sm:$0xff] %v1504
    %v1510 = vrot.slane %v1506, 1
    %v1511 = vrot.slane %v1506, 2
    %v1512 = vrot.slane %v1506, 3
    %v1513 = vrot.slane %v1506, 4
    %v1514 = vrot.slane %v1506, 5
    %v1515 = vrot.slane %v1506, 6
    %v1516 = vrot.slane %v1506, 7
    %1524 = vst [vmem:[#allocation14 + $0x7] sm:$0x1] %v1506
    %1525 = vst [vmem:[#allocation14 + $0xf] sm:$0x1] %v1510
    %1526 = vst [vmem:[#allocation14 + $0x17] sm:$0x1] %v1511
    %1527 = vst [vmem:[#allocation14 + $0x1f] sm:$0x1] %v1512
    %1528 = vst [vmem:[#allocation14 + $0x27] sm:$0x1] %v1513
    %1529 = vst [vmem:[#allocation14 + $0x2f] sm:$0x1] %v1514
    %1530 = vst [vmem:[#allocation14 + $0x37] sm:$0x1] %v1515
    %1531 = vst [vmem:[#allocation14 + $0x3f] sm:$0x1] %v1516
    // Predicated region
    $region50: #{tpu_custom_call.1} parent=1 // pred_check
      %p1532 = pneg %p102
    $region51: #{tpu_custom_call.1} parent=1 // pred_check_branch
      %1534 = sbr.rel (%p1532) target = $region53
    $region52: #{tpu_custom_call.1} parent=1 // pred_region
      %v1535 = vld [vmem:[#allocation2] sm:$0xff]
      %1536 = vst [vmem:[#allocation15] sm:$0xff] %v1535
      %v1537 = vld [vmem:[#allocation3] sm:$0xff]
      %1538 = vst [vmem:[#allocation17] sm:$0xff] %v1537
    $region53: #{tpu_custom_call.1} parent=1 // pred_fallthru
      _
    // Predicated region
    $region54: #{tpu_custom_call.1} parent=1 // pred_check
      _
    $region55: #{tpu_custom_call.1} parent=1 // pred_check_branch
      %1540 = sbr.rel (0) target = $region57
    $region56: #{tpu_custom_call.1} parent=1 // pred_region
      %1542 = vsyncadd [#allocation7], 0
      %s1543 = sshll.u32 [#allocation14], 4
      %s1544 = int_to_ptr.vmem [resolvable:$true] %s1543
      %s1545 = sshll.u32 %s6, 4
      %s1546 = int_to_ptr.hbm [resolvable:$true] %s1545
      %1551 = dma.vmem_to_hbm [thread:$0]  %s1544, 1024, %s1546, [#allocation7], 128, 128, 8
    $region57: #{tpu_custom_call.1} parent=1 // pred_fallthru
      _
    // Predicated region
    $region58: #{tpu_custom_call.1} parent=1 // pred_check
      _
    $region59: #{tpu_custom_call.1} parent=1 // pred_check_branch
      %1553 = sbr.rel (0) target = $region61
    $region60: #{tpu_custom_call.1} parent=1 // pred_region
      %1555 = vsyncadd [#allocation16], 0
      %s1557 = sshll.u32 [#allocation15], 4
      %s1558 = int_to_ptr.vmem [resolvable:$true] %s1557
      %s1559 = sshll.u32 %s7, 4
      %s1560 = int_to_ptr.hbm [resolvable:$true] %s1559
      %1562 = dma.vmem_to_hbm [thread:$0]  %s1558, 128, %s1560, [#allocation16]
    $region61: #{tpu_custom_call.1} parent=1 // pred_fallthru
      _
    // Predicated region
    $region62: #{tpu_custom_call.1} parent=1 // pred_check
      _
    $region63: #{tpu_custom_call.1} parent=1 // pred_check_branch
      %1564 = sbr.rel (0) target = $region65
    $region64: #{tpu_custom_call.1} parent=1 // pred_region
      %1566 = vsyncadd [#allocation16], 0
      %s1568 = sshll.u32 [#allocation17], 4
      %s1569 = int_to_ptr.vmem [resolvable:$true] %s1568
      %s1570 = sshll.u32 %s8, 4
      %s1571 = int_to_ptr.hbm [resolvable:$true] %s1570
      %1573 = dma.vmem_to_hbm [thread:$0]  %s1569, 128, %s1571, [#allocation16]
    $region65: #{tpu_custom_call.1} parent=1 // pred_fallthru
      _
    // Predicated region
    $region66: #{tpu_custom_call.1} parent=1 // pred_check
      _
    $region67: #{tpu_custom_call.1} parent=1 // pred_check_branch
      %1575 = sbr.rel (0) target = $region69
    $region68: #{tpu_custom_call.1} parent=1 // pred_region
      %1577 = dma.done [#allocation7], 1024
    $region69: #{tpu_custom_call.1} parent=1 // pred_fallthru
      _
    // Predicated region
    $region70: #{tpu_custom_call.1} parent=1 // pred_check
      _
    $region71: #{tpu_custom_call.1} parent=1 // pred_check_branch
      %1579 = sbr.rel (0) target = $region73
    $region72: #{tpu_custom_call.1} parent=1 // pred_region
      %1581 = dma.done [#allocation16], 128
    $region73: #{tpu_custom_call.1} parent=1 // pred_fallthru
      _
    // Predicated region
    $region74: #{tpu_custom_call.1} parent=1 // pred_check
      _
    $region75: #{tpu_custom_call.1} parent=1 // pred_check_branch
      %1583 = sbr.rel (0) target = $region77
    $region76: #{tpu_custom_call.1} parent=1 // pred_region
      %1585 = dma.done [#allocation16], 128
    $region77: #{tpu_custom_call.1} parent=1 // pred_fallthru
      _
    %1586 = vsyncpa [#allocation6], 1
    %1587 = vsyncpa [#allocation9], 1
    %1588 = vsyncpa [#allocation12], 1
    %1589 = vsyncpa [#allocation7], 1
    %1590 = vsyncpa [#allocation16], 1

// kernel: tpu_custom_call.1
$region0: #{tpu_custom_call.1}
  #allocation0 [shape = 'u32[]', space=smem, size = 0x4, offset = 0x4, fixed_abs, tag = 'smem constant byte address 0x4 - core index']
  #allocation1 [shape = 'u32[72,128]{1,0:T(1,128)}', space=vmem, size = 0x9000, scoped, tag = 'internal scratch']
  #allocation2 [shape = 'f32[8,128]{1,0:T(8,128)}', space=vmem, size = 0x1000, scoped, tag = 'scratch operand']
  #allocation3 [shape = 'f32[8,128]{1,0:T(8,128)}', space=vmem, size = 0x1000, scoped, tag = 'scratch operand']
  #allocation4 [shape = 'f32[64,512]{1,0:T(8,128)}', space=vmem, size = 0x20000, scoped, tag = 'scratch operand']
  %s0 = inlined_call_operand.hbm [shape: bf16[1,64,128], index: 0, kind: input, shape index: {}]
  %s1 = inlined_call_operand.hbm [shape: f32[8,128], index: 1, kind: input, shape index: {}]
  %s2 = inlined_call_operand.hbm [shape: f32[8,128], index: 2, kind: input, shape index: {}]
  %s3 = inlined_call_operand.hbm [shape: bf16[128,512], index: 3, kind: input, shape index: {}]
  %s4 = inlined_call_operand.hbm [shape: bf16[128,512], index: 4, kind: input, shape index: {}]
  %s5 = inlined_call_operand.vmem [shape: f32[1,512], index: 5, kind: input, shape index: {}]
  %s6 = inlined_call_operand.hbm [shape: f32[8,8,128], index: 6, kind: output, shape index: {0}]
  %s7 = inlined_call_operand.hbm [shape: f32[8,128], index: 7, kind: output, shape index: {1}]
  %s8 = inlined_call_operand.hbm [shape: f32[8,128], index: 8, kind: output, shape index: {2}]
  %9 = xla_tuple %s6, %s7, %s8
  %s10 = sld [smem:[#allocation0]]
  $region78: #{tpu_custom_call.1} parent=0
    _
  %s12 = ssub.s32 1, %s10
  %s13 = scalar_select 0, %s12, %s10
  $region1: #{tpu_custom_call.1} parent=0
    #allocation5 [shape = 'u8[16384]{0}', space=vmem, size = 0x4000, scoped, tag = 'input window, operand 0, single buffered']
    #allocation6 [shape = 's32[1]{0}', space=sflag, size = 0x4, scoped, tag = 'scoped memory for tpu_custom_call.1']
    #allocation7 [shape = 's32[1]{0}', space=sflag, size = 0x4, scoped, tag = 'scoped memory for tpu_custom_call.1']
    #allocation8 [shape = 'u8[4096]{0}', space=vmem, size = 0x1000, scoped, tag = 'input window, operand 1, single buffered']
    #allocation9 [shape = 's32[1]{0}', space=sflag, size = 0x4, scoped, tag = 'scoped memory for tpu_custom_call.1']
    #allocation10 [shape = 'u8[4096]{0}', space=vmem, size = 0x1000, scoped, tag = 'input window, operand 2, single buffered']
    #allocation11 [shape = 'u8[131072]{0}', space=vmem, size = 0x20000, scoped, tag = 'input window, operand 3, single buffered']
    #allocation12 [shape = 's32[1]{0}', space=sflag, size = 0x4, scoped, tag = 'scoped memory for tpu_custom_call.1']
    #allocation13 [shape = 'u8[131072]{0}', space=vmem, size = 0x20000, scoped, tag = 'input window, operand 4, single buffered']
    #allocation14 [shape = 'u8[32768]{0}', space=vmem, size = 0x8000, scoped, tag = 'output window, operand 0, single buffered']
    #allocation15 [shape = 'u8[4096]{0}', space=vmem, size = 0x1000, scoped, tag = 'output window, operand 1, single buffered']
    #allocation16 [shape = 's32[1]{0}', space=sflag, size = 0x4, scoped, tag = 'scoped memory for tpu_custom_call.1']
    #allocation17 [shape = 'u8[4096]{0}', space=vmem, size = 0x1000, scoped, tag = 'output window, operand 2, single buffered']
    %14 = vsyncpa [#allocation6], 0
    %15 = vsyncpa [#allocation9], 0
    %16 = vsyncpa [#allocation12], 0
    %17 = vsyncpa [#allocation7], 0
    %18 = vsyncpa [#allocation16], 0
    // Predicated region
    $region2: #{tpu_custom_call.1} parent=1 // pred_check
      _
    $region3: #{tpu_custom_call.1} parent=1 // pred_check_branch
      %20 = sbr.rel (0) target = $region5
    $region4: #{tpu_custom_call.1} parent=1 // pred_region
      %22 = vsyncadd [#allocation6], 0
      %s23 = sshll.u32 %s0, 4
      %s24 = int_to_ptr.hbm [resolvable:$true] %s23
      %s25 = sshll.u32 [#allocation5], 4
      %s26 = int_to_ptr.vmem [resolvable:$true] %s25
      %31 = dma.hbm_to_vmem [thread:$0]  %s24, 512, %s26, [#allocation6], 64, 64, 4
    $region5: #{tpu_custom_call.1} parent=1 // pred_fallthru
      _
    // Predicated region
    $region6: #{tpu_custom_call.1} parent=1 // pred_check
      _
    $region7: #{tpu_custom_call.1} parent=1 // pred_check_branch
      %33 = sbr.rel (0) target = $region9
    $region8: #{tpu_custom_call.1} parent=1 // pred_region
      %35 = vsyncadd [#allocation9], 0
      %s37 = sshll.u32 %s1, 4
      %s38 = int_to_ptr.hbm [resolvable:$true] %s37
      %s39 = sshll.u32 [#allocation8], 4
      %s40 = int_to_ptr.vmem [resolvable:$true] %s39
      %42 = dma.hbm_to_vmem [thread:$0]  %s38, 128, %s40, [#allocation9]
    $region9: #{tpu_custom_call.1} parent=1 // pred_fallthru
      _
    // Predicated region
    $region10: #{tpu_custom_call.1} parent=1 // pred_check
      _
    $region11: #{tpu_custom_call.1} parent=1 // pred_check_branch
      %44 = sbr.rel (0) target = $region13
    $region12: #{tpu_custom_call.1} parent=1 // pred_region
      %46 = vsyncadd [#allocation9], 0
      %s48 = sshll.u32 %s2, 4
      %s49 = int_to_ptr.hbm [resolvable:$true] %s48
      %s50 = sshll.u32 [#allocation10], 4
      %s51 = int_to_ptr.vmem [resolvable:$true] %s50
      %53 = dma.hbm_to_vmem [thread:$0]  %s49, 128, %s51, [#allocation9]
    $region13: #{tpu_custom_call.1} parent=1 // pred_fallthru
      _
    // Predicated region
    $region14: #{tpu_custom_call.1} parent=1 // pred_check
      _
    $region15: #{tpu_custom_call.1} parent=1 // pred_check_branch
      %55 = sbr.rel (0) target = $region17
    $region16: #{tpu_custom_call.1} parent=1 // pred_region
      %57 = vsyncadd [#allocation12], 0
      %s58 = sshll.u32 %s3, 4
      %s59 = int_to_ptr.hbm [resolvable:$true] %s58
      %s60 = sshll.u32 [#allocation11], 4
      %s61 = int_to_ptr.vmem [resolvable:$true] %s60
      %66 = dma.hbm_to_vmem [thread:$0]  %s59, 4096, %s61, [#allocation12], 256, 256, 16
    $region17: #{tpu_custom_call.1} parent=1 // pred_fallthru
      _
    // Predicated region
    $region18: #{tpu_custom_call.1} parent=1 // pred_check
      _
    $region19: #{tpu_custom_call.1} parent=1 // pred_check_branch
      %68 = sbr.rel (0) target = $region21
    $region20: #{tpu_custom_call.1} parent=1 // pred_region
      %70 = vsyncadd [#allocation12], 0
      %s71 = sshll.u32 %s4, 4
      %s72 = int_to_ptr.hbm [resolvable:$true] %s71
      %s73 = sshll.u32 [#allocation13], 4
      %s74 = int_to_ptr.vmem [resolvable:$true] %s73
      %79 = dma.hbm_to_vmem [thread:$0]  %s72, 4096, %s74, [#allocation12], 256, 256, 16
    $region21: #{tpu_custom_call.1} parent=1 // pred_fallthru
      _
    // Predicated region
    $region22: #{tpu_custom_call.1} parent=1 // pred_check
      _
    $region23: #{tpu_custom_call.1} parent=1 // pred_check_branch
      %81 = sbr.rel (0) target = $region25
    $region24: #{tpu_custom_call.1} parent=1 // pred_region
      _
    $region25: #{tpu_custom_call.1} parent=1 // pred_fallthru
      _
    // Predicated region
    $region26: #{tpu_custom_call.1} parent=1 // pred_check
      _
    $region27: #{tpu_custom_call.1} parent=1 // pred_check_branch
      %83 = sbr.rel (0) target = $region29
    $region28: #{tpu_custom_call.1} parent=1 // pred_region
      %85 = dma.done [#allocation6], 512
    $region29: #{tpu_custom_call.1} parent=1 // pred_fallthru
      _
    // Predicated region
    $region30: #{tpu_custom_call.1} parent=1 // pred_check
      _
    $region31: #{tpu_custom_call.1} parent=1 // pred_check_branch
      %87 = sbr.rel (0) target = $region33
    $region32: #{tpu_custom_call.1} parent=1 // pred_region
      %89 = dma.done [#allocation9], 128
    $region33: #{tpu_custom_call.1} parent=1 // pred_fallthru
      _
    // Predicated region
    $region34: #{tpu_custom_call.1} parent=1 // pred_check
      _
    $region35: #{tpu_custom_call.1} parent=1 // pred_check_branch
      %91 = sbr.rel (0) target = $region37
    $region36: #{tpu_custom_call.1} parent=1 // pred_region
      %93 = dma.done [#allocation9], 128
    $region37: #{tpu_custom_call.1} parent=1 // pred_fallthru
      _
    // Predicated region
    $region38: #{tpu_custom_call.1} parent=1 // pred_check
      _
    $region39: #{tpu_custom_call.1} parent=1 // pred_check_branch
      %95 = sbr.rel (0) target = $region41
    $region40: #{tpu_custom_call.1} parent=1 // pred_region
      %97 = dma.done [#allocation12], 4096
    $region41: #{tpu_custom_call.1} parent=1 // pred_fallthru
      _
    // Predicated region
    $region42: #{tpu_custom_call.1} parent=1 // pred_check
      _
    $region43: #{tpu_custom_call.1} parent=1 // pred_check_branch
      %99 = sbr.rel (0) target = $region45
    $region44: #{tpu_custom_call.1} parent=1 // pred_region
      %101 = dma.done [#allocation12], 4096
    $region45: #{tpu_custom_call.1} parent=1 // pred_fallthru
      _
    %p102 = scmp.eq.s32.totalorder 0, 0
    // Predicated region
    $region46: #{tpu_custom_call.1} parent=1 // pred_check
      %p103 = pneg %p102
    $region47: #{tpu_custom_call.1} parent=1 // pred_check_branch
      %105 = sbr.rel (%p103) target = $region49
    $region48: #{tpu_custom_call.1} parent=1 // pred_region
      %v106 = vld [vmem:[#allocation8] sm:$0xff]
      %107 = vst [vmem:[#allocation2] sm:$0xff] %v106
      %v108 = vld [vmem:[#allocation10] sm:$0xff]
      %109 = vst [vmem:[#allocation3] sm:$0xff] %v108
    $region49: #{tpu_custom_call.1} parent=1 // pred_fallthru
      _
    %v110 = vld [vmem:[#allocation5] sm:$0xf]
    %v111 = vld [vmem:[#allocation5 + $0x4] sm:$0xf]
    %v112 = vld [vmem:[#allocation5 + $0x8] sm:$0xf]
    %v113 = vld [vmem:[#allocation5 + $0xc] sm:$0xf]
    %v114 = vld [vmem:[#allocation5 + $0x10] sm:$0xf]
    %v115 = vld [vmem:[#allocation5 + $0x14] sm:$0xf]
    %v116 = vld [vmem:[#allocation5 + $0x18] sm:$0xf]
    %v117 = vld [vmem:[#allocation5 + $0x1c] sm:$0xf]
    %v118 = vld [vmem:[#allocation11] sm:$0xff]
    %v119 = vld [vmem:[#allocation11 + $0x8] sm:$0xff]
    %v120 = vld [vmem:[#allocation11 + $0x10] sm:$0xff]
    %v121 = vld [vmem:[#allocation11 + $0x18] sm:$0xff]
    %v122 = vld [vmem:[#allocation11 + $0x20] sm:$0xff]
    %v123 = vld [vmem:[#allocation11 + $0x28] sm:$0xff]
    %v124 = vld [vmem:[#allocation11 + $0x30] sm:$0xff]
    %v125 = vld [vmem:[#allocation11 + $0x38] sm:$0xff]
    %v126 = vld [vmem:[#allocation11 + $0x40] sm:$0xff]
    %v127 = vld [vmem:[#allocation11 + $0x48] sm:$0xff]
    %v128 = vld [vmem:[#allocation11 + $0x50] sm:$0xff]
    %v129 = vld [vmem:[#allocation11 + $0x58] sm:$0xff]
    %v130 = vld [vmem:[#allocation11 + $0x60] sm:$0xff]
    %v131 = vld [vmem:[#allocation11 + $0x68] sm:$0xff]
    %v132 = vld [vmem:[#allocation11 + $0x70] sm:$0xff]
    %v133 = vld [vmem:[#allocation11 + $0x78] sm:$0xff]
    %v134 = vld [vmem:[#allocation11 + $0x80] sm:$0xff]
    %v135 = vld [vmem:[#allocation11 + $0x88] sm:$0xff]
    %v136 = vld [vmem:[#allocation11 + $0x90] sm:$0xff]
    %v137 = vld [vmem:[#allocation11 + $0x98] sm:$0xff]
    %v138 = vld [vmem:[#allocation11 + $0xa0] sm:$0xff]
    %v139 = vld [vmem:[#allocation11 + $0xa8] sm:$0xff]
    %v140 = vld [vmem:[#allocation11 + $0xb0] sm:$0xff]
    %v141 = vld [vmem:[#allocation11 + $0xb8] sm:$0xff]
    %v142 = vld [vmem:[#allocation11 + $0xc0] sm:$0xff]
    %v143 = vld [vmem:[#allocation11 + $0xc8] sm:$0xff]
    %v144 = vld [vmem:[#allocation11 + $0xd0] sm:$0xff]
    %v145 = vld [vmem:[#allocation11 + $0xd8] sm:$0xff]
    %v146 = vld [vmem:[#allocation11 + $0xe0] sm:$0xff]
    %v147 = vld [vmem:[#allocation11 + $0xe8] sm:$0xff]
    %v148 = vld [vmem:[#allocation11 + $0xf0] sm:$0xff]
    %v149 = vld [vmem:[#allocation11 + $0xf8] sm:$0xff]
    %v150 = vld [vmem:[%s5] sm:$0xf]
    %v152 = vperm.slane %v150, 0
    %v153 = vperm.slane %v150, 1
    %v154 = vperm.slane %v150, 2
    %v155 = vperm.slane %v150, 3
    %v168 = vunpack.c.l.b16 %v110
    %v169 = vunpack.c.l.b16 %v111
    %v170 = vunpack.c.l.b16 %v112
    %v171 = vunpack.c.l.b16 %v113
    %v172 = vunpack.c.l.b16 %v114
    %v173 = vunpack.c.l.b16 %v115
    %v174 = vunpack.c.l.b16 %v116
    %v175 = vunpack.c.l.b16 %v117
    %v176 = vpack.c.b16 %v169, %v168
    %v177 = vpack.c.b16 %v171, %v170
    %v178 = vpack.c.b16 %v173, %v172
    %v179 = vpack.c.b16 %v175, %v174
    %v216 = vunpack.c.l.b16 %v118
    %v217 = vunpack.c.h.b16 %v118
    %v218 = vunpack.c.l.b16 %v119
    %v219 = vunpack.c.h.b16 %v119
    %v220 = vunpack.c.l.b16 %v120
    %v221 = vunpack.c.h.b16 %v120
    %v222 = vunpack.c.l.b16 %v121
    %v223 = vunpack.c.h.b16 %v121
    %v224 = vunpack.c.l.b16 %v122
    %v225 = vunpack.c.h.b16 %v122
    %v226 = vunpack.c.l.b16 %v123
    %v227 = vunpack.c.h.b16 %v123
    %v228 = vunpack.c.l.b16 %v124
    %v229 = vunpack.c.h.b16 %v124
    %v230 = vunpack.c.l.b16 %v125
    %v231 = vunpack.c.h.b16 %v125
    %v232 = vunpack.c.l.b16 %v126
    %v233 = vunpack.c.h.b16 %v126
    %v234 = vunpack.c.l.b16 %v127
    %v235 = vunpack.c.h.b16 %v127
    %v236 = vunpack.c.l.b16 %v128
    %v237 = vunpack.c.h.b16 %v128
    %v238 = vunpack.c.l.b16 %v129
    %v239 = vunpack.c.h.b16 %v129
    %v240 = vunpack.c.l.b16 %v130
    %v241 = vunpack.c.h.b16 %v130
    %v242 = vunpack.c.l.b16 %v131
    %v243 = vunpack.c.h.b16 %v131
    %v244 = vunpack.c.l.b16 %v132
    %v245 = vunpack.c.h.b16 %v132
    %v246 = vunpack.c.l.b16 %v133
    %v247 = vunpack.c.h.b16 %v133
    %v248 = vunpack.c.l.b16 %v134
    %v249 = vunpack.c.h.b16 %v134
    %v250 = vunpack.c.l.b16 %v135
    %v251 = vunpack.c.h.b16 %v135
    %v252 = vunpack.c.l.b16 %v136
    %v253 = vunpack.c.h.b16 %v136
    %v254 = vunpack.c.l.b16 %v137
    %v255 = vunpack.c.h.b16 %v137
    %v256 = vunpack.c.l.b16 %v138
    %v257 = vunpack.c.h.b16 %v138
    %v258 = vunpack.c.l.b16 %v139
    %v259 = vunpack.c.h.b16 %v139
    %v260 = vunpack.c.l.b16 %v140
    %v261 = vunpack.c.h.b16 %v140
    %v262 = vunpack.c.l.b16 %v141
    %v263 = vunpack.c.h.b16 %v141
    %v264 = vunpack.c.l.b16 %v142
    %v265 = vunpack.c.h.b16 %v142
    %v266 = vunpack.c.l.b16 %v143
    %v267 = vunpack.c.h.b16 %v143
    %v268 = vunpack.c.l.b16 %v144
    %v269 = vunpack.c.h.b16 %v144
    %v270 = vunpack.c.l.b16 %v145
    %v271 = vunpack.c.h.b16 %v145
    %v272 = vunpack.c.l.b16 %v146
    %v273 = vunpack.c.h.b16 %v146
    %v274 = vunpack.c.l.b16 %v147
    %v275 = vunpack.c.h.b16 %v147
    %v276 = vunpack.c.l.b16 %v148
    %v277 = vunpack.c.h.b16 %v148
    %v278 = vunpack.c.l.b16 %v149
    %v279 = vunpack.c.h.b16 %v149
    %v280 = vpack.c.b16 %v220, %v216
    %v281 = vpack.c.b16 %v221, %v217
    %v282 = vpack.c.b16 %v222, %v218
    %v283 = vpack.c.b16 %v223, %v219
    %v284 = vpack.c.b16 %v228, %v224
    %v285 = vpack.c.b16 %v229, %v225
    %v286 = vpack.c.b16 %v230, %v226
    %v287 = vpack.c.b16 %v231, %v227
    %v288 = vpack.c.b16 %v236, %v232
    %v289 = vpack.c.b16 %v237, %v233
    %v290 = vpack.c.b16 %v238, %v234
    %v291 = vpack.c.b16 %v239, %v235
    %v292 = vpack.c.b16 %v244, %v240
    %v293 = vpack.c.b16 %v245, %v241
    %v294 = vpack.c.b16 %v246, %v242
    %v295 = vpack.c.b16 %v247, %v243
    %v296 = vpack.c.b16 %v252, %v248
    %v297 = vpack.c.b16 %v253, %v249
    %v298 = vpack.c.b16 %v254, %v250
    %v299 = vpack.c.b16 %v255, %v251
    %v300 = vpack.c.b16 %v260, %v256
    %v301 = vpack.c.b16 %v261, %v257
    %v302 = vpack.c.b16 %v262, %v258
    %v303 = vpack.c.b16 %v263, %v259
    %v304 = vpack.c.b16 %v268, %v264
    %v305 = vpack.c.b16 %v269, %v265
    %v306 = vpack.c.b16 %v270, %v266
    %v307 = vpack.c.b16 %v271, %v267
    %v308 = vpack.c.b16 %v276, %v272
    %v309 = vpack.c.b16 %v277, %v273
    %v310 = vpack.c.b16 %v278, %v274
    %v311 = vpack.c.b16 %v279, %v275
    %344 = vmatpush.bf16.msra.mxu0 %v308
    %345 = vmatpush.bf16.msra.mxu0 %v304
    %346 = vmatpush.bf16.msra.mxu0 %v300
    %347 = vmatpush.bf16.msra.mxu0 %v296
    %348 = vmatpush.bf16.msra.mxu0 %v292
    %349 = vmatpush.bf16.msra.mxu0 %v288
    %350 = vmatpush.bf16.msra.mxu0 %v284
    %351 = vmatpush.bf16.msra.mxu0 %v280
    %352 = vmatmul.bf16.gmra.mxu0 %v176
    %v353 = vpop.f32.mrf.mxu0
    %v354 = vadd.f32 %v152, %v353
    %v355 = vpop.f32.mrf.mxu0
    %v356 = vadd.f32 %v152, %v355
    %357 = vmatmul.bf16.gmra.mxu0 %v177
    %v358 = vpop.f32.mrf.mxu0
    %v359 = vadd.f32 %v152, %v358
    %v360 = vpop.f32.mrf.mxu0
    %v361 = vadd.f32 %v152, %v360
    %362 = vmatmul.bf16.gmra.mxu0 %v178
    %v363 = vpop.f32.mrf.mxu0
    %v364 = vadd.f32 %v152, %v363
    %v365 = vpop.f32.mrf.mxu0
    %v366 = vadd.f32 %v152, %v365
    %367 = vmatmul.bf16.gmra.mxu0 %v179
    %v368 = vpop.f32.mrf.mxu0
    %v369 = vadd.f32 %v152, %v368
    %v370 = vpop.f32.mrf.mxu0
    %v371 = vadd.f32 %v152, %v370
    %372 = vdwg.mxu0
    %373 = vmatpush.bf16.msra.mxu0 %v309
    %374 = vmatpush.bf16.msra.mxu0 %v305
    %375 = vmatpush.bf16.msra.mxu0 %v301
    %376 = vmatpush.bf16.msra.mxu0 %v297
    %377 = vmatpush.bf16.msra.mxu0 %v293
    %378 = vmatpush.bf16.msra.mxu0 %v289
    %379 = vmatpush.bf16.msra.mxu0 %v285
    %380 = vmatpush.bf16.msra.mxu0 %v281
    %381 = vmatmul.bf16.gmra.mxu0 %v176
    %v382 = vpop.f32.mrf.mxu0
    %v383 = vadd.f32 %v153, %v382
    %v384 = vpop.f32.mrf.mxu0
    %v385 = vadd.f32 %v153, %v384
    %386 = vmatmul.bf16.gmra.mxu0 %v177
    %v387 = vpop.f32.mrf.mxu0
    %v388 = vadd.f32 %v153, %v387
    %v389 = vpop.f32.mrf.mxu0
    %v390 = vadd.f32 %v153, %v389
    %391 = vmatmul.bf16.gmra.mxu0 %v178
    %v392 = vpop.f32.mrf.mxu0
    %v393 = vadd.f32 %v153, %v392
    %v394 = vpop.f32.mrf.mxu0
    %v395 = vadd.f32 %v153, %v394
    %396 = vmatmul.bf16.gmra.mxu0 %v179
    %v397 = vpop.f32.mrf.mxu0
    %v398 = vadd.f32 %v153, %v397
    %v399 = vpop.f32.mrf.mxu0
    %v400 = vadd.f32 %v153, %v399
    %401 = vdwg.mxu0
    %402 = vmatpush.bf16.msra.mxu0 %v310
    %403 = vmatpush.bf16.msra.mxu0 %v306
    %404 = vmatpush.bf16.msra.mxu0 %v302
    %405 = vmatpush.bf16.msra.mxu0 %v298
    %406 = vmatpush.bf16.msra.mxu0 %v294
    %407 = vmatpush.bf16.msra.mxu0 %v290
    %408 = vmatpush.bf16.msra.mxu0 %v286
    %409 = vmatpush.bf16.msra.mxu0 %v282
    %410 = vmatmul.bf16.gmra.mxu0 %v176
    %v411 = vpop.f32.mrf.mxu0
    %v412 = vadd.f32 %v154, %v411
    %v413 = vpop.f32.mrf.mxu0
    %v414 = vadd.f32 %v154, %v413
    %415 = vmatmul.bf16.gmra.mxu0 %v177
    %v416 = vpop.f32.mrf.mxu0
    %v417 = vadd.f32 %v154, %v416
    %v418 = vpop.f32.mrf.mxu0
    %v419 = vadd.f32 %v154, %v418
    %420 = vmatmul.bf16.gmra.mxu0 %v178
    %v421 = vpop.f32.mrf.mxu0
    %v422 = vadd.f32 %v154, %v421
    %v423 = vpop.f32.mrf.mxu0
    %v424 = vadd.f32 %v154, %v423
    %425 = vmatmul.bf16.gmra.mxu0 %v179
    %v426 = vpop.f32.mrf.mxu0
    %v427 = vadd.f32 %v154, %v426
    %v428 = vpop.f32.mrf.mxu0
    %v429 = vadd.f32 %v154, %v428
    %430 = vdwg.mxu0
    %431 = vmatpush.bf16.msra.mxu0 %v311
    %432 = vmatpush.bf16.msra.mxu0 %v307
    %433 = vmatpush.bf16.msra.mxu0 %v303
    %434 = vmatpush.bf16.msra.mxu0 %v299
    %435 = vmatpush.bf16.msra.mxu0 %v295
    %436 = vmatpush.bf16.msra.mxu0 %v291
    %437 = vmatpush.bf16.msra.mxu0 %v287
    %438 = vmatpush.bf16.msra.mxu0 %v283
    %439 = vmatmul.bf16.gmra.mxu0 %v176
    %v440 = vpop.f32.mrf.mxu0
    %v441 = vadd.f32 %v155, %v440
    %v442 = vpop.f32.mrf.mxu0
    %v443 = vadd.f32 %v155, %v442
    %444 = vmatmul.bf16.gmra.mxu0 %v177
    %v445 = vpop.f32.mrf.mxu0
    %v446 = vadd.f32 %v155, %v445
    %v447 = vpop.f32.mrf.mxu0
    %v448 = vadd.f32 %v155, %v447
    %449 = vmatmul.bf16.gmra.mxu0 %v178
    %v450 = vpop.f32.mrf.mxu0
    %v451 = vadd.f32 %v155, %v450
    %v452 = vpop.f32.mrf.mxu0
    %v453 = vadd.f32 %v155, %v452
    %454 = vmatmul.bf16.gmra.mxu0 %v179
    %v455 = vpop.f32.mrf.mxu0
    %v456 = vadd.f32 %v155, %v455
    %v457 = vpop.f32.mrf.mxu0
    %v458 = vadd.f32 %v155, %v457
    %459 = vdwg.mxu0
    %460 = vst [vmem:[#allocation4] sm:$0xff] %v354
    %461 = vst [vmem:[#allocation4 + $0x8] sm:$0xff] %v383
    %462 = vst [vmem:[#allocation4 + $0x10] sm:$0xff] %v412
    %463 = vst [vmem:[#allocation4 + $0x18] sm:$0xff] %v441
    %464 = vst [vmem:[#allocation4 + $0x20] sm:$0xff] %v356
    %465 = vst [vmem:[#allocation4 + $0x28] sm:$0xff] %v385
    %466 = vst [vmem:[#allocation4 + $0x30] sm:$0xff] %v414
    %467 = vst [vmem:[#allocation4 + $0x38] sm:$0xff] %v443
    %468 = vst [vmem:[#allocation4 + $0x40] sm:$0xff] %v359
    %469 = vst [vmem:[#allocation4 + $0x48] sm:$0xff] %v388
    %470 = vst [vmem:[#allocation4 + $0x50] sm:$0xff] %v417
    %471 = vst [vmem:[#allocation4 + $0x58] sm:$0xff] %v446
    %472 = vst [vmem:[#allocation4 + $0x60] sm:$0xff] %v361
    %473 = vst [vmem:[#allocation4 + $0x68] sm:$0xff] %v390
    %474 = vst [vmem:[#allocation4 + $0x70] sm:$0xff] %v419
    %475 = vst [vmem:[#allocation4 + $0x78] sm:$0xff] %v448
    %476 = vst [vmem:[#allocation4 + $0x80] sm:$0xff] %v364
    %477 = vst [vmem:[#allocation4 + $0x88] sm:$0xff] %v393
    %478 = vst [vmem:[#allocation4 + $0x90] sm:$0xff] %v422
    %479 = vst [vmem:[#allocation4 + $0x98] sm:$0xff] %v451
    %480 = vst [vmem:[#allocation4 + $0xa0] sm:$0xff] %v366
    %481 = vst [vmem:[#allocation4 + $0xa8] sm:$0xff] %v395
    %482 = vst [vmem:[#allocation4 + $0xb0] sm:$0xff] %v424
    %483 = vst [vmem:[#allocation4 + $0xb8] sm:$0xff] %v453
    %484 = vst [vmem:[#allocation4 + $0xc0] sm:$0xff] %v369
    %485 = vst [vmem:[#allocation4 + $0xc8] sm:$0xff] %v398
    %486 = vst [vmem:[#allocation4 + $0xd0] sm:$0xff] %v427
    %487 = vst [vmem:[#allocation4 + $0xd8] sm:$0xff] %v456
    %488 = vst [vmem:[#allocation4 + $0xe0] sm:$0xff] %v371
    %489 = vst [vmem:[#allocation4 + $0xe8] sm:$0xff] %v400
    %490 = vst [vmem:[#allocation4 + $0xf0] sm:$0xff] %v429
    %491 = vst [vmem:[#allocation4 + $0xf8] sm:$0xff] %v458
    %v492 = vld [vmem:[#allocation13] sm:$0xff]
    %v493 = vld [vmem:[#allocation13 + $0x8] sm:$0xff]
    %v494 = vld [vmem:[#allocation13 + $0x10] sm:$0xff]
    %v495 = vld [vmem:[#allocation13 + $0x18] sm:$0xff]
    %v496 = vld [vmem:[#allocation13 + $0x20] sm:$0xff]
    %v497 = vld [vmem:[#allocation13 + $0x28] sm:$0xff]
    %v498 = vld [vmem:[#allocation13 + $0x30] sm:$0xff]
    %v499 = vld [vmem:[#allocation13 + $0x38] sm:$0xff]
    %v500 = vld [vmem:[#allocation13 + $0x40] sm:$0xff]
    %v501 = vld [vmem:[#allocation13 + $0x48] sm:$0xff]
    %v502 = vld [vmem:[#allocation13 + $0x50] sm:$0xff]
    %v503 = vld [vmem:[#allocation13 + $0x58] sm:$0xff]
    %v504 = vld [vmem:[#allocation13 + $0x60] sm:$0xff]
    %v505 = vld [vmem:[#allocation13 + $0x68] sm:$0xff]
    %v506 = vld [vmem:[#allocation13 + $0x70] sm:$0xff]
    %v507 = vld [vmem:[#allocation13 + $0x78] sm:$0xff]
    %v508 = vld [vmem:[#allocation13 + $0x80] sm:$0xff]
    %v509 = vld [vmem:[#allocation13 + $0x88] sm:$0xff]
    %v510 = vld [vmem:[#allocation13 + $0x90] sm:$0xff]
    %v511 = vld [vmem:[#allocation13 + $0x98] sm:$0xff]
    %v512 = vld [vmem:[#allocation13 + $0xa0] sm:$0xff]
    %v513 = vld [vmem:[#allocation13 + $0xa8] sm:$0xff]
    %v514 = vld [vmem:[#allocation13 + $0xb0] sm:$0xff]
    %v515 = vld [vmem:[#allocation13 + $0xb8] sm:$0xff]
    %v516 = vld [vmem:[#allocation13 + $0xc0] sm:$0xff]
    %v517 = vld [vmem:[#allocation13 + $0xc8] sm:$0xff]
    %v518 = vld [vmem:[#allocation13 + $0xd0] sm:$0xff]
    %v519 = vld [vmem:[#allocation13 + $0xd8] sm:$0xff]
    %v520 = vld [vmem:[#allocation13 + $0xe0] sm:$0xff]
    %v521 = vld [vmem:[#allocation13 + $0xe8] sm:$0xff]
    %v522 = vld [vmem:[#allocation13 + $0xf0] sm:$0xff]
    %v523 = vld [vmem:[#allocation13 + $0xf8] sm:$0xff]
    %v524 = vld [vmem:[#allocation2] sm:$0xff]
    %v525 = vld [vmem:[#allocation3] sm:$0xff]
    %v526 = vld [vmem:[#allocation4] sm:$0xff]
    %v527 = vld [vmem:[#allocation4 + $0x8] sm:$0xff]
    %v528 = vld [vmem:[#allocation4 + $0x10] sm:$0xff]
    %v529 = vld [vmem:[#allocation4 + $0x18] sm:$0xff]
    %v530 = vpack.c.bf16 %v524, %v524
    %v563 = vunpack.c.l.b16 %v492
    %v564 = vunpack.c.h.b16 %v492
    %v565 = vunpack.c.l.b16 %v493
    %v566 = vunpack.c.h.b16 %v493
    %v567 = vunpack.c.l.b16 %v494
    %v568 = vunpack.c.h.b16 %v494
    %v569 = vunpack.c.l.b16 %v495
    %v570 = vunpack.c.h.b16 %v495
    %v571 = vunpack.c.l.b16 %v496
    %v572 = vunpack.c.h.b16 %v496
    %v573 = vunpack.c.l.b16 %v497
    %v574 = vunpack.c.h.b16 %v497
    %v575 = vunpack.c.l.b16 %v498
    %v576 = vunpack.c.h.b16 %v498
    %v577 = vunpack.c.l.b16 %v499
    %v578 = vunpack.c.h.b16 %v499
    %v579 = vunpack.c.l.b16 %v500
    %v580 = vunpack.c.h.b16 %v500
    %v581 = vunpack.c.l.b16 %v501
    %v582 = vunpack.c.h.b16 %v501
    %v583 = vunpack.c.l.b16 %v502
    %v584 = vunpack.c.h.b16 %v502
    %v585 = vunpack.c.l.b16 %v503
    %v586 = vunpack.c.h.b16 %v503
    %v587 = vunpack.c.l.b16 %v504
    %v588 = vunpack.c.h.b16 %v504
    %v589 = vunpack.c.l.b16 %v505
    %v590 = vunpack.c.h.b16 %v505
    %v591 = vunpack.c.l.b16 %v506
    %v592 = vunpack.c.h.b16 %v506
    %v593 = vunpack.c.l.b16 %v507
    %v594 = vunpack.c.h.b16 %v507
    %v595 = vunpack.c.l.b16 %v508
    %v596 = vunpack.c.h.b16 %v508
    %v597 = vunpack.c.l.b16 %v509
    %v598 = vunpack.c.h.b16 %v509
    %v599 = vunpack.c.l.b16 %v510
    %v600 = vunpack.c.h.b16 %v510
    %v601 = vunpack.c.l.b16 %v511
    %v602 = vunpack.c.h.b16 %v511
    %v603 = vunpack.c.l.b16 %v512
    %v604 = vunpack.c.h.b16 %v512
    %v605 = vunpack.c.l.b16 %v513
    %v606 = vunpack.c.h.b16 %v513
    %v607 = vunpack.c.l.b16 %v514
    %v608 = vunpack.c.h.b16 %v514
    %v609 = vunpack.c.l.b16 %v515
    %v610 = vunpack.c.h.b16 %v515
    %v611 = vunpack.c.l.b16 %v516
    %v612 = vunpack.c.h.b16 %v516
    %v613 = vunpack.c.l.b16 %v517
    %v614 = vunpack.c.h.b16 %v517
    %v615 = vunpack.c.l.b16 %v518
    %v616 = vunpack.c.h.b16 %v518
    %v617 = vunpack.c.l.b16 %v519
    %v618 = vunpack.c.h.b16 %v519
    %v619 = vunpack.c.l.b16 %v520
    %v620 = vunpack.c.h.b16 %v520
    %v621 = vunpack.c.l.b16 %v521
    %v622 = vunpack.c.h.b16 %v521
    %v623 = vunpack.c.l.b16 %v522
    %v624 = vunpack.c.h.b16 %v522
    %v625 = vunpack.c.l.b16 %v523
    %v626 = vunpack.c.h.b16 %v523
    %v627 = vpack.c.b16 %v567, %v563
    %v628 = vpack.c.b16 %v568, %v564
    %v629 = vpack.c.b16 %v569, %v565
    %v630 = vpack.c.b16 %v570, %v566
    %v631 = vpack.c.b16 %v575, %v571
    %v632 = vpack.c.b16 %v576, %v572
    %v633 = vpack.c.b16 %v577, %v573
    %v634 = vpack.c.b16 %v578, %v574
    %v635 = vpack.c.b16 %v583, %v579
    %v636 = vpack.c.b16 %v584, %v580
    %v637 = vpack.c.b16 %v585, %v581
    %v638 = vpack.c.b16 %v586, %v582
    %v639 = vpack.c.b16 %v591, %v587
    %v640 = vpack.c.b16 %v592, %v588
    %v641 = vpack.c.b16 %v593, %v589
    %v642 = vpack.c.b16 %v594, %v590
    %v643 = vpack.c.b16 %v599, %v595
    %v644 = vpack.c.b16 %v600, %v596
    %v645 = vpack.c.b16 %v601, %v597
    %v646 = vpack.c.b16 %v602, %v598
    %v647 = vpack.c.b16 %v607, %v603
    %v648 = vpack.c.b16 %v608, %v604
    %v649 = vpack.c.b16 %v609, %v605
    %v650 = vpack.c.b16 %v610, %v606
    %v651 = vpack.c.b16 %v615, %v611
    %v652 = vpack.c.b16 %v616, %v612
    %v653 = vpack.c.b16 %v617, %v613
    %v654 = vpack.c.b16 %v618, %v614
    %v655 = vpack.c.b16 %v623, %v619
    %v656 = vpack.c.b16 %v624, %v620
    %v657 = vpack.c.b16 %v625, %v621
    %v658 = vpack.c.b16 %v626, %v622
    %691 = vmatpush.bf16.msra.mxu0 %v655
    %692 = vmatpush.bf16.msra.mxu0 %v651
    %693 = vmatpush.bf16.msra.mxu0 %v647
    %694 = vmatpush.bf16.msra.mxu0 %v643
    %695 = vmatpush.bf16.msra.mxu0 %v639
    %696 = vmatpush.bf16.msra.mxu0 %v635
    %697 = vmatpush.bf16.msra.mxu0 %v631
    %698 = vmatpush.bf16.msra.mxu0 %v627
    %699 = vmatmul.bf16.gmra.mxu0 %v530
    %v700 = vpop.f32.mrf.mxu0
    %v701 = vadd.f32 0.0, %v700
    %v702 = vpop.f32.mrf.mxu0
    %703 = vdwg.mxu0
    %704 = vmatpush.bf16.msra.mxu0 %v656
    %705 = vmatpush.bf16.msra.mxu0 %v652
    %706 = vmatpush.bf16.msra.mxu0 %v648
    %707 = vmatpush.bf16.msra.mxu0 %v644
    %708 = vmatpush.bf16.msra.mxu0 %v640
    %709 = vmatpush.bf16.msra.mxu0 %v636
    %710 = vmatpush.bf16.msra.mxu0 %v632
    %711 = vmatpush.bf16.msra.mxu0 %v628
    %712 = vmatmul.bf16.gmra.mxu0 %v530
    %v713 = vpop.f32.mrf.mxu0
    %v714 = vadd.f32 0.0, %v713
    %v715 = vpop.f32.mrf.mxu0
    %716 = vdwg.mxu0
    %717 = vmatpush.bf16.msra.mxu0 %v657
    %718 = vmatpush.bf16.msra.mxu0 %v653
    %719 = vmatpush.bf16.msra.mxu0 %v649
    %720 = vmatpush.bf16.msra.mxu0 %v645
    %721 = vmatpush.bf16.msra.mxu0 %v641
    %722 = vmatpush.bf16.msra.mxu0 %v637
    %723 = vmatpush.bf16.msra.mxu0 %v633
    %724 = vmatpush.bf16.msra.mxu0 %v629
    %725 = vmatmul.bf16.gmra.mxu0 %v530
    %v726 = vpop.f32.mrf.mxu0
    %v727 = vadd.f32 0.0, %v726
    %v728 = vpop.f32.mrf.mxu0
    %729 = vdwg.mxu0
    %730 = vmatpush.bf16.msra.mxu0 %v658
    %731 = vmatpush.bf16.msra.mxu0 %v654
    %732 = vmatpush.bf16.msra.mxu0 %v650
    %733 = vmatpush.bf16.msra.mxu0 %v646
    %734 = vmatpush.bf16.msra.mxu0 %v642
    %735 = vmatpush.bf16.msra.mxu0 %v638
    %736 = vmatpush.bf16.msra.mxu0 %v634
    %737 = vmatpush.bf16.msra.mxu0 %v630
    %738 = vmatmul.bf16.gmra.mxu0 %v530
    %v739 = vpop.f32.mrf.mxu0
    %v740 = vadd.f32 0.0, %v739
    %v741 = vpop.f32.mrf.mxu0
    %742 = vdwg.mxu0
    %v743 = vadd.f32 %v526, %v701
    %v744 = vadd.f32 %v527, %v714
    %v745 = vadd.f32 %v528, %v727
    %v746 = vadd.f32 %v529, %v740
    %v747 = vmul.f32 %v743, 0.5
    %v748 = vtanh.pop %v747
    %v749 = vmul.f32 %v748, 0.5
    %v750 = vadd.f32 %v749, 0.5
    %v751 = vmul.f32 %v744, 0.5
    %v752 = vtanh.pop %v751
    %v753 = vmul.f32 %v752, 0.5
    %v754 = vadd.f32 %v753, 0.5
    %v755 = vtanh.pop %v745
    %v756 = vmul.f32 %v746, 0.5
    %v757 = vtanh.pop %v756
    %v758 = vmul.f32 %v757, 0.5
    %v759 = vadd.f32 %v758, 0.5
    %v760 = vmul.f32 %v754, %v525
    %v761 = vmul.f32 %v750, %v755
    %v762 = vadd.f32 %v760, %v761
    %v763 = vtanh.pop %v762
    %v764 = vmul.f32 %v759, %v763
    %765 = vst [vmem:[#allocation2] sm:$0xff] %v764
    %766 = vst [vmem:[#allocation3] sm:$0xff] %v762
    %v768 = vrot.slane %v764, 1
    %v769 = vrot.slane %v764, 2
    %v770 = vrot.slane %v764, 3
    %v771 = vrot.slane %v764, 4
    %v772 = vrot.slane %v764, 5
    %v773 = vrot.slane %v764, 6
    %v774 = vrot.slane %v764, 7
    %782 = vst [vmem:[#allocation14] sm:$0x1] %v764
    %783 = vst [vmem:[#allocation14 + $0x8] sm:$0x1] %v768
    %784 = vst [vmem:[#allocation14 + $0x10] sm:$0x1] %v769
    %785 = vst [vmem:[#allocation14 + $0x18] sm:$0x1] %v770
    %786 = vst [vmem:[#allocation14 + $0x20] sm:$0x1] %v771
    %787 = vst [vmem:[#allocation14 + $0x28] sm:$0x1] %v772
    %788 = vst [vmem:[#allocation14 + $0x30] sm:$0x1] %v773
    %789 = vst [vmem:[#allocation14 + $0x38] sm:$0x1] %v774
    %v790 = vld [vmem:[#allocation2] sm:$0xff]
    %v791 = vld [vmem:[#allocation3] sm:$0xff]
    %v792 = vld [vmem:[#allocation4 + $0x20] sm:$0xff]
    %v793 = vld [vmem:[#allocation4 + $0x28] sm:$0xff]
    %v794 = vld [vmem:[#allocation4 + $0x30] sm:$0xff]
    %v795 = vld [vmem:[#allocation4 + $0x38] sm:$0xff]
    %v796 = vpack.c.bf16 %v790, %v790
    %797 = vmatpush.bf16.msra.mxu0 %v655
    %798 = vmatpush.bf16.msra.mxu0 %v651
    %799 = vmatpush.bf16.msra.mxu0 %v647
    %800 = vmatpush.bf16.msra.mxu0 %v643
    %801 = vmatpush.bf16.msra.mxu0 %v639
    %802 = vmatpush.bf16.msra.mxu0 %v635
    %803 = vmatpush.bf16.msra.mxu0 %v631
    %804 = vmatpush.bf16.msra.mxu0 %v627
    %805 = vmatmul.bf16.gmra.mxu0 %v796
    %v806 = vpop.f32.mrf.mxu0
    %v807 = vadd.f32 0.0, %v806
    %v808 = vpop.f32.mrf.mxu0
    %809 = vdwg.mxu0
    %810 = vmatpush.bf16.msra.mxu0 %v656
    %811 = vmatpush.bf16.msra.mxu0 %v652
    %812 = vmatpush.bf16.msra.mxu0 %v648
    %813 = vmatpush.bf16.msra.mxu0 %v644
    %814 = vmatpush.bf16.msra.mxu0 %v640
    %815 = vmatpush.bf16.msra.mxu0 %v636
    %816 = vmatpush.bf16.msra.mxu0 %v632
    %817 = vmatpush.bf16.msra.mxu0 %v628
    %818 = vmatmul.bf16.gmra.mxu0 %v796
    %v819 = vpop.f32.mrf.mxu0
    %v820 = vadd.f32 0.0, %v819
    %v821 = vpop.f32.mrf.mxu0
    %822 = vdwg.mxu0
    %823 = vmatpush.bf16.msra.mxu0 %v657
    %824 = vmatpush.bf16.msra.mxu0 %v653
    %825 = vmatpush.bf16.msra.mxu0 %v649
    %826 = vmatpush.bf16.msra.mxu0 %v645
    %827 = vmatpush.bf16.msra.mxu0 %v641
    %828 = vmatpush.bf16.msra.mxu0 %v637
    %829 = vmatpush.bf16.msra.mxu0 %v633
    %830 = vmatpush.bf16.msra.mxu0 %v629
    %831 = vmatmul.bf16.gmra.mxu0 %v796
    %v832 = vpop.f32.mrf.mxu0
    %v833 = vadd.f32 0.0, %v832
    %v834 = vpop.f32.mrf.mxu0
    %835 = vdwg.mxu0
    %836 = vmatpush.bf16.msra.mxu0 %v658
    %837 = vmatpush.bf16.msra.mxu0 %v654
    %838 = vmatpush.bf16.msra.mxu0 %v650
    %839 = vmatpush.bf16.msra.mxu0 %v646
    %840 = vmatpush.bf16.msra.mxu0 %v642
    %841 = vmatpush.bf16.msra.mxu0 %v638
    %842 = vmatpush.bf16.msra.mxu0 %v634
    %843 = vmatpush.bf16.msra.mxu0 %v630
    %844 = vmatmul.bf16.gmra.mxu0 %v796
    %v845 = vpop.f32.mrf.mxu0
    %v846 = vadd.f32 0.0, %v845
    %v847 = vpop.f32.mrf.mxu0
    %848 = vdwg.mxu0
    %v849 = vadd.f32 %v792, %v807
    %v850 = vadd.f32 %v793, %v820
    %v851 = vadd.f32 %v794, %v833
    %v852 = vadd.f32 %v795, %v846
    %v853 = vmul.f32 %v849, 0.5
    %v854 = vtanh.pop %v853
    %v855 = vmul.f32 %v854, 0.5
    %v856 = vadd.f32 %v855, 0.5
    %v857 = vmul.f32 %v850, 0.5
    %v858 = vtanh.pop %v857
    %v859 = vmul.f32 %v858, 0.5
    %v860 = vadd.f32 %v859, 0.5
    %v861 = vtanh.pop %v851
    %v862 = vmul.f32 %v852, 0.5
    %v863 = vtanh.pop %v862
    %v864 = vmul.f32 %v863, 0.5
    %v865 = vadd.f32 %v864, 0.5
    %v866 = vmul.f32 %v860, %v791
    %v867 = vmul.f32 %v856, %v861
    %v868 = vadd.f32 %v866, %v867
    %v869 = vtanh.pop %v868
    %v870 = vmul.f32 %v865, %v869
    %871 = vst [vmem:[#allocation2] sm:$0xff] %v870
    %872 = vst [vmem:[#allocation3] sm:$0xff] %v868
    %v874 = vrot.slane %v870, 1
    %v875 = vrot.slane %v870, 2
    %v876 = vrot.slane %v870, 3
    %v877 = vrot.slane %v870, 4
    %v878 = vrot.slane %v870, 5
    %v879 = vrot.slane %v870, 6
    %v880 = vrot.slane %v870, 7
    %888 = vst [vmem:[#allocation14 + $0x1] sm:$0x1] %v870
    %889 = vst [vmem:[#allocation14 + $0x9] sm:$0x1] %v874
    %890 = vst [vmem:[#allocation14 + $0x11] sm:$0x1] %v875
    %891 = vst [vmem:[#allocation14 + $0x19] sm:$0x1] %v876
    %892 = vst [vmem:[#allocation14 + $0x21] sm:$0x1] %v877
    %893 = vst [vmem:[#allocation14 + $0x29] sm:$0x1] %v878
    %894 = vst [vmem:[#allocation14 + $0x31] sm:$0x1] %v879
    %895 = vst [vmem:[#allocation14 + $0x39] sm:$0x1] %v880
    %v896 = vld [vmem:[#allocation2] sm:$0xff]
    %v897 = vld [vmem:[#allocation3] sm:$0xff]
    %v898 = vld [vmem:[#allocation4 + $0x40] sm:$0xff]
    %v899 = vld [vmem:[#allocation4 + $0x48] sm:$0xff]
    %v900 = vld [vmem:[#allocation4 + $0x50] sm:$0xff]
    %v901 = vld [vmem:[#allocation4 + $0x58] sm:$0xff]
    %v902 = vpack.c.bf16 %v896, %v896
    %903 = vmatpush.bf16.msra.mxu0 %v655
    %904 = vmatpush.bf16.msra.mxu0 %v651
    %905 = vmatpush.bf16.msra.mxu0 %v647
    %906 = vmatpush.bf16.msra.mxu0 %v643
    %907 = vmatpush.bf16.msra.mxu0 %v639
    %908 = vmatpush.bf16.msra.mxu0 %v635
    %909 = vmatpush.bf16.msra.mxu0 %v631
    %910 = vmatpush.bf16.msra.mxu0 %v627
    %911 = vmatmul.bf16.gmra.mxu0 %v902
    %v912 = vpop.f32.mrf.mxu0
    %v913 = vadd.f32 0.0, %v912
    %v914 = vpop.f32.mrf.mxu0
    %915 = vdwg.mxu0
    %916 = vmatpush.bf16.msra.mxu0 %v656
    %917 = vmatpush.bf16.msra.mxu0 %v652
    %918 = vmatpush.bf16.msra.mxu0 %v648
    %919 = vmatpush.bf16.msra.mxu0 %v644
    %920 = vmatpush.bf16.msra.mxu0 %v640
    %921 = vmatpush.bf16.msra.mxu0 %v636
    %922 = vmatpush.bf16.msra.mxu0 %v632
    %923 = vmatpush.bf16.msra.mxu0 %v628
    %924 = vmatmul.bf16.gmra.mxu0 %v902
    %v925 = vpop.f32.mrf.mxu0
    %v926 = vadd.f32 0.0, %v925
    %v927 = vpop.f32.mrf.mxu0
    %928 = vdwg.mxu0
    %929 = vmatpush.bf16.msra.mxu0 %v657
    %930 = vmatpush.bf16.msra.mxu0 %v653
    %931 = vmatpush.bf16.msra.mxu0 %v649
    %932 = vmatpush.bf16.msra.mxu0 %v645
    %933 = vmatpush.bf16.msra.mxu0 %v641
    %934 = vmatpush.bf16.msra.mxu0 %v637
    %935 = vmatpush.bf16.msra.mxu0 %v633
    %936 = vmatpush.bf16.msra.mxu0 %v629
    %937 = vmatmul.bf16.gmra.mxu0 %v902
    %v938 = vpop.f32.mrf.mxu0
    %v939 = vadd.f32 0.0, %v938
    %v940 = vpop.f32.mrf.mxu0
    %941 = vdwg.mxu0
    %942 = vmatpush.bf16.msra.mxu0 %v658
    %943 = vmatpush.bf16.msra.mxu0 %v654
    %944 = vmatpush.bf16.msra.mxu0 %v650
    %945 = vmatpush.bf16.msra.mxu0 %v646
    %946 = vmatpush.bf16.msra.mxu0 %v642
    %947 = vmatpush.bf16.msra.mxu0 %v638
    %948 = vmatpush.bf16.msra.mxu0 %v634
    %949 = vmatpush.bf16.msra.mxu0 %v630
    %950 = vmatmul.bf16.gmra.mxu0 %v902
    %v951 = vpop.f32.mrf.mxu0
    %v952 = vadd.f32 0.0, %v951
    %v953 = vpop.f32.mrf.mxu0
    %954 = vdwg.mxu0
    %v955 = vadd.f32 %v898, %v913
    %v956 = vadd.f32 %v899, %v926
    %v957 = vadd.f32 %v900, %v939
    %v958 = vadd.f32 %v901, %v952
    %v959 = vmul.f32 %v955, 0.5
    %v960 = vtanh.pop %v959
    %v961 = vmul.f32 %v960, 0.5
    %v962 = vadd.f32 %v961, 0.5
    %v963 = vmul.f32 %v956, 0.5
    %v964 = vtanh.pop %v963
    %v965 = vmul.f32 %v964, 0.5
    %v966 = vadd.f32 %v965, 0.5
    %v967 = vtanh.pop %v957
    %v968 = vmul.f32 %v958, 0.5
    %v969 = vtanh.pop %v968
    %v970 = vmul.f32 %v969, 0.5
    %v971 = vadd.f32 %v970, 0.5
    %v972 = vmul.f32 %v966, %v897
    %v973 = vmul.f32 %v962, %v967
    %v974 = vadd.f32 %v972, %v973
    %v975 = vtanh.pop %v974
    %v976 = vmul.f32 %v971, %v975
    %977 = vst [vmem:[#allocation2] sm:$0xff] %v976
    %978 = vst [vmem:[#allocation3] sm:$0xff] %v974
    %v980 = vrot.slane %v976, 1
    %v981 = vrot.slane %v976, 2
    %v982 = vrot.slane %v976, 3
    %v983 = vrot.slane %v976, 4
    %v984 = vrot.slane %v976, 5
    %v985 = vrot.slane %v976, 6
    %v986 = vrot.slane %v976, 7
    %994 = vst [vmem:[#allocation14 + $0x2] sm:$0x1] %v976
    %995 = vst [vmem:[#allocation14 + $0xa] sm:$0x1] %v980
    %996 = vst [vmem:[#allocation14 + $0x12] sm:$0x1] %v981
    %997 = vst [vmem:[#allocation14 + $0x1a] sm:$0x1] %v982
    %998 = vst [vmem:[#allocation14 + $0x22] sm:$0x1] %v983
    %999 = vst [vmem:[#allocation14 + $0x2a] sm:$0x1] %v984
    %1000 = vst [vmem:[#allocation14 + $0x32] sm:$0x1] %v985
    %1001 = vst [vmem:[#allocation14 + $0x3a] sm:$0x1] %v986
    %v1002 = vld [vmem:[#allocation2] sm:$0xff]
    %v1003 = vld [vmem:[#allocation3] sm:$0xff]
    %v1004 = vld [vmem:[#allocation4 + $0x60] sm:$0xff]
    %v1005 = vld [vmem:[#allocation4 + $0x68] sm:$0xff]
    %v1006 = vld [vmem:[#allocation4 + $0x70] sm:$0xff]
    %v1007 = vld [vmem:[#allocation4 + $0x78] sm:$0xff]
    %v1008 = vpack.c.bf16 %v1002, %v1002
    %1009 = vmatpush.bf16.msra.mxu0 %v655
    %1010 = vmatpush.bf16.msra.mxu0 %v651
    %1011 = vmatpush.bf16.msra.mxu0 %v647
    %1012 = vmatpush.bf16.msra.mxu0 %v643
    %1013 = vmatpush.bf16.msra.mxu0 %v639
    %1014 = vmatpush.bf16.msra.mxu0 %v635
    %1015 = vmatpush.bf16.msra.mxu0 %v631
    %1016 = vmatpush.bf16.msra.mxu0 %v627
    %1017 = vmatmul.bf16.gmra.mxu0 %v1008
    %v1018 = vpop.f32.mrf.mxu0
    %v1019 = vadd.f32 0.0, %v1018
    %v1020 = vpop.f32.mrf.mxu0
    %1021 = vdwg.mxu0
    %1022 = vmatpush.bf16.msra.mxu0 %v656
    %1023 = vmatpush.bf16.msra.mxu0 %v652
    %1024 = vmatpush.bf16.msra.mxu0 %v648
    %1025 = vmatpush.bf16.msra.mxu0 %v644
    %1026 = vmatpush.bf16.msra.mxu0 %v640
    %1027 = vmatpush.bf16.msra.mxu0 %v636
    %1028 = vmatpush.bf16.msra.mxu0 %v632
    %1029 = vmatpush.bf16.msra.mxu0 %v628
    %1030 = vmatmul.bf16.gmra.mxu0 %v1008
    %v1031 = vpop.f32.mrf.mxu0
    %v1032 = vadd.f32 0.0, %v1031
    %v1033 = vpop.f32.mrf.mxu0
    %1034 = vdwg.mxu0
    %1035 = vmatpush.bf16.msra.mxu0 %v657
    %1036 = vmatpush.bf16.msra.mxu0 %v653
    %1037 = vmatpush.bf16.msra.mxu0 %v649
    %1038 = vmatpush.bf16.msra.mxu0 %v645
    %1039 = vmatpush.bf16.msra.mxu0 %v641
    %1040 = vmatpush.bf16.msra.mxu0 %v637
    %1041 = vmatpush.bf16.msra.mxu0 %v633
    %1042 = vmatpush.bf16.msra.mxu0 %v629
    %1043 = vmatmul.bf16.gmra.mxu0 %v1008
    %v1044 = vpop.f32.mrf.mxu0
    %v1045 = vadd.f32 0.0, %v1044
    %v1046 = vpop.f32.mrf.mxu0
    %1047 = vdwg.mxu0
    %1048 = vmatpush.bf16.msra.mxu0 %v658
    %1049 = vmatpush.bf16.msra.mxu0 %v654
    %1050 = vmatpush.bf16.msra.mxu0 %v650
    %1051 = vmatpush.bf16.msra.mxu0 %v646
    %1052 = vmatpush.bf16.msra.mxu0 %v642
    %1053 = vmatpush.bf16.msra.mxu0 %v638
    %1054 = vmatpush.bf16.msra.mxu0 %v634
    %1055 = vmatpush.bf16.msra.mxu0 %v630
    %1056 = vmatmul.bf16.gmra.mxu0 %v1008
    %v1057 = vpop.f32.mrf.mxu0
    %v1058 = vadd.f32 0.0, %v1057
    %v1059 = vpop.f32.mrf.mxu0
    %1060 = vdwg.mxu0
    %v1061 = vadd.f32 %v1004, %v1019
    %v1062 = vadd.f32 %v1005, %v1032
    %v1063 = vadd.f32 %v1006, %v1045
    %v1064 = vadd.f32 %v1007, %v1058
    %v1065 = vmul.f32 %v1061, 0.5
    %v1066 = vtanh.pop %v1065
    %v1067 = vmul.f32 %v1066, 0.5
    %v1068 = vadd.f32 %v1067, 0.5
    %v1069 = vmul.f32 %v1062, 0.5
    %v1070 = vtanh.pop %v1069
    %v1071 = vmul.f32 %v1070, 0.5
    %v1072 = vadd.f32 %v1071, 0.5
    %v1073 = vtanh.pop %v1063
    %v1074 = vmul.f32 %v1064, 0.5
    %v1075 = vtanh.pop %v1074
    %v1076 = vmul.f32 %v1075, 0.5
    %v1077 = vadd.f32 %v1076, 0.5
    %v1078 = vmul.f32 %v1072, %v1003
    %v1079 = vmul.f32 %v1068, %v1073
    %v1080 = vadd.f32 %v1078, %v1079
    %v1081 = vtanh.pop %v1080
    %v1082 = vmul.f32 %v1077, %v1081
    %1083 = vst [vmem:[#allocation2] sm:$0xff] %v1082
    %1084 = vst [vmem:[#allocation3] sm:$0xff] %v1080
    %v1086 = vrot.slane %v1082, 1
    %v1087 = vrot.slane %v1082, 2
    %v1088 = vrot.slane %v1082, 3
    %v1089 = vrot.slane %v1082, 4
    %v1090 = vrot.slane %v1082, 5
    %v1091 = vrot.slane %v1082, 6
    %v1092 = vrot.slane %v1082, 7
    %1100 = vst [vmem:[#allocation14 + $0x3] sm:$0x1] %v1082
    %1101 = vst [vmem:[#allocation14 + $0xb] sm:$0x1] %v1086
    %1102 = vst [vmem:[#allocation14 + $0x13] sm:$0x1] %v1087
    %1103 = vst [vmem:[#allocation14 + $0x1b] sm:$0x1] %v1088
    %1104 = vst [vmem:[#allocation14 + $0x23] sm:$0x1] %v1089
    %1105 = vst [vmem:[#allocation14 + $0x2b] sm:$0x1] %v1090
    %1106 = vst [vmem:[#allocation14 + $0x33] sm:$0x1] %v1091
    %1107 = vst [vmem:[#allocation14 + $0x3b] sm:$0x1] %v1092
    %v1108 = vld [vmem:[#allocation2] sm:$0xff]
    %v1109 = vld [vmem:[#allocation3] sm:$0xff]
    %v1110 = vld [vmem:[#allocation4 + $0x80] sm:$0xff]
    %v1111 = vld [vmem:[#allocation4 + $0x88] sm:$0xff]
    %v1112 = vld [vmem:[#allocation4 + $0x90] sm:$0xff]
    %v1113 = vld [vmem:[#allocation4 + $0x98] sm:$0xff]
    %v1114 = vpack.c.bf16 %v1108, %v1108
    %1115 = vmatpush.bf16.msra.mxu0 %v655
    %1116 = vmatpush.bf16.msra.mxu0 %v651
    %1117 = vmatpush.bf16.msra.mxu0 %v647
    %1118 = vmatpush.bf16.msra.mxu0 %v643
    %1119 = vmatpush.bf16.msra.mxu0 %v639
    %1120 = vmatpush.bf16.msra.mxu0 %v635
    %1121 = vmatpush.bf16.msra.mxu0 %v631
    %1122 = vmatpush.bf16.msra.mxu0 %v627
    %1123 = vmatmul.bf16.gmra.mxu0 %v1114
    %v1124 = vpop.f32.mrf.mxu0
    %v1125 = vadd.f32 0.0, %v1124
    %v1126 = vpop.f32.mrf.mxu0
    %1127 = vdwg.mxu0
    %1128 = vmatpush.bf16.msra.mxu0 %v656
    %1129 = vmatpush.bf16.msra.mxu0 %v652
    %1130 = vmatpush.bf16.msra.mxu0 %v648
    %1131 = vmatpush.bf16.msra.mxu0 %v644
    %1132 = vmatpush.bf16.msra.mxu0 %v640
    %1133 = vmatpush.bf16.msra.mxu0 %v636
    %1134 = vmatpush.bf16.msra.mxu0 %v632
    %1135 = vmatpush.bf16.msra.mxu0 %v628
    %1136 = vmatmul.bf16.gmra.mxu0 %v1114
    %v1137 = vpop.f32.mrf.mxu0
    %v1138 = vadd.f32 0.0, %v1137
    %v1139 = vpop.f32.mrf.mxu0
    %1140 = vdwg.mxu0
    %1141 = vmatpush.bf16.msra.mxu0 %v657
    %1142 = vmatpush.bf16.msra.mxu0 %v653
    %1143 = vmatpush.bf16.msra.mxu0 %v649
    %1144 = vmatpush.bf16.msra.mxu0 %v645
    %1145 = vmatpush.bf16.msra.mxu0 %v641
    %1146 = vmatpush.bf16.msra.mxu0 %v637
    %1147 = vmatpush.bf16.msra.mxu0 %v633
    %1148 = vmatpush.bf16.msra.mxu0 %v629
    %1149 = vmatmul.bf16.gmra.mxu0 %v1114
    %v1150 = vpop.f32.mrf.mxu0
    %v1151 = vadd.f32 0.0, %v1150
    %v1152 = vpop.f32.mrf.mxu0
    %1153 = vdwg.mxu0
    %1154 = vmatpush.bf16.msra.mxu0 %v658
    %1155 = vmatpush.bf16.msra.mxu0 %v654
    %1156 = vmatpush.bf16.msra.mxu0 %v650
    %1157 = vmatpush.bf16.msra.mxu0 %v646
    %1158 = vmatpush.bf16.msra.mxu0 %v642
    %1159 = vmatpush.bf16.msra.mxu0 %v638
    %1160 = vmatpush.bf16.msra.mxu0 %v634
    %1161 = vmatpush.bf16.msra.mxu0 %v630
    %1162 = vmatmul.bf16.gmra.mxu0 %v1114
    %v1163 = vpop.f32.mrf.mxu0
    %v1164 = vadd.f32 0.0, %v1163
    %v1165 = vpop.f32.mrf.mxu0
    %1166 = vdwg.mxu0
    %v1167 = vadd.f32 %v1110, %v1125
    %v1168 = vadd.f32 %v1111, %v1138
    %v1169 = vadd.f32 %v1112, %v1151
    %v1170 = vadd.f32 %v1113, %v1164
    %v1171 = vmul.f32 %v1167, 0.5
    %v1172 = vtanh.pop %v1171
    %v1173 = vmul.f32 %v1172, 0.5
    %v1174 = vadd.f32 %v1173, 0.5
    %v1175 = vmul.f32 %v1168, 0.5
    %v1176 = vtanh.pop %v1175
    %v1177 = vmul.f32 %v1176, 0.5
    %v1178 = vadd.f32 %v1177, 0.5
    %v1179 = vtanh.pop %v1169
    %v1180 = vmul.f32 %v1170, 0.5
    %v1181 = vtanh.pop %v1180
    %v1182 = vmul.f32 %v1181, 0.5
    %v1183 = vadd.f32 %v1182, 0.5
    %v1184 = vmul.f32 %v1178, %v1109
    %v1185 = vmul.f32 %v1174, %v1179
    %v1186 = vadd.f32 %v1184, %v1185
    %v1187 = vtanh.pop %v1186
    %v1188 = vmul.f32 %v1183, %v1187
    %1189 = vst [vmem:[#allocation2] sm:$0xff] %v1188
    %1190 = vst [vmem:[#allocation3] sm:$0xff] %v1186
    %v1192 = vrot.slane %v1188, 1
    %v1193 = vrot.slane %v1188, 2
    %v1194 = vrot.slane %v1188, 3
    %v1195 = vrot.slane %v1188, 4
    %v1196 = vrot.slane %v1188, 5
    %v1197 = vrot.slane %v1188, 6
    %v1198 = vrot.slane %v1188, 7
    %1206 = vst [vmem:[#allocation14 + $0x4] sm:$0x1] %v1188
    %1207 = vst [vmem:[#allocation14 + $0xc] sm:$0x1] %v1192
    %1208 = vst [vmem:[#allocation14 + $0x14] sm:$0x1] %v1193
    %1209 = vst [vmem:[#allocation14 + $0x1c] sm:$0x1] %v1194
    %1210 = vst [vmem:[#allocation14 + $0x24] sm:$0x1] %v1195
    %1211 = vst [vmem:[#allocation14 + $0x2c] sm:$0x1] %v1196
    %1212 = vst [vmem:[#allocation14 + $0x34] sm:$0x1] %v1197
    %1213 = vst [vmem:[#allocation14 + $0x3c] sm:$0x1] %v1198
    %v1214 = vld [vmem:[#allocation2] sm:$0xff]
    %v1215 = vld [vmem:[#allocation3] sm:$0xff]
    %v1216 = vld [vmem:[#allocation4 + $0xa0] sm:$0xff]
    %v1217 = vld [vmem:[#allocation4 + $0xa8] sm:$0xff]
    %v1218 = vld [vmem:[#allocation4 + $0xb0] sm:$0xff]
    %v1219 = vld [vmem:[#allocation4 + $0xb8] sm:$0xff]
    %v1220 = vpack.c.bf16 %v1214, %v1214
    %1221 = vmatpush.bf16.msra.mxu0 %v655
    %1222 = vmatpush.bf16.msra.mxu0 %v651
    %1223 = vmatpush.bf16.msra.mxu0 %v647
    %1224 = vmatpush.bf16.msra.mxu0 %v643
    %1225 = vmatpush.bf16.msra.mxu0 %v639
    %1226 = vmatpush.bf16.msra.mxu0 %v635
    %1227 = vmatpush.bf16.msra.mxu0 %v631
    %1228 = vmatpush.bf16.msra.mxu0 %v627
    %1229 = vmatmul.bf16.gmra.mxu0 %v1220
    %v1230 = vpop.f32.mrf.mxu0
    %v1231 = vadd.f32 0.0, %v1230
    %v1232 = vpop.f32.mrf.mxu0
    %1233 = vdwg.mxu0
    %1234 = vmatpush.bf16.msra.mxu0 %v656
    %1235 = vmatpush.bf16.msra.mxu0 %v652
    %1236 = vmatpush.bf16.msra.mxu0 %v648
    %1237 = vmatpush.bf16.msra.mxu0 %v644
    %1238 = vmatpush.bf16.msra.mxu0 %v640
    %1239 = vmatpush.bf16.msra.mxu0 %v636
    %1240 = vmatpush.bf16.msra.mxu0 %v632
    %1241 = vmatpush.bf16.msra.mxu0 %v628
    %1242 = vmatmul.bf16.gmra.mxu0 %v1220
    %v1243 = vpop.f32.mrf.mxu0
    %v1244 = vadd.f32 0.0, %v1243
    %v1245 = vpop.f32.mrf.mxu0
    %1246 = vdwg.mxu0
    %1247 = vmatpush.bf16.msra.mxu0 %v657
    %1248 = vmatpush.bf16.msra.mxu0 %v653
    %1249 = vmatpush.bf16.msra.mxu0 %v649
    %1250 = vmatpush.bf16.msra.mxu0 %v645
    %1251 = vmatpush.bf16.msra.mxu0 %v641
    %1252 = vmatpush.bf16.msra.mxu0 %v637
    %1253 = vmatpush.bf16.msra.mxu0 %v633
    %1254 = vmatpush.bf16.msra.mxu0 %v629
    %1255 = vmatmul.bf16.gmra.mxu0 %v1220
    %v1256 = vpop.f32.mrf.mxu0
    %v1257 = vadd.f32 0.0, %v1256
    %v1258 = vpop.f32.mrf.mxu0
    %1259 = vdwg.mxu0
    %1260 = vmatpush.bf16.msra.mxu0 %v658
    %1261 = vmatpush.bf16.msra.mxu0 %v654
    %1262 = vmatpush.bf16.msra.mxu0 %v650
    %1263 = vmatpush.bf16.msra.mxu0 %v646
    %1264 = vmatpush.bf16.msra.mxu0 %v642
    %1265 = vmatpush.bf16.msra.mxu0 %v638
    %1266 = vmatpush.bf16.msra.mxu0 %v634
    %1267 = vmatpush.bf16.msra.mxu0 %v630
    %1268 = vmatmul.bf16.gmra.mxu0 %v1220
    %v1269 = vpop.f32.mrf.mxu0
    %v1270 = vadd.f32 0.0, %v1269
    %v1271 = vpop.f32.mrf.mxu0
    %1272 = vdwg.mxu0
    %v1273 = vadd.f32 %v1216, %v1231
    %v1274 = vadd.f32 %v1217, %v1244
    %v1275 = vadd.f32 %v1218, %v1257
    %v1276 = vadd.f32 %v1219, %v1270
    %v1277 = vmul.f32 %v1273, 0.5
    %v1278 = vtanh.pop %v1277
    %v1279 = vmul.f32 %v1278, 0.5
    %v1280 = vadd.f32 %v1279, 0.5
    %v1281 = vmul.f32 %v1274, 0.5
    %v1282 = vtanh.pop %v1281
    %v1283 = vmul.f32 %v1282, 0.5
    %v1284 = vadd.f32 %v1283, 0.5
    %v1285 = vtanh.pop %v1275
    %v1286 = vmul.f32 %v1276, 0.5
    %v1287 = vtanh.pop %v1286
    %v1288 = vmul.f32 %v1287, 0.5
    %v1289 = vadd.f32 %v1288, 0.5
    %v1290 = vmul.f32 %v1284, %v1215
    %v1291 = vmul.f32 %v1280, %v1285
    %v1292 = vadd.f32 %v1290, %v1291
    %v1293 = vtanh.pop %v1292
    %v1294 = vmul.f32 %v1289, %v1293
    %1295 = vst [vmem:[#allocation2] sm:$0xff] %v1294
    %1296 = vst [vmem:[#allocation3] sm:$0xff] %v1292
    %v1298 = vrot.slane %v1294, 1
    %v1299 = vrot.slane %v1294, 2
    %v1300 = vrot.slane %v1294, 3
    %v1301 = vrot.slane %v1294, 4
    %v1302 = vrot.slane %v1294, 5
    %v1303 = vrot.slane %v1294, 6
    %v1304 = vrot.slane %v1294, 7
    %1312 = vst [vmem:[#allocation14 + $0x5] sm:$0x1] %v1294
    %1313 = vst [vmem:[#allocation14 + $0xd] sm:$0x1] %v1298
    %1314 = vst [vmem:[#allocation14 + $0x15] sm:$0x1] %v1299
    %1315 = vst [vmem:[#allocation14 + $0x1d] sm:$0x1] %v1300
    %1316 = vst [vmem:[#allocation14 + $0x25] sm:$0x1] %v1301
    %1317 = vst [vmem:[#allocation14 + $0x2d] sm:$0x1] %v1302
    %1318 = vst [vmem:[#allocation14 + $0x35] sm:$0x1] %v1303
    %1319 = vst [vmem:[#allocation14 + $0x3d] sm:$0x1] %v1304
    %v1320 = vld [vmem:[#allocation2] sm:$0xff]
    %v1321 = vld [vmem:[#allocation3] sm:$0xff]
    %v1322 = vld [vmem:[#allocation4 + $0xc0] sm:$0xff]
    %v1323 = vld [vmem:[#allocation4 + $0xc8] sm:$0xff]
    %v1324 = vld [vmem:[#allocation4 + $0xd0] sm:$0xff]
    %v1325 = vld [vmem:[#allocation4 + $0xd8] sm:$0xff]
    %v1326 = vpack.c.bf16 %v1320, %v1320
    %1327 = vmatpush.bf16.msra.mxu0 %v655
    %1328 = vmatpush.bf16.msra.mxu0 %v651
    %1329 = vmatpush.bf16.msra.mxu0 %v647
    %1330 = vmatpush.bf16.msra.mxu0 %v643
    %1331 = vmatpush.bf16.msra.mxu0 %v639
    %1332 = vmatpush.bf16.msra.mxu0 %v635
    %1333 = vmatpush.bf16.msra.mxu0 %v631
    %1334 = vmatpush.bf16.msra.mxu0 %v627
    %1335 = vmatmul.bf16.gmra.mxu0 %v1326
    %v1336 = vpop.f32.mrf.mxu0
    %v1337 = vadd.f32 0.0, %v1336
    %v1338 = vpop.f32.mrf.mxu0
    %1339 = vdwg.mxu0
    %1340 = vmatpush.bf16.msra.mxu0 %v656
    %1341 = vmatpush.bf16.msra.mxu0 %v652
    %1342 = vmatpush.bf16.msra.mxu0 %v648
    %1343 = vmatpush.bf16.msra.mxu0 %v644
    %1344 = vmatpush.bf16.msra.mxu0 %v640
    %1345 = vmatpush.bf16.msra.mxu0 %v636
    %1346 = vmatpush.bf16.msra.mxu0 %v632
    %1347 = vmatpush.bf16.msra.mxu0 %v628
    %1348 = vmatmul.bf16.gmra.mxu0 %v1326
    %v1349 = vpop.f32.mrf.mxu0
    %v1350 = vadd.f32 0.0, %v1349
    %v1351 = vpop.f32.mrf.mxu0
    %1352 = vdwg.mxu0
    %1353 = vmatpush.bf16.msra.mxu0 %v657
    %1354 = vmatpush.bf16.msra.mxu0 %v653
    %1355 = vmatpush.bf16.msra.mxu0 %v649
    %1356 = vmatpush.bf16.msra.mxu0 %v645
    %1357 = vmatpush.bf16.msra.mxu0 %v641
    %1358 = vmatpush.bf16.msra.mxu0 %v637
    %1359 = vmatpush.bf16.msra.mxu0 %v633
    %1360 = vmatpush.bf16.msra.mxu0 %v629
    %1361 = vmatmul.bf16.gmra.mxu0 %v1326
    %v1362 = vpop.f32.mrf.mxu0
    %v1363 = vadd.f32 0.0, %v1362
    %v1364 = vpop.f32.mrf.mxu0
    %1365 = vdwg.mxu0
    %1366 = vmatpush.bf16.msra.mxu0 %v658
    %1367 = vmatpush.bf16.msra.mxu0 %v654
    %1368 = vmatpush.bf16.msra.mxu0 %v650
    %1369 = vmatpush.bf16.msra.mxu0 %v646
    %1370 = vmatpush.bf16.msra.mxu0 %v642
    %1371 = vmatpush.bf16.msra.mxu0 %v638
    %1372 = vmatpush.bf16.msra.mxu0 %v634
    %1373 = vmatpush.bf16.msra.mxu0 %v630
    %1374 = vmatmul.bf16.gmra.mxu0 %v1326
    %v1375 = vpop.f32.mrf.mxu0
    %v1376 = vadd.f32 0.0, %v1375
    %v1377 = vpop.f32.mrf.mxu0
    %1378 = vdwg.mxu0
    %v1379 = vadd.f32 %v1322, %v1337
    %v1380 = vadd.f32 %v1323, %v1350
    %v1381 = vadd.f32 %v1324, %v1363
    %v1382 = vadd.f32 %v1325, %v1376
    %v1383 = vmul.f32 %v1379, 0.5
    %v1384 = vtanh.pop %v1383
    %v1385 = vmul.f32 %v1384, 0.5
    %v1386 = vadd.f32 %v1385, 0.5
    %v1387 = vmul.f32 %v1380, 0.5
    %v1388 = vtanh.pop %v1387
    %v1389 = vmul.f32 %v1388, 0.5
    %v1390 = vadd.f32 %v1389, 0.5
    %v1391 = vtanh.pop %v1381
    %v1392 = vmul.f32 %v1382, 0.5
    %v1393 = vtanh.pop %v1392
    %v1394 = vmul.f32 %v1393, 0.5
    %v1395 = vadd.f32 %v1394, 0.5
    %v1396 = vmul.f32 %v1390, %v1321
    %v1397 = vmul.f32 %v1386, %v1391
    %v1398 = vadd.f32 %v1396, %v1397
    %v1399 = vtanh.pop %v1398
    %v1400 = vmul.f32 %v1395, %v1399
    %1401 = vst [vmem:[#allocation2] sm:$0xff] %v1400
    %1402 = vst [vmem:[#allocation3] sm:$0xff] %v1398
    %v1404 = vrot.slane %v1400, 1
    %v1405 = vrot.slane %v1400, 2
    %v1406 = vrot.slane %v1400, 3
    %v1407 = vrot.slane %v1400, 4
    %v1408 = vrot.slane %v1400, 5
    %v1409 = vrot.slane %v1400, 6
    %v1410 = vrot.slane %v1400, 7
    %1418 = vst [vmem:[#allocation14 + $0x6] sm:$0x1] %v1400
    %1419 = vst [vmem:[#allocation14 + $0xe] sm:$0x1] %v1404
    %1420 = vst [vmem:[#allocation14 + $0x16] sm:$0x1] %v1405
    %1421 = vst [vmem:[#allocation14 + $0x1e] sm:$0x1] %v1406
    %1422 = vst [vmem:[#allocation14 + $0x26] sm:$0x1] %v1407
    %1423 = vst [vmem:[#allocation14 + $0x2e] sm:$0x1] %v1408
    %1424 = vst [vmem:[#allocation14 + $0x36] sm:$0x1] %v1409
    %1425 = vst [vmem:[#allocation14 + $0x3e] sm:$0x1] %v1410
    %v1426 = vld [vmem:[#allocation2] sm:$0xff]
    %v1427 = vld [vmem:[#allocation3] sm:$0xff]
    %v1428 = vld [vmem:[#allocation4 + $0xe0] sm:$0xff]
    %v1429 = vld [vmem:[#allocation4 + $0xe8] sm:$0xff]
    %v1430 = vld [vmem:[#allocation4 + $0xf0] sm:$0xff]
    %v1431 = vld [vmem:[#allocation4 + $0xf8] sm:$0xff]
    %v1432 = vpack.c.bf16 %v1426, %v1426
    %1433 = vmatpush.bf16.msra.mxu0 %v655
    %1434 = vmatpush.bf16.msra.mxu0 %v651
    %1435 = vmatpush.bf16.msra.mxu0 %v647
    %1436 = vmatpush.bf16.msra.mxu0 %v643
    %1437 = vmatpush.bf16.msra.mxu0 %v639
    %1438 = vmatpush.bf16.msra.mxu0 %v635
    %1439 = vmatpush.bf16.msra.mxu0 %v631
    %1440 = vmatpush.bf16.msra.mxu0 %v627
    %1441 = vmatmul.bf16.gmra.mxu0 %v1432
    %v1442 = vpop.f32.mrf.mxu0
    %v1443 = vadd.f32 0.0, %v1442
    %v1444 = vpop.f32.mrf.mxu0
    %1445 = vdwg.mxu0
    %1446 = vmatpush.bf16.msra.mxu0 %v656
    %1447 = vmatpush.bf16.msra.mxu0 %v652
    %1448 = vmatpush.bf16.msra.mxu0 %v648
    %1449 = vmatpush.bf16.msra.mxu0 %v644
    %1450 = vmatpush.bf16.msra.mxu0 %v640
    %1451 = vmatpush.bf16.msra.mxu0 %v636
    %1452 = vmatpush.bf16.msra.mxu0 %v632
    %1453 = vmatpush.bf16.msra.mxu0 %v628
    %1454 = vmatmul.bf16.gmra.mxu0 %v1432
    %v1455 = vpop.f32.mrf.mxu0
    %v1456 = vadd.f32 0.0, %v1455
    %v1457 = vpop.f32.mrf.mxu0
    %1458 = vdwg.mxu0
    %1459 = vmatpush.bf16.msra.mxu0 %v657
    %1460 = vmatpush.bf16.msra.mxu0 %v653
    %1461 = vmatpush.bf16.msra.mxu0 %v649
    %1462 = vmatpush.bf16.msra.mxu0 %v645
    %1463 = vmatpush.bf16.msra.mxu0 %v641
    %1464 = vmatpush.bf16.msra.mxu0 %v637
    %1465 = vmatpush.bf16.msra.mxu0 %v633
    %1466 = vmatpush.bf16.msra.mxu0 %v629
    %1467 = vmatmul.bf16.gmra.mxu0 %v1432
    %v1468 = vpop.f32.mrf.mxu0
    %v1469 = vadd.f32 0.0, %v1468
    %v1470 = vpop.f32.mrf.mxu0
    %1471 = vdwg.mxu0
    %1472 = vmatpush.bf16.msra.mxu0 %v658
    %1473 = vmatpush.bf16.msra.mxu0 %v654
    %1474 = vmatpush.bf16.msra.mxu0 %v650
    %1475 = vmatpush.bf16.msra.mxu0 %v646
    %1476 = vmatpush.bf16.msra.mxu0 %v642
    %1477 = vmatpush.bf16.msra.mxu0 %v638
    %1478 = vmatpush.bf16.msra.mxu0 %v634
    %1479 = vmatpush.bf16.msra.mxu0 %v630
    %1480 = vmatmul.bf16.gmra.mxu0 %v1432
    %v1481 = vpop.f32.mrf.mxu0
    %v1482 = vadd.f32 0.0, %v1481
    %v1483 = vpop.f32.mrf.mxu0
    %1484 = vdwg.mxu0
    %v1485 = vadd.f32 %v1428, %v1443
    %v1486 = vadd.f32 %v1429, %v1456
    %v1487 = vadd.f32 %v1430, %v1469
    %v1488 = vadd.f32 %v1431, %v1482
    %v1489 = vmul.f32 %v1485, 0.5
    %v1490 = vtanh.pop %v1489
    %v1491 = vmul.f32 %v1490, 0.5
    %v1492 = vadd.f32 %v1491, 0.5
    %v1493 = vmul.f32 %v1486, 0.5
    %v1494 = vtanh.pop %v1493
    %v1495 = vmul.f32 %v1494, 0.5
    %v1496 = vadd.f32 %v1495, 0.5
    %v1497 = vtanh.pop %v1487
    %v1498 = vmul.f32 %v1488, 0.5
    %v1499 = vtanh.pop %v1498
    %v1500 = vmul.f32 %v1499, 0.5
    %v1501 = vadd.f32 %v1500, 0.5
    %v1502 = vmul.f32 %v1496, %v1427
    %v1503 = vmul.f32 %v1492, %v1497
    %v1504 = vadd.f32 %v1502, %v1503
    %v1505 = vtanh.pop %v1504
    %v1506 = vmul.f32 %v1501, %v1505
    %1507 = vst [vmem:[#allocation2] sm:$0xff] %v1506
    %1508 = vst [vmem:[#allocation3] sm:$0xff] %v1504
    %v1510 = vrot.slane %v1506, 1
    %v1511 = vrot.slane %v1506, 2
    %v1512 = vrot.slane %v1506, 3
    %v1513 = vrot.slane %v1506, 4
    %v1514 = vrot.slane %v1506, 5
    %v1515 = vrot.slane %v1506, 6
    %v1516 = vrot.slane %v1506, 7
    %1524 = vst [vmem:[#allocation14 + $0x7] sm:$0x1] %v1506
    %1525 = vst [vmem:[#allocation14 + $0xf] sm:$0x1] %v1510
    %1526 = vst [vmem:[#allocation14 + $0x17] sm:$0x1] %v1511
    %1527 = vst [vmem:[#allocation14 + $0x1f] sm:$0x1] %v1512
    %1528 = vst [vmem:[#allocation14 + $0x27] sm:$0x1] %v1513
    %1529 = vst [vmem:[#allocation14 + $0x2f] sm:$0x1] %v1514
    %1530 = vst [vmem:[#allocation14 + $0x37] sm:$0x1] %v1515
    %1531 = vst [vmem:[#allocation14 + $0x3f] sm:$0x1] %v1516
    // Predicated region
    $region50: #{tpu_custom_call.1} parent=1 // pred_check
      %p1532 = pneg %p102
    $region51: #{tpu_custom_call.1} parent=1 // pred_check_branch
      %1534 = sbr.rel (%p1532) target = $region53
    $region52: #{tpu_custom_call.1} parent=1 // pred_region
      %v1535 = vld [vmem:[#allocation2] sm:$0xff]
      %1536 = vst [vmem:[#allocation15] sm:$0xff] %v1535
      %v1537 = vld [vmem:[#allocation3] sm:$0xff]
      %1538 = vst [vmem:[#allocation17] sm:$0xff] %v1537
    $region53: #{tpu_custom_call.1} parent=1 // pred_fallthru
      _
    // Predicated region
    $region54: #{tpu_custom_call.1} parent=1 // pred_check
      _
    $region55: #{tpu_custom_call.1} parent=1 // pred_check_branch
      %1540 = sbr.rel (0) target = $region57
    $region56: #{tpu_custom_call.1} parent=1 // pred_region
      %1542 = vsyncadd [#allocation7], 0
      %s1543 = sshll.u32 [#allocation14], 4
      %s1544 = int_to_ptr.vmem [resolvable:$true] %s1543
      %s1545 = sshll.u32 %s6, 4
      %s1546 = int_to_ptr.hbm [resolvable:$true] %s1545
      %1551 = dma.vmem_to_hbm [thread:$0]  %s1544, 1024, %s1546, [#allocation7], 128, 128, 8
    $region57: #{tpu_custom_call.1} parent=1 // pred_fallthru
      _
    // Predicated region
    $region58: #{tpu_custom_call.1} parent=1 // pred_check
      _
    $region59: #{tpu_custom_call.1} parent=1 // pred_check_branch
      %1553 = sbr.rel (0) target = $region61
    $region60: #{tpu_custom_call.1} parent=1 // pred_region
      %1555 = vsyncadd [#allocation16], 0
      %s1557 = sshll.u32 [#allocation15], 4
      %s1558 = int_to_ptr.vmem [resolvable:$true] %s1557
      %s1559 = sshll.u32 %s7, 4
      %s1560 = int_to_ptr.hbm [resolvable:$true] %s1559
      %1562 = dma.vmem_to_hbm [thread:$0]  %s1558, 128, %s1560, [#allocation16]
    $region61: #{tpu_custom_call.1} parent=1 // pred_fallthru
      _
    // Predicated region
    $region62: #{tpu_custom_call.1} parent=1 // pred_check
      _
    $region63: #{tpu_custom_call.1} parent=1 // pred_check_branch
      %1564 = sbr.rel (0) target = $region65
    $region64: #{tpu_custom_call.1} parent=1 // pred_region
      %1566 = vsyncadd [#allocation16], 0
      %s1568 = sshll.u32 [#allocation17], 4
      %s1569 = int_to_ptr.vmem [resolvable:$true] %s1568
      %s1570 = sshll.u32 %s8, 4
      %s1571 = int_to_ptr.hbm [resolvable:$true] %s1570
      %1573 = dma.vmem_to_hbm [thread:$0]  %s1569, 128, %s1571, [#allocation16]
    $region65: #{tpu_custom_call.1} parent=1 // pred_fallthru
      _
    // Predicated region
    $region66: #{tpu_custom_call.1} parent=1 // pred_check
      _
    $region67: #{tpu_custom_call.1} parent=1 // pred_check_branch
      %1575 = sbr.rel (0) target = $region69
    $region68: #{tpu_custom_call.1} parent=1 // pred_region
      %1577 = dma.done [#allocation7], 1024
    $region69: #{tpu_custom_call.1} parent=1 // pred_fallthru
      _
    // Predicated region
    $region70: #{tpu_custom_call.1} parent=1 // pred_check
      _
    $region71: #{tpu_custom_call.1} parent=1 // pred_check_branch
      %1579 = sbr.rel (0) target = $region73
    $region72: #{tpu_custom_call.1} parent=1 // pred_region
      %1581 = dma.done [#allocation16], 128
    $region73: #{tpu_custom_call.1} parent=1 // pred_fallthru
      _
    // Predicated region
    $region74: #{tpu_custom_call.1} parent=1 // pred_check
      _
    $region75: #{tpu_custom_call.1} parent=1 // pred_check_branch
      %1583 = sbr.rel (0) target = $region77
    $region76: #{tpu_custom_call.1} parent=1 // pred_region
      %1585 = dma.done [#allocation16], 128
    $region77: #{tpu_custom_call.1} parent=1 // pred_fallthru
      _
    %1586 = vsyncpa [#allocation6], 1
    %1587 = vsyncpa [#allocation9], 1
    %1588 = vsyncpa [#allocation12], 1
    %1589 = vsyncpa [#allocation7], 1
    %1590 = vsyncpa [#allocation16], 1

</llo_original>
